<compile_context>
chip_gen: v7x
topology: tpu7x:2x2x1
jax: 0.10.0
libtpu: 0.0.40
codegen_flags: <defaults>
</compile_context>

<pallas_src>
import functools

import jax
import jax.numpy as jnp
import numpy as np
from jax.experimental import pallas as pl
from jax.experimental.pallas import tpu as pltpu

LN_EPS = 1e-5
NEG_INF = -1e9


def _layer_norm(h, gamma, beta):
    # h: (TQ, D) f32; gamma/beta: (1, D). Biased variance (PyTorch LayerNorm).
    mean = jnp.mean(h, axis=-1, keepdims=True)
    var = jnp.mean(jnp.square(h - mean), axis=-1, keepdims=True)
    return (h - mean) * jax.lax.rsqrt(var + LN_EPS) * gamma + beta


def _mha(q_in, kv_in, wq_ref, bq_ref, wkv_ref, bkv_ref, wo_ref, bo_ref,
         keep_mask, num_heads):
    """Multi-head attention for one (query-tile, kv) pair.

    q_in: (TQ, D) compute dtype, kv_in: (S, D) compute dtype.
    wq: (D, D), wkv: (D, 2D) = [wk | wv], wo: (D, D)  (compute dtype)
    bq: (1, D), bkv: (1, 2D), bo: (1, D)              (f32)
    keep_mask: bool, (TQ, S) or (1, S).  Returns f32 (TQ, D).
    """
    wq = wq_ref[...]
    bq = bq_ref[...]
    wkv = wkv_ref[...]
    bkv = bkv_ref[...]
    wo = wo_ref[...]
    bo = bo_ref[...]

    tq, d = q_in.shape
    dh = d // num_heads
    scale = 1.0 / float(np.sqrt(dh))

    # Fused, lane-dense projections (single (.,D)x(D,N) MXU matmuls).
    q = jnp.dot(q_in, wq, preferred_element_type=jnp.float32) + bq      # (TQ, D)
    kv = jnp.dot(kv_in, wkv, preferred_element_type=jnp.float32) + bkv  # (S, 2D)
    k = kv[:, :d]
    v = kv[:, d:]

    heads = []
    for h in range(num_heads):  # static unrolled loop; contiguous Dh lane slices
        lo, hi = h * dh, (h + 1) * dh
        qh = q[:, lo:hi]                       # (TQ, Dh)
        kh = k[:, lo:hi]                       # (S, Dh)
        vh = v[:, lo:hi]                       # (S, Dh)
        sc = jax.lax.dot_general(
            qh, kh, (((1,), (1,)), ((), ())),
            preferred_element_type=jnp.float32) * scale                 # (TQ, S)
        sc = jnp.where(keep_mask, sc, NEG_INF)
        m = jnp.max(sc, axis=-1, keepdims=True)
        p = jnp.exp(sc - m)
        denom = jnp.sum(p, axis=-1, keepdims=True)
        p = p * pl.reciprocal(denom, approx=True)                       # EUP
        heads.append(jnp.dot(p, vh, preferred_element_type=jnp.float32))
    attn = jnp.concatenate(heads, axis=-1)                              # (TQ, D)

    out = jnp.dot(attn.astype(wo.dtype), wo,
                  preferred_element_type=jnp.float32) + bo
    return out


def _decoder_layer_kernel(num_heads, causal,
                          xq_ref, xk_ref, enc_ref, smask_ref, *rest):
    if causal:
        tmask_ref = None
        (wq1, bq1, wkv1, bkv1, wo1, bo1,
         wq2, bq2, wkv2, bkv2, wo2, bo2,
         g1, be1, g2, be2, g3, be3,
         w1, b1, w2, b2, o_ref) = rest
    else:
        (tmask_ref,
         wq1, bq1, wkv1, bkv1, wo1, bo1,
         wq2, bq2, wkv2, bkv2, wo2, bo2,
         g1, be1, g2, be2, g3, be3,
         w1, b1, w2, b2, o_ref) = rest

    xq = xq_ref[0]      # (TQ, D)  compute dtype
    xk = xk_ref[0]      # (T, D)   compute dtype (self-attn K/V source)
    enc = enc_ref[0]    # (S, D)   compute dtype

    TQ, D = xq.shape
    T = xk.shape[0]
    qt = pl.program_id(1)
    cdtype = xq.dtype

    # Target mask for this query tile.
    if causal:
        row = jax.lax.broadcasted_iota(jnp.int32, (TQ, T), 0) + qt * TQ
        col = jax.lax.broadcasted_iota(jnp.int32, (TQ, T), 1)
        tgt_keep = row >= col                       # (TQ, T) bool, no HBM traffic
    else:
        tgt_keep = tmask_ref[0] > 0.0               # (TQ, T) bool
    src_keep = smask_ref[0] > 0.0                   # (1, S) bool

    # 1) masked self-attention + residual + LN
    a1 = _mha(xq, xk, wq1, bq1, wkv1, bkv1, wo1, bo1, tgt_keep, num_heads)
    h1 = _layer_norm(a1 + xq.astype(jnp.float32), g1[...], be1[...])

    # 2) cross attention with encoder output + residual + LN
    a2 = _mha(h1.astype(cdtype), enc, wq2, bq2, wkv2, bkv2, wo2, bo2,
              src_keep, num_heads)
    h2 = _layer_norm(a2 + h1, g2[...], be2[...])

    # 3) position-wise feed-forward + residual + LN
    hidden = jnp.dot(h2.astype(cdtype), w1[...],
                     preferred_element_type=jnp.float32) + b1[...]
    hidden = jnp.maximum(hidden, 0.0)
    ff = jnp.dot(hidden.astype(cdtype), w2[...],
                 preferred_element_type=jnp.float32) + b2[...]
    h3 = _layer_norm(ff + h2, g3[...], be3[...])

    o_ref[0] = h3.astype(o_ref.dtype)


def decoder_layer(x, enc_output, src_mask, tgt_mask, params, *, num_heads,
                  compute_dtype=None, q_tile=128):
    """x: (B,T,D); enc_output: (B,S,D); src_mask: (B,1,1,S);
    tgt_mask: (B,1,T,T) or None (None -> causal mask generated in-kernel)."""
    B, T, D = x.shape
    S = enc_output.shape[1]
    out_dtype = x.dtype
    if compute_dtype is None:
        compute_dtype = x.dtype

    # Query tiling: keep D lane-dense; tile T in sublane multiples.
    if T % q_tile == 0 and q_tile % 8 == 0:
        TQ = q_tile
    else:
        TQ = T
    nqt = T // TQ

    causal = tgt_mask is None
    src3 = src_mask.reshape(B, 1, S).astype(jnp.float32)
    if not causal:
        tgt3 = tgt_mask.reshape(B, T, T).astype(jnp.float32)

    x_c = x.astype(compute_dtype)
    enc_c = enc_output.astype(compute_dtype)

    def cw(name):  # matmul weight -> compute dtype
        return params[name].astype(compute_dtype)

    def f32(name):  # bias / LN params stay f32
        return params[name].astype(jnp.float32)

    # Fuse K/V projection weights into one lane-dense (D, 2D) matmul each.
    wkv1 = jnp.concatenate([cw("wk1"), cw("wv1")], axis=1)
    bkv1 = jnp.concatenate([f32("bk1"), f32("bv1")], axis=1)
    wkv2 = jnp.concatenate([cw("wk2"), cw("wv2")], axis=1)
    bkv2 = jnp.concatenate([f32("bk2"), f32("bv2")], axis=1)

    weights = [
        cw("wq1"), f32("bq1"), wkv1, bkv1, cw("wo1"), f32("bo1"),
        cw("wq2"), f32("bq2"), wkv2, bkv2, cw("wo2"), f32("bo2"),
        f32("g1"), f32("be1"), f32("g2"), f32("be2"), f32("g3"), f32("be3"),
        cw("w1"), f32("b1"), cw("w2"), f32("b2"),
    ]

    def replicated(arr):  # grid-invariant: same block every step -> no re-DMA
        nd = arr.ndim
        return pl.BlockSpec(arr.shape, lambda b, qt, _n=nd: (0,) * _n)

    in_specs = [
        pl.BlockSpec((1, TQ, D), lambda b, qt: (b, qt, 0)),   # x (query tile)
        pl.BlockSpec((1, T, D), lambda b, qt: (b, 0, 0)),     # x (self-attn K/V)
        pl.BlockSpec((1, S, D), lambda b, qt: (b, 0, 0)),     # encoder output
        pl.BlockSpec((1, 1, S), lambda b, qt: (b, 0, 0)),     # src mask
    ]
    args = [x_c, x_c, enc_c, src3]
    if not causal:
        in_specs.append(pl.BlockSpec((1, TQ, T), lambda b, qt: (b, qt, 0)))
        args.append(tgt3)
    in_specs += [replicated(w) for w in weights]
    args += weights

    kernel = functools.partial(_decoder_layer_kernel, num_heads, causal)

    fn = pl.pallas_call(
        kernel,
        out_shape=jax.ShapeDtypeStruct((B, T, D), out_dtype),
        grid_spec=pltpu.PrefetchScalarGridSpec(
            num_scalar_prefetch=0,
            grid=(B, nqt),
            in_specs=in_specs,
            out_specs=pl.BlockSpec((1, TQ, D), lambda b, qt: (b, qt, 0)),
        ),
        compiler_params=pltpu.CompilerParams(
            dimension_semantics=("parallel", "parallel"),
            vmem_limit_bytes=32 * 1024 * 1024,
        ),
    )
    return fn(*args)


# ---------------- pure-JAX reference (for correctness check) ----------------
def _ref_mha(q_in, kv_in, wq, bq, wk, bk, wv, bv, wo, bo, mask, num_heads):
    B, Tq, D = q_in.shape
    S = kv_in.shape[1]
    dh = D // num_heads
    q = (q_in @ wq + bq).reshape(B, Tq, num_heads, dh).transpose(0, 2, 1, 3)
    k = (kv_in @ wk + bk).reshape(B, S, num_heads, dh).transpose(0, 2, 1, 3)
    v = (kv_in @ wv + bv).reshape(B, S, num_heads, dh).transpose(0, 2, 1, 3)
    s = jnp.einsum("bhtd,bhsd->bhts", q, k) / np.sqrt(dh)
    s = jnp.where(mask[:, None, :, :] > 0.0, s, NEG_INF)
    p = jax.nn.softmax(s, axis=-1)
    a = jnp.einsum("bhts,bhsd->bhtd", p, v).transpose(0, 2, 1, 3).reshape(B, Tq, D)
    return a @ wo + bo


def _ref_ln(h, g, b):
    mean = jnp.mean(h, -1, keepdims=True)
    var = jnp.mean((h - mean) ** 2, -1, keepdims=True)
    return (h - mean) / jnp.sqrt(var + LN_EPS) * g + b


def reference(x, enc, src_mask, tgt_mask, p, num_heads):
    sm = src_mask[:, 0]          # (B, 1, S)
    tm = tgt_mask[:, 0]          # (B, T, T)
    a1 = _ref_mha(x, x, p["wq1"], p["bq1"], p["wk1"], p["bk1"], p["wv1"],
                  p["bv1"], p["wo1"], p["bo1"], tm, num_heads)
    h1 = _ref_ln(a1 + x, p["g1"], p["be1"])
    a2 = _ref_mha(h1, enc, p["wq2"], p["bq2"], p["wk2"], p["bk2"], p["wv2"],
                  p["bv2"], p["wo2"], p["bo2"], sm, num_heads)
    h2 = _ref_ln(a2 + h1, p["g2"], p["be2"])
    ff = jnp.maximum(h2 @ p["w1"] + p["b1"], 0.0) @ p["w2"] + p["b2"]
    return _ref_ln(ff + h2, p["g3"], p["be3"])


if __name__ == "__main__":
    B, T, S = 2, 16, 8
    H, D, DFF = 4, 32, 64

    key = jax.random.PRNGKey(0)
    ks = jax.random.split(key, 24)

    def w(k, shape, scale=0.05):
        return jax.random.normal(k, shape, jnp.float32) * scale

    params = {
        # self-attention (nn.Linear-style (in, out) weights, fused in wrapper)
        "wq1": w(ks[0], (D, D)), "bq1": w(ks[1], (1, D)),
        "wk1": w(ks[2], (D, D)), "bk1": w(ks[3], (1, D)),
        "wv1": w(ks[4], (D, D)), "bv1": w(ks[5], (1, D)),
        "wo1": w(ks[6], (D, D)), "bo1": w(ks[7], (1, D)),
        # cross-attention
        "wq2": w(ks[8], (D, D)), "bq2": w(ks[9], (1, D)),
        "wk2": w(ks[10], (D, D)), "bk2": w(ks[11], (1, D)),
        "wv2": w(ks[12], (D, D)), "bv2": w(ks[13], (1, D)),
        "wo2": w(ks[14], (D, D)), "bo2": w(ks[15], (1, D)),
        # layer norms
        "g1": jnp.ones((1, D), jnp.float32), "be1": jnp.zeros((1, D), jnp.float32),
        "g2": jnp.ones((1, D), jnp.float32), "be2": jnp.zeros((1, D), jnp.float32),
        "g3": jnp.ones((1, D), jnp.float32), "be3": jnp.zeros((1, D), jnp.float32),
        # feed-forward
        "w1": w(ks[16], (D, DFF)), "b1": w(ks[17], (1, DFF)),
        "w2": w(ks[18], (DFF, D)), "b2": w(ks[19], (1, D)),
    }

    x = jax.random.normal(ks[20], (B, T, D), jnp.float32)
    enc = jax.random.normal(ks[21], (B, S, D), jnp.float32)

    # PyTorch-layout masks: causal target mask; source mask drops the last
    # 2 positions of batch element 1.
    tgt_mask = jnp.broadcast_to(jnp.tril(jnp.ones((T, T), jnp.float32)),
                                (B, 1, T, T))
    src_mask = jnp.ones((B, 1, 1, S), jnp.float32)
    src_mask = src_mask.at[1, 0, 0, S - 2:].set(0.0)

    ref = reference(x, enc, src_mask, tgt_mask, params, H)

    # 1) f32 compute, explicit tgt_mask, query-tiled grid (2 tiles per batch)
    out = decoder_layer(x, enc, src_mask, tgt_mask, params,
                        num_heads=H, q_tile=8)
    out = jax.block_until_ready(out)
    np.testing.assert_allclose(np.asarray(out), np.asarray(ref),
                               rtol=2e-3, atol=2e-3)

    # 2) f32 compute, causal mask generated in-kernel (no (B,T,T) mask DMA)
    out_c = decoder_layer(x, enc, src_mask, None, params,
                          num_heads=H, q_tile=8)
    out_c = jax.block_until_ready(out_c)
    np.testing.assert_allclose(np.asarray(out_c), np.asarray(ref),
                               rtol=2e-3, atol=2e-3)

    # 3) bf16 compute (f32 MXU accumulation), looser tolerance
    out_bf = decoder_layer(x, enc, src_mask, tgt_mask, params,
                           num_heads=H, q_tile=8,
                           compute_dtype=jnp.bfloat16)
    out_bf = jax.block_until_ready(out_bf)
    np.testing.assert_allclose(np.asarray(out_bf), np.asarray(ref),
                               rtol=1e-1, atol=1e-1)

    print("KERNEL_OK")
</pallas_src>

<mosaic_0001>
module attributes {stable_mosaic.version = 11 : i64} {
  func.func @_decoder_layer_kernel(%arg0: i32, %arg1: i32, %arg2: memref<1x8x32xf32, #tpu.memory_space<vmem>>, %arg3: memref<1x16x32xf32, #tpu.memory_space<vmem>>, %arg4: memref<1x8x32xf32, #tpu.memory_space<vmem>>, %arg5: memref<1x1x8xf32, #tpu.memory_space<vmem>>, %arg6: memref<1x8x16xf32, #tpu.memory_space<vmem>>, %arg7: memref<32x32xf32, #tpu.memory_space<vmem>>, %arg8: memref<1x32xf32, #tpu.memory_space<vmem>>, %arg9: memref<32x64xf32, #tpu.memory_space<vmem>>, %arg10: memref<1x64xf32, #tpu.memory_space<vmem>>, %arg11: memref<32x32xf32, #tpu.memory_space<vmem>>, %arg12: memref<1x32xf32, #tpu.memory_space<vmem>>, %arg13: memref<32x32xf32, #tpu.memory_space<vmem>>, %arg14: memref<1x32xf32, #tpu.memory_space<vmem>>, %arg15: memref<32x64xf32, #tpu.memory_space<vmem>>, %arg16: memref<1x64xf32, #tpu.memory_space<vmem>>, %arg17: memref<32x32xf32, #tpu.memory_space<vmem>>, %arg18: memref<1x32xf32, #tpu.memory_space<vmem>>, %arg19: memref<1x32xf32, #tpu.memory_space<vmem>>, %arg20: memref<1x32xf32, #tpu.memory_space<vmem>>, %arg21: memref<1x32xf32, #tpu.memory_space<vmem>>, %arg22: memref<1x32xf32, #tpu.memory_space<vmem>>, %arg23: memref<1x32xf32, #tpu.memory_space<vmem>>, %arg24: memref<1x32xf32, #tpu.memory_space<vmem>>, %arg25: memref<32x64xf32, #tpu.memory_space<vmem>>, %arg26: memref<1x64xf32, #tpu.memory_space<vmem>>, %arg27: memref<64x32xf32, #tpu.memory_space<vmem>>, %arg28: memref<1x32xf32, #tpu.memory_space<vmem>>, %arg29: memref<1x8x32xf32, #tpu.memory_space<vmem>>) attributes {dimension_semantics = [#tpu.dimension_semantics<parallel>, #tpu.dimension_semantics<parallel>], iteration_bounds = array<i64: 2, 2>, scalar_prefetch = 0 : i64, scratch_operands = 0 : i64, tpu.core_type = #tpu.core_type<tc>, window_params = [{transform_indices = @transform_0, window_bounds = array<i64: 1, 8, 32>}, {transform_indices = @transform_1, window_bounds = array<i64: 1, 16, 32>}, {transform_indices = @transform_2, window_bounds = array<i64: 1, 8, 32>}, {transform_indices = @transform_3, window_bounds = array<i64: 1, 1, 8>}, {transform_indices = @transform_4, window_bounds = array<i64: 1, 8, 16>}, {pipeline_mode = #tpu.pipeline_mode<synchronous>, transform_indices = @transform_5, window_bounds = array<i64: 32, 32>}, {pipeline_mode = #tpu.pipeline_mode<synchronous>, transform_indices = @transform_6, window_bounds = array<i64: 1, 32>}, {pipeline_mode = #tpu.pipeline_mode<synchronous>, transform_indices = @transform_7, window_bounds = array<i64: 32, 64>}, {pipeline_mode = #tpu.pipeline_mode<synchronous>, transform_indices = @transform_8, window_bounds = array<i64: 1, 64>}, {pipeline_mode = #tpu.pipeline_mode<synchronous>, transform_indices = @transform_9, window_bounds = array<i64: 32, 32>}, {pipeline_mode = #tpu.pipeline_mode<synchronous>, transform_indices = @transform_10, window_bounds = array<i64: 1, 32>}, {pipeline_mode = #tpu.pipeline_mode<synchronous>, transform_indices = @transform_11, window_bounds = array<i64: 32, 32>}, {pipeline_mode = #tpu.pipeline_mode<synchronous>, transform_indices = @transform_12, window_bounds = array<i64: 1, 32>}, {pipeline_mode = #tpu.pipeline_mode<synchronous>, transform_indices = @transform_13, window_bounds = array<i64: 32, 64>}, {pipeline_mode = #tpu.pipeline_mode<synchronous>, transform_indices = @transform_14, window_bounds = array<i64: 1, 64>}, {pipeline_mode = #tpu.pipeline_mode<synchronous>, transform_indices = @transform_15, window_bounds = array<i64: 32, 32>}, {pipeline_mode = #tpu.pipeline_mode<synchronous>, transform_indices = @transform_16, window_bounds = array<i64: 1, 32>}, {pipeline_mode = #tpu.pipeline_mode<synchronous>, transform_indices = @transform_17, window_bounds = array<i64: 1, 32>}, {pipeline_mode = #tpu.pipeline_mode<synchronous>, transform_indices = @transform_18, window_bounds = array<i64: 1, 32>}, {pipeline_mode = #tpu.pipeline_mode<synchronous>, transform_indices = @transform_19, window_bounds = array<i64: 1, 32>}, {pipeline_mode = #tpu.pipeline_mode<synchronous>, transform_indices = @transform_20, window_bounds = array<i64: 1, 32>}, {pipeline_mode = #tpu.pipeline_mode<synchronous>, transform_indices = @transform_21, window_bounds = array<i64: 1, 32>}, {pipeline_mode = #tpu.pipeline_mode<synchronous>, transform_indices = @transform_22, window_bounds = array<i64: 1, 32>}, {pipeline_mode = #tpu.pipeline_mode<synchronous>, transform_indices = @transform_23, window_bounds = array<i64: 32, 64>}, {pipeline_mode = #tpu.pipeline_mode<synchronous>, transform_indices = @transform_24, window_bounds = array<i64: 1, 64>}, {pipeline_mode = #tpu.pipeline_mode<synchronous>, transform_indices = @transform_25, window_bounds = array<i64: 64, 32>}, {pipeline_mode = #tpu.pipeline_mode<synchronous>, transform_indices = @transform_26, window_bounds = array<i64: 1, 32>}, {transform_indices = @transform_27, window_bounds = array<i64: 1, 8, 32>}]} {
    %c0 = arith.constant 0 : index
    %c0_0 = arith.constant 0 : index
    %c0_1 = arith.constant 0 : index
    %0 = vector.load %arg2[%c0, %c0_0, %c0_1] : memref<1x8x32xf32, #tpu.memory_space<vmem>>, vector<1x8x32xf32>
    %1 = vector.shape_cast %0 : vector<1x8x32xf32> to vector<8x32xf32>
    %c0_2 = arith.constant 0 : index
    %c0_3 = arith.constant 0 : index
    %c0_4 = arith.constant 0 : index
    %2 = vector.load %arg3[%c0_2, %c0_3, %c0_4] : memref<1x16x32xf32, #tpu.memory_space<vmem>>, vector<1x16x32xf32>
    %3 = vector.shape_cast %2 : vector<1x16x32xf32> to vector<16x32xf32>
    %c0_5 = arith.constant 0 : index
    %c0_6 = arith.constant 0 : index
    %c0_7 = arith.constant 0 : index
    %4 = vector.load %arg4[%c0_5, %c0_6, %c0_7] : memref<1x8x32xf32, #tpu.memory_space<vmem>>, vector<1x8x32xf32>
    %5 = vector.shape_cast %4 : vector<1x8x32xf32> to vector<8x32xf32>
    %c0_8 = arith.constant 0 : index
    %c0_9 = arith.constant 0 : index
    %c0_10 = arith.constant 0 : index
    %6 = vector.load %arg6[%c0_8, %c0_9, %c0_10] : memref<1x8x16xf32, #tpu.memory_space<vmem>>, vector<1x8x16xf32>
    %7 = vector.shape_cast %6 : vector<1x8x16xf32> to vector<8x16xf32>
    %cst = arith.constant 0.000000e+00 : f32
    %8 = vector.broadcast %cst : f32 to vector<8x16xf32>
    %9 = arith.cmpf ogt, %7, %8 : vector<8x16xf32>
    %c0_11 = arith.constant 0 : index
    %c0_12 = arith.constant 0 : index
    %c0_13 = arith.constant 0 : index
    %10 = vector.load %arg5[%c0_11, %c0_12, %c0_13] : memref<1x1x8xf32, #tpu.memory_space<vmem>>, vector<1x1x8xf32>
    %11 = vector.shape_cast %10 : vector<1x1x8xf32> to vector<1x8xf32>
    %cst_14 = arith.constant 0.000000e+00 : f32
    %12 = vector.broadcast %cst_14 : f32 to vector<1x8xf32>
    %13 = arith.cmpf ogt, %11, %12 : vector<1x8xf32>
    %c0_15 = arith.constant 0 : index
    %c0_16 = arith.constant 0 : index
    %14 = vector.load %arg7[%c0_15, %c0_16] : memref<32x32xf32, #tpu.memory_space<vmem>>, vector<32x32xf32>
    %c0_17 = arith.constant 0 : index
    %c0_18 = arith.constant 0 : index
    %15 = vector.load %arg8[%c0_17, %c0_18] : memref<1x32xf32, #tpu.memory_space<vmem>>, vector<1x32xf32>
    %c0_19 = arith.constant 0 : index
    %c0_20 = arith.constant 0 : index
    %16 = vector.load %arg9[%c0_19, %c0_20] : memref<32x64xf32, #tpu.memory_space<vmem>>, vector<32x64xf32>
    %c0_21 = arith.constant 0 : index
    %c0_22 = arith.constant 0 : index
    %17 = vector.load %arg10[%c0_21, %c0_22] : memref<1x64xf32, #tpu.memory_space<vmem>>, vector<1x64xf32>
    %c0_23 = arith.constant 0 : index
    %c0_24 = arith.constant 0 : index
    %18 = vector.load %arg11[%c0_23, %c0_24] : memref<32x32xf32, #tpu.memory_space<vmem>>, vector<32x32xf32>
    %c0_25 = arith.constant 0 : index
    %c0_26 = arith.constant 0 : index
    %19 = vector.load %arg12[%c0_25, %c0_26] : memref<1x32xf32, #tpu.memory_space<vmem>>, vector<1x32xf32>
    %cst_27 = arith.constant dense<0.000000e+00> : vector<8x32xf32>
    %20 = tpu.matmul %1, %14, %cst_27 {dimension_numbers = #tpu.dot_dimension_numbers<[1], [0], [0], [1], [0, 0, 1, 1], [], []>} : vector<8x32xf32>, vector<32x32xf32>, vector<8x32xf32> -> vector<8x32xf32>
    %21 = vector.broadcast %15 : vector<1x32xf32> to vector<8x32xf32>
    %22 = arith.addf %20, %21 : vector<8x32xf32>
    %cst_28 = arith.constant dense<0.000000e+00> : vector<16x64xf32>
    %23 = tpu.matmul %3, %16, %cst_28 {dimension_numbers = #tpu.dot_dimension_numbers<[1], [0], [0], [1], [0, 0, 1, 1], [], []>} : vector<16x32xf32>, vector<32x64xf32>, vector<16x64xf32> -> vector<16x64xf32>
    %24 = vector.broadcast %17 : vector<1x64xf32> to vector<16x64xf32>
    %25 = arith.addf %23, %24 : vector<16x64xf32>
    %26 = vector.extract_strided_slice %25 {offsets = [0, 0], sizes = [16, 32], strides = [1, 1]} : vector<16x64xf32> to vector<16x32xf32>
    %27 = vector.extract_strided_slice %25 {offsets = [0, 32], sizes = [16, 32], strides = [1, 1]} : vector<16x64xf32> to vector<16x32xf32>
    %28 = vector.extract_strided_slice %22 {offsets = [0, 0], sizes = [8, 8], strides = [1, 1]} : vector<8x32xf32> to vector<8x8xf32>
    %29 = vector.extract_strided_slice %26 {offsets = [0, 0], sizes = [16, 8], strides = [1, 1]} : vector<16x32xf32> to vector<16x8xf32>
    %30 = vector.extract_strided_slice %27 {offsets = [0, 0], sizes = [16, 8], strides = [1, 1]} : vector<16x32xf32> to vector<16x8xf32>
    %cst_29 = arith.constant dense<0.000000e+00> : vector<8x16xf32>
    %31 = tpu.matmul %28, %29, %cst_29 {dimension_numbers = #tpu.dot_dimension_numbers<[1], [1], [0], [0], [0, 0, 1, 0], [], []>} : vector<8x8xf32>, vector<16x8xf32>, vector<8x16xf32> -> vector<8x16xf32>
    %cst_30 = arith.constant 0.353553385 : f32
    %32 = vector.broadcast %cst_30 : f32 to vector<8x16xf32>
    %33 = arith.mulf %31, %32 : vector<8x16xf32>
    %cst_31 = arith.constant -1.000000e+09 : f32
    %34 = vector.broadcast %cst_31 : f32 to vector<8x16xf32>
    %35 = arith.select %9, %33, %34 : vector<8x16xi1>, vector<8x16xf32>
    %cst_32 = arith.constant dense<0xFF800000> : vector<8xf32>
    %36 = vector.multi_reduction <maximumf>, %35, %cst_32 [1] : vector<8x16xf32> to vector<8xf32>
    %37 = vector.shape_cast %36 : vector<8xf32> to vector<8x1xf32>
    %38 = vector.broadcast %37 : vector<8x1xf32> to vector<8x16xf32>
    %39 = arith.subf %35, %38 : vector<8x16xf32>
    %40 = math.exp %39 : vector<8x16xf32>
    %cst_33 = arith.constant dense<0.000000e+00> : vector<8xf32>
    %41 = vector.multi_reduction <add>, %40, %cst_33 [1] : vector<8x16xf32> to vector<8xf32>
    %42 = vector.shape_cast %41 : vector<8xf32> to vector<8x1xf32>
    %43 = tpu.reciprocal %42 {approx = true} : vector<8x1xf32> -> vector<8x1xf32>
    %44 = vector.broadcast %43 : vector<8x1xf32> to vector<8x16xf32>
    %45 = arith.mulf %40, %44 : vector<8x16xf32>
    %cst_34 = arith.constant dense<0.000000e+00> : vector<8x8xf32>
    %46 = tpu.matmul %45, %30, %cst_34 {dimension_numbers = #tpu.dot_dimension_numbers<[1], [0], [0], [1], [0, 0, 1, 1], [], []>} : vector<8x16xf32>, vector<16x8xf32>, vector<8x8xf32> -> vector<8x8xf32>
    %47 = vector.extract_strided_slice %22 {offsets = [0, 8], sizes = [8, 8], strides = [1, 1]} : vector<8x32xf32> to vector<8x8xf32>
    %48 = vector.extract_strided_slice %26 {offsets = [0, 8], sizes = [16, 8], strides = [1, 1]} : vector<16x32xf32> to vector<16x8xf32>
    %49 = vector.extract_strided_slice %27 {offsets = [0, 8], sizes = [16, 8], strides = [1, 1]} : vector<16x32xf32> to vector<16x8xf32>
    %cst_35 = arith.constant dense<0.000000e+00> : vector<8x16xf32>
    %50 = tpu.matmul %47, %48, %cst_35 {dimension_numbers = #tpu.dot_dimension_numbers<[1], [1], [0], [0], [0, 0, 1, 0], [], []>} : vector<8x8xf32>, vector<16x8xf32>, vector<8x16xf32> -> vector<8x16xf32>
    %cst_36 = arith.constant 0.353553385 : f32
    %51 = vector.broadcast %cst_36 : f32 to vector<8x16xf32>
    %52 = arith.mulf %50, %51 : vector<8x16xf32>
    %cst_37 = arith.constant -1.000000e+09 : f32
    %53 = vector.broadcast %cst_37 : f32 to vector<8x16xf32>
    %54 = arith.select %9, %52, %53 : vector<8x16xi1>, vector<8x16xf32>
    %cst_38 = arith.constant dense<0xFF800000> : vector<8xf32>
    %55 = vector.multi_reduction <maximumf>, %54, %cst_38 [1] : vector<8x16xf32> to vector<8xf32>
    %56 = vector.shape_cast %55 : vector<8xf32> to vector<8x1xf32>
    %57 = vector.broadcast %56 : vector<8x1xf32> to vector<8x16xf32>
    %58 = arith.subf %54, %57 : vector<8x16xf32>
    %59 = math.exp %58 : vector<8x16xf32>
    %cst_39 = arith.constant dense<0.000000e+00> : vector<8xf32>
    %60 = vector.multi_reduction <add>, %59, %cst_39 [1] : vector<8x16xf32> to vector<8xf32>
    %61 = vector.shape_cast %60 : vector<8xf32> to vector<8x1xf32>
    %62 = tpu.reciprocal %61 {approx = true} : vector<8x1xf32> -> vector<8x1xf32>
    %63 = vector.broadcast %62 : vector<8x1xf32> to vector<8x16xf32>
    %64 = arith.mulf %59, %63 : vector<8x16xf32>
    %cst_40 = arith.constant dense<0.000000e+00> : vector<8x8xf32>
    %65 = tpu.matmul %64, %49, %cst_40 {dimension_numbers = #tpu.dot_dimension_numbers<[1], [0], [0], [1], [0, 0, 1, 1], [], []>} : vector<8x16xf32>, vector<16x8xf32>, vector<8x8xf32> -> vector<8x8xf32>
    %66 = vector.extract_strided_slice %22 {offsets = [0, 16], sizes = [8, 8], strides = [1, 1]} : vector<8x32xf32> to vector<8x8xf32>
    %67 = vector.extract_strided_slice %26 {offsets = [0, 16], sizes = [16, 8], strides = [1, 1]} : vector<16x32xf32> to vector<16x8xf32>
    %68 = vector.extract_strided_slice %27 {offsets = [0, 16], sizes = [16, 8], strides = [1, 1]} : vector<16x32xf32> to vector<16x8xf32>
    %cst_41 = arith.constant dense<0.000000e+00> : vector<8x16xf32>
    %69 = tpu.matmul %66, %67, %cst_41 {dimension_numbers = #tpu.dot_dimension_numbers<[1], [1], [0], [0], [0, 0, 1, 0], [], []>} : vector<8x8xf32>, vector<16x8xf32>, vector<8x16xf32> -> vector<8x16xf32>
    %cst_42 = arith.constant 0.353553385 : f32
    %70 = vector.broadcast %cst_42 : f32 to vector<8x16xf32>
    %71 = arith.mulf %69, %70 : vector<8x16xf32>
    %cst_43 = arith.constant -1.000000e+09 : f32
    %72 = vector.broadcast %cst_43 : f32 to vector<8x16xf32>
    %73 = arith.select %9, %71, %72 : vector<8x16xi1>, vector<8x16xf32>
    %cst_44 = arith.constant dense<0xFF800000> : vector<8xf32>
    %74 = vector.multi_reduction <maximumf>, %73, %cst_44 [1] : vector<8x16xf32> to vector<8xf32>
    %75 = vector.shape_cast %74 : vector<8xf32> to vector<8x1xf32>
    %76 = vector.broadcast %75 : vector<8x1xf32> to vector<8x16xf32>
    %77 = arith.subf %73, %76 : vector<8x16xf32>
    %78 = math.exp %77 : vector<8x16xf32>
    %cst_45 = arith.constant dense<0.000000e+00> : vector<8xf32>
    %79 = vector.multi_reduction <add>, %78, %cst_45 [1] : vector<8x16xf32> to vector<8xf32>
    %80 = vector.shape_cast %79 : vector<8xf32> to vector<8x1xf32>
    %81 = tpu.reciprocal %80 {approx = true} : vector<8x1xf32> -> vector<8x1xf32>
    %82 = vector.broadcast %81 : vector<8x1xf32> to vector<8x16xf32>
    %83 = arith.mulf %78, %82 : vector<8x16xf32>
    %cst_46 = arith.constant dense<0.000000e+00> : vector<8x8xf32>
    %84 = tpu.matmul %83, %68, %cst_46 {dimension_numbers = #tpu.dot_dimension_numbers<[1], [0], [0], [1], [0, 0, 1, 1], [], []>} : vector<8x16xf32>, vector<16x8xf32>, vector<8x8xf32> -> vector<8x8xf32>
    %85 = vector.extract_strided_slice %22 {offsets = [0, 24], sizes = [8, 8], strides = [1, 1]} : vector<8x32xf32> to vector<8x8xf32>
    %86 = vector.extract_strided_slice %26 {offsets = [0, 24], sizes = [16, 8], strides = [1, 1]} : vector<16x32xf32> to vector<16x8xf32>
    %87 = vector.extract_strided_slice %27 {offsets = [0, 24], sizes = [16, 8], strides = [1, 1]} : vector<16x32xf32> to vector<16x8xf32>
    %cst_47 = arith.constant dense<0.000000e+00> : vector<8x16xf32>
    %88 = tpu.matmul %85, %86, %cst_47 {dimension_numbers = #tpu.dot_dimension_numbers<[1], [1], [0], [0], [0, 0, 1, 0], [], []>} : vector<8x8xf32>, vector<16x8xf32>, vector<8x16xf32> -> vector<8x16xf32>
    %cst_48 = arith.constant 0.353553385 : f32
    %89 = vector.broadcast %cst_48 : f32 to vector<8x16xf32>
    %90 = arith.mulf %88, %89 : vector<8x16xf32>
    %cst_49 = arith.constant -1.000000e+09 : f32
    %91 = vector.broadcast %cst_49 : f32 to vector<8x16xf32>
    %92 = arith.select %9, %90, %91 : vector<8x16xi1>, vector<8x16xf32>
    %cst_50 = arith.constant dense<0xFF800000> : vector<8xf32>
    %93 = vector.multi_reduction <maximumf>, %92, %cst_50 [1] : vector<8x16xf32> to vector<8xf32>
    %94 = vector.shape_cast %93 : vector<8xf32> to vector<8x1xf32>
    %95 = vector.broadcast %94 : vector<8x1xf32> to vector<8x16xf32>
    %96 = arith.subf %92, %95 : vector<8x16xf32>
    %97 = math.exp %96 : vector<8x16xf32>
    %cst_51 = arith.constant dense<0.000000e+00> : vector<8xf32>
    %98 = vector.multi_reduction <add>, %97, %cst_51 [1] : vector<8x16xf32> to vector<8xf32>
    %99 = vector.shape_cast %98 : vector<8xf32> to vector<8x1xf32>
    %100 = tpu.reciprocal %99 {approx = true} : vector<8x1xf32> -> vector<8x1xf32>
    %101 = vector.broadcast %100 : vector<8x1xf32> to vector<8x16xf32>
    %102 = arith.mulf %97, %101 : vector<8x16xf32>
    %cst_52 = arith.constant dense<0.000000e+00> : vector<8x8xf32>
    %103 = tpu.matmul %102, %87, %cst_52 {dimension_numbers = #tpu.dot_dimension_numbers<[1], [0], [0], [1], [0, 0, 1, 1], [], []>} : vector<8x16xf32>, vector<16x8xf32>, vector<8x8xf32> -> vector<8x8xf32>
    %104 = tpu.concatenate %46, %65, %84, %103 in 1 : vector<8x8xf32>, vector<8x8xf32>, vector<8x8xf32>, vector<8x8xf32> -> vector<8x32xf32>
    %cst_53 = arith.constant dense<0.000000e+00> : vector<8x32xf32>
    %105 = tpu.matmul %104, %18, %cst_53 {dimension_numbers = #tpu.dot_dimension_numbers<[1], [0], [0], [1], [0, 0, 1, 1], [], []>} : vector<8x32xf32>, vector<32x32xf32>, vector<8x32xf32> -> vector<8x32xf32>
    %106 = vector.broadcast %19 : vector<1x32xf32> to vector<8x32xf32>
    %107 = arith.addf %105, %106 : vector<8x32xf32>
    %108 = arith.addf %107, %1 : vector<8x32xf32>
    %c0_54 = arith.constant 0 : index
    %c0_55 = arith.constant 0 : index
    %109 = vector.load %arg19[%c0_54, %c0_55] : memref<1x32xf32, #tpu.memory_space<vmem>>, vector<1x32xf32>
    %c0_56 = arith.constant 0 : index
    %c0_57 = arith.constant 0 : index
    %110 = vector.load %arg20[%c0_56, %c0_57] : memref<1x32xf32, #tpu.memory_space<vmem>>, vector<1x32xf32>
    %cst_58 = arith.constant dense<0.000000e+00> : vector<8xf32>
    %111 = vector.multi_reduction <add>, %108, %cst_58 [1] : vector<8x32xf32> to vector<8xf32>
    %112 = vector.shape_cast %111 : vector<8xf32> to vector<8x1xf32>
    %cst_59 = arith.constant 3.200000e+01 : f32
    %113 = vector.broadcast %cst_59 : f32 to vector<8x1xf32>
    %114 = arith.divf %112, %113 : vector<8x1xf32>
    %115 = vector.broadcast %114 : vector<8x1xf32> to vector<8x32xf32>
    %116 = arith.subf %108, %115 : vector<8x32xf32>
    %117 = arith.mulf %116, %116 : vector<8x32xf32>
    %cst_60 = arith.constant dense<0.000000e+00> : vector<8xf32>
    %118 = vector.multi_reduction <add>, %117, %cst_60 [1] : vector<8x32xf32> to vector<8xf32>
    %119 = vector.shape_cast %118 : vector<8xf32> to vector<8x1xf32>
    %cst_61 = arith.constant 3.200000e+01 : f32
    %120 = vector.broadcast %cst_61 : f32 to vector<8x1xf32>
    %121 = arith.divf %119, %120 : vector<8x1xf32>
    %122 = vector.broadcast %114 : vector<8x1xf32> to vector<8x32xf32>
    %123 = arith.subf %108, %122 : vector<8x32xf32>
    %cst_62 = arith.constant 9.99999974E-6 : f32
    %124 = vector.broadcast %cst_62 : f32 to vector<8x1xf32>
    %125 = arith.addf %121, %124 : vector<8x1xf32>
    %126 = math.rsqrt %125 : vector<8x1xf32>
    %127 = vector.broadcast %126 : vector<8x1xf32> to vector<8x32xf32>
    %128 = arith.mulf %123, %127 : vector<8x32xf32>
    %129 = vector.broadcast %109 : vector<1x32xf32> to vector<8x32xf32>
    %130 = arith.mulf %128, %129 : vector<8x32xf32>
    %131 = vector.broadcast %110 : vector<1x32xf32> to vector<8x32xf32>
    %132 = arith.addf %130, %131 : vector<8x32xf32>
    %c0_63 = arith.constant 0 : index
    %c0_64 = arith.constant 0 : index
    %133 = vector.load %arg13[%c0_63, %c0_64] : memref<32x32xf32, #tpu.memory_space<vmem>>, vector<32x32xf32>
    %c0_65 = arith.constant 0 : index
    %c0_66 = arith.constant 0 : index
    %134 = vector.load %arg14[%c0_65, %c0_66] : memref<1x32xf32, #tpu.memory_space<vmem>>, vector<1x32xf32>
    %c0_67 = arith.constant 0 : index
    %c0_68 = arith.constant 0 : index
    %135 = vector.load %arg15[%c0_67, %c0_68] : memref<32x64xf32, #tpu.memory_space<vmem>>, vector<32x64xf32>
    %c0_69 = arith.constant 0 : index
    %c0_70 = arith.constant 0 : index
    %136 = vector.load %arg16[%c0_69, %c0_70] : memref<1x64xf32, #tpu.memory_space<vmem>>, vector<1x64xf32>
    %c0_71 = arith.constant 0 : index
    %c0_72 = arith.constant 0 : index
    %137 = vector.load %arg17[%c0_71, %c0_72] : memref<32x32xf32, #tpu.memory_space<vmem>>, vector<32x32xf32>
    %c0_73 = arith.constant 0 : index
    %c0_74 = arith.constant 0 : index
    %138 = vector.load %arg18[%c0_73, %c0_74] : memref<1x32xf32, #tpu.memory_space<vmem>>, vector<1x32xf32>
    %cst_75 = arith.constant dense<0.000000e+00> : vector<8x32xf32>
    %139 = tpu.matmul %132, %133, %cst_75 {dimension_numbers = #tpu.dot_dimension_numbers<[1], [0], [0], [1], [0, 0, 1, 1], [], []>} : vector<8x32xf32>, vector<32x32xf32>, vector<8x32xf32> -> vector<8x32xf32>
    %140 = vector.broadcast %134 : vector<1x32xf32> to vector<8x32xf32>
    %141 = arith.addf %139, %140 : vector<8x32xf32>
    %cst_76 = arith.constant dense<0.000000e+00> : vector<8x64xf32>
    %142 = tpu.matmul %5, %135, %cst_76 {dimension_numbers = #tpu.dot_dimension_numbers<[1], [0], [0], [1], [0, 0, 1, 1], [], []>} : vector<8x32xf32>, vector<32x64xf32>, vector<8x64xf32> -> vector<8x64xf32>
    %143 = vector.broadcast %136 : vector<1x64xf32> to vector<8x64xf32>
    %144 = arith.addf %142, %143 : vector<8x64xf32>
    %145 = vector.extract_strided_slice %144 {offsets = [0, 0], sizes = [8, 32], strides = [1, 1]} : vector<8x64xf32> to vector<8x32xf32>
    %146 = vector.extract_strided_slice %144 {offsets = [0, 32], sizes = [8, 32], strides = [1, 1]} : vector<8x64xf32> to vector<8x32xf32>
    %147 = vector.extract_strided_slice %141 {offsets = [0, 0], sizes = [8, 8], strides = [1, 1]} : vector<8x32xf32> to vector<8x8xf32>
    %148 = vector.extract_strided_slice %145 {offsets = [0, 0], sizes = [8, 8], strides = [1, 1]} : vector<8x32xf32> to vector<8x8xf32>
    %149 = vector.extract_strided_slice %146 {offsets = [0, 0], sizes = [8, 8], strides = [1, 1]} : vector<8x32xf32> to vector<8x8xf32>
    %cst_77 = arith.constant dense<0.000000e+00> : vector<8x8xf32>
    %150 = tpu.matmul %147, %148, %cst_77 {dimension_numbers = #tpu.dot_dimension_numbers<[1], [1], [0], [0], [0, 0, 1, 0], [], []>} : vector<8x8xf32>, vector<8x8xf32>, vector<8x8xf32> -> vector<8x8xf32>
    %cst_78 = arith.constant 0.353553385 : f32
    %151 = vector.broadcast %cst_78 : f32 to vector<8x8xf32>
    %152 = arith.mulf %150, %151 : vector<8x8xf32>
    %cst_79 = arith.constant -1.000000e+09 : f32
    %153 = vector.shape_cast %13 : vector<1x8xi1> to vector<1x8xi1>
    %154 = vector.broadcast %153 : vector<1x8xi1> to vector<8x8xi1>
    %155 = vector.broadcast %cst_79 : f32 to vector<8x8xf32>
    %156 = arith.select %154, %152, %155 : vector<8x8xi1>, vector<8x8xf32>
    %cst_80 = arith.constant dense<0xFF800000> : vector<8xf32>
    %157 = vector.multi_reduction <maximumf>, %156, %cst_80 [1] : vector<8x8xf32> to vector<8xf32>
    %158 = vector.shape_cast %157 : vector<8xf32> to vector<8x1xf32>
    %159 = vector.broadcast %158 : vector<8x1xf32> to vector<8x8xf32>
    %160 = arith.subf %156, %159 : vector<8x8xf32>
    %161 = math.exp %160 : vector<8x8xf32>
    %cst_81 = arith.constant dense<0.000000e+00> : vector<8xf32>
    %162 = vector.multi_reduction <add>, %161, %cst_81 [1] : vector<8x8xf32> to vector<8xf32>
    %163 = vector.shape_cast %162 : vector<8xf32> to vector<8x1xf32>
    %164 = tpu.reciprocal %163 {approx = true} : vector<8x1xf32> -> vector<8x1xf32>
    %165 = vector.broadcast %164 : vector<8x1xf32> to vector<8x8xf32>
    %166 = arith.mulf %161, %165 : vector<8x8xf32>
    %cst_82 = arith.constant dense<0.000000e+00> : vector<8x8xf32>
    %167 = tpu.matmul %166, %149, %cst_82 {dimension_numbers = #tpu.dot_dimension_numbers<[1], [0], [0], [1], [0, 0, 1, 1], [], []>} : vector<8x8xf32>, vector<8x8xf32>, vector<8x8xf32> -> vector<8x8xf32>
    %168 = vector.extract_strided_slice %141 {offsets = [0, 8], sizes = [8, 8], strides = [1, 1]} : vector<8x32xf32> to vector<8x8xf32>
    %169 = vector.extract_strided_slice %145 {offsets = [0, 8], sizes = [8, 8], strides = [1, 1]} : vector<8x32xf32> to vector<8x8xf32>
    %170 = vector.extract_strided_slice %146 {offsets = [0, 8], sizes = [8, 8], strides = [1, 1]} : vector<8x32xf32> to vector<8x8xf32>
    %cst_83 = arith.constant dense<0.000000e+00> : vector<8x8xf32>
    %171 = tpu.matmul %168, %169, %cst_83 {dimension_numbers = #tpu.dot_dimension_numbers<[1], [1], [0], [0], [0, 0, 1, 0], [], []>} : vector<8x8xf32>, vector<8x8xf32>, vector<8x8xf32> -> vector<8x8xf32>
    %cst_84 = arith.constant 0.353553385 : f32
    %172 = vector.broadcast %cst_84 : f32 to vector<8x8xf32>
    %173 = arith.mulf %171, %172 : vector<8x8xf32>
    %cst_85 = arith.constant -1.000000e+09 : f32
    %174 = vector.shape_cast %13 : vector<1x8xi1> to vector<1x8xi1>
    %175 = vector.broadcast %174 : vector<1x8xi1> to vector<8x8xi1>
    %176 = vector.broadcast %cst_85 : f32 to vector<8x8xf32>
    %177 = arith.select %175, %173, %176 : vector<8x8xi1>, vector<8x8xf32>
    %cst_86 = arith.constant dense<0xFF800000> : vector<8xf32>
    %178 = vector.multi_reduction <maximumf>, %177, %cst_86 [1] : vector<8x8xf32> to vector<8xf32>
    %179 = vector.shape_cast %178 : vector<8xf32> to vector<8x1xf32>
    %180 = vector.broadcast %179 : vector<8x1xf32> to vector<8x8xf32>
    %181 = arith.subf %177, %180 : vector<8x8xf32>
    %182 = math.exp %181 : vector<8x8xf32>
    %cst_87 = arith.constant dense<0.000000e+00> : vector<8xf32>
    %183 = vector.multi_reduction <add>, %182, %cst_87 [1] : vector<8x8xf32> to vector<8xf32>
    %184 = vector.shape_cast %183 : vector<8xf32> to vector<8x1xf32>
    %185 = tpu.reciprocal %184 {approx = true} : vector<8x1xf32> -> vector<8x1xf32>
    %186 = vector.broadcast %185 : vector<8x1xf32> to vector<8x8xf32>
    %187 = arith.mulf %182, %186 : vector<8x8xf32>
    %cst_88 = arith.constant dense<0.000000e+00> : vector<8x8xf32>
    %188 = tpu.matmul %187, %170, %cst_88 {dimension_numbers = #tpu.dot_dimension_numbers<[1], [0], [0], [1], [0, 0, 1, 1], [], []>} : vector<8x8xf32>, vector<8x8xf32>, vector<8x8xf32> -> vector<8x8xf32>
    %189 = vector.extract_strided_slice %141 {offsets = [0, 16], sizes = [8, 8], strides = [1, 1]} : vector<8x32xf32> to vector<8x8xf32>
    %190 = vector.extract_strided_slice %145 {offsets = [0, 16], sizes = [8, 8], strides = [1, 1]} : vector<8x32xf32> to vector<8x8xf32>
    %191 = vector.extract_strided_slice %146 {offsets = [0, 16], sizes = [8, 8], strides = [1, 1]} : vector<8x32xf32> to vector<8x8xf32>
    %cst_89 = arith.constant dense<0.000000e+00> : vector<8x8xf32>
    %192 = tpu.matmul %189, %190, %cst_89 {dimension_numbers = #tpu.dot_dimension_numbers<[1], [1], [0], [0], [0, 0, 1, 0], [], []>} : vector<8x8xf32>, vector<8x8xf32>, vector<8x8xf32> -> vector<8x8xf32>
    %cst_90 = arith.constant 0.353553385 : f32
    %193 = vector.broadcast %cst_90 : f32 to vector<8x8xf32>
    %194 = arith.mulf %192, %193 : vector<8x8xf32>
    %cst_91 = arith.constant -1.000000e+09 : f32
    %195 = vector.shape_cast %13 : vector<1x8xi1> to vector<1x8xi1>
    %196 = vector.broadcast %195 : vector<1x8xi1> to vector<8x8xi1>
    %197 = vector.broadcast %cst_91 : f32 to vector<8x8xf32>
    %198 = arith.select %196, %194, %197 : vector<8x8xi1>, vector<8x8xf32>
    %cst_92 = arith.constant dense<0xFF800000> : vector<8xf32>
    %199 = vector.multi_reduction <maximumf>, %198, %cst_92 [1] : vector<8x8xf32> to vector<8xf32>
    %200 = vector.shape_cast %199 : vector<8xf32> to vector<8x1xf32>
    %201 = vector.broadcast %200 : vector<8x1xf32> to vector<8x8xf32>
    %202 = arith.subf %198, %201 : vector<8x8xf32>
    %203 = math.exp %202 : vector<8x8xf32>
    %cst_93 = arith.constant dense<0.000000e+00> : vector<8xf32>
    %204 = vector.multi_reduction <add>, %203, %cst_93 [1] : vector<8x8xf32> to vector<8xf32>
    %205 = vector.shape_cast %204 : vector<8xf32> to vector<8x1xf32>
    %206 = tpu.reciprocal %205 {approx = true} : vector<8x1xf32> -> vector<8x1xf32>
    %207 = vector.broadcast %206 : vector<8x1xf32> to vector<8x8xf32>
    %208 = arith.mulf %203, %207 : vector<8x8xf32>
    %cst_94 = arith.constant dense<0.000000e+00> : vector<8x8xf32>
    %209 = tpu.matmul %208, %191, %cst_94 {dimension_numbers = #tpu.dot_dimension_numbers<[1], [0], [0], [1], [0, 0, 1, 1], [], []>} : vector<8x8xf32>, vector<8x8xf32>, vector<8x8xf32> -> vector<8x8xf32>
    %210 = vector.extract_strided_slice %141 {offsets = [0, 24], sizes = [8, 8], strides = [1, 1]} : vector<8x32xf32> to vector<8x8xf32>
    %211 = vector.extract_strided_slice %145 {offsets = [0, 24], sizes = [8, 8], strides = [1, 1]} : vector<8x32xf32> to vector<8x8xf32>
    %212 = vector.extract_strided_slice %146 {offsets = [0, 24], sizes = [8, 8], strides = [1, 1]} : vector<8x32xf32> to vector<8x8xf32>
    %cst_95 = arith.constant dense<0.000000e+00> : vector<8x8xf32>
    %213 = tpu.matmul %210, %211, %cst_95 {dimension_numbers = #tpu.dot_dimension_numbers<[1], [1], [0], [0], [0, 0, 1, 0], [], []>} : vector<8x8xf32>, vector<8x8xf32>, vector<8x8xf32> -> vector<8x8xf32>
    %cst_96 = arith.constant 0.353553385 : f32
    %214 = vector.broadcast %cst_96 : f32 to vector<8x8xf32>
    %215 = arith.mulf %213, %214 : vector<8x8xf32>
    %cst_97 = arith.constant -1.000000e+09 : f32
    %216 = vector.shape_cast %13 : vector<1x8xi1> to vector<1x8xi1>
    %217 = vector.broadcast %216 : vector<1x8xi1> to vector<8x8xi1>
    %218 = vector.broadcast %cst_97 : f32 to vector<8x8xf32>
    %219 = arith.select %217, %215, %218 : vector<8x8xi1>, vector<8x8xf32>
    %cst_98 = arith.constant dense<0xFF800000> : vector<8xf32>
    %220 = vector.multi_reduction <maximumf>, %219, %cst_98 [1] : vector<8x8xf32> to vector<8xf32>
    %221 = vector.shape_cast %220 : vector<8xf32> to vector<8x1xf32>
    %222 = vector.broadcast %221 : vector<8x1xf32> to vector<8x8xf32>
    %223 = arith.subf %219, %222 : vector<8x8xf32>
    %224 = math.exp %223 : vector<8x8xf32>
    %cst_99 = arith.constant dense<0.000000e+00> : vector<8xf32>
    %225 = vector.multi_reduction <add>, %224, %cst_99 [1] : vector<8x8xf32> to vector<8xf32>
    %226 = vector.shape_cast %225 : vector<8xf32> to vector<8x1xf32>
    %227 = tpu.reciprocal %226 {approx = true} : vector<8x1xf32> -> vector<8x1xf32>
    %228 = vector.broadcast %227 : vector<8x1xf32> to vector<8x8xf32>
    %229 = arith.mulf %224, %228 : vector<8x8xf32>
    %cst_100 = arith.constant dense<0.000000e+00> : vector<8x8xf32>
    %230 = tpu.matmul %229, %212, %cst_100 {dimension_numbers = #tpu.dot_dimension_numbers<[1], [0], [0], [1], [0, 0, 1, 1], [], []>} : vector<8x8xf32>, vector<8x8xf32>, vector<8x8xf32> -> vector<8x8xf32>
    %231 = tpu.concatenate %167, %188, %209, %230 in 1 : vector<8x8xf32>, vector<8x8xf32>, vector<8x8xf32>, vector<8x8xf32> -> vector<8x32xf32>
    %cst_101 = arith.constant dense<0.000000e+00> : vector<8x32xf32>
    %232 = tpu.matmul %231, %137, %cst_101 {dimension_numbers = #tpu.dot_dimension_numbers<[1], [0], [0], [1], [0, 0, 1, 1], [], []>} : vector<8x32xf32>, vector<32x32xf32>, vector<8x32xf32> -> vector<8x32xf32>
    %233 = vector.broadcast %138 : vector<1x32xf32> to vector<8x32xf32>
    %234 = arith.addf %232, %233 : vector<8x32xf32>
    %235 = arith.addf %234, %132 : vector<8x32xf32>
    %c0_102 = arith.constant 0 : index
    %c0_103 = arith.constant 0 : index
    %236 = vector.load %arg21[%c0_102, %c0_103] : memref<1x32xf32, #tpu.memory_space<vmem>>, vector<1x32xf32>
    %c0_104 = arith.constant 0 : index
    %c0_105 = arith.constant 0 : index
    %237 = vector.load %arg22[%c0_104, %c0_105] : memref<1x32xf32, #tpu.memory_space<vmem>>, vector<1x32xf32>
    %cst_106 = arith.constant dense<0.000000e+00> : vector<8xf32>
    %238 = vector.multi_reduction <add>, %235, %cst_106 [1] : vector<8x32xf32> to vector<8xf32>
    %239 = vector.shape_cast %238 : vector<8xf32> to vector<8x1xf32>
    %cst_107 = arith.constant 3.200000e+01 : f32
    %240 = vector.broadcast %cst_107 : f32 to vector<8x1xf32>
    %241 = arith.divf %239, %240 : vector<8x1xf32>
    %242 = vector.broadcast %241 : vector<8x1xf32> to vector<8x32xf32>
    %243 = arith.subf %235, %242 : vector<8x32xf32>
    %244 = arith.mulf %243, %243 : vector<8x32xf32>
    %cst_108 = arith.constant dense<0.000000e+00> : vector<8xf32>
    %245 = vector.multi_reduction <add>, %244, %cst_108 [1] : vector<8x32xf32> to vector<8xf32>
    %246 = vector.shape_cast %245 : vector<8xf32> to vector<8x1xf32>
    %cst_109 = arith.constant 3.200000e+01 : f32
    %247 = vector.broadcast %cst_109 : f32 to vector<8x1xf32>
    %248 = arith.divf %246, %247 : vector<8x1xf32>
    %249 = vector.broadcast %241 : vector<8x1xf32> to vector<8x32xf32>
    %250 = arith.subf %235, %249 : vector<8x32xf32>
    %cst_110 = arith.constant 9.99999974E-6 : f32
    %251 = vector.broadcast %cst_110 : f32 to vector<8x1xf32>
    %252 = arith.addf %248, %251 : vector<8x1xf32>
    %253 = math.rsqrt %252 : vector<8x1xf32>
    %254 = vector.broadcast %253 : vector<8x1xf32> to vector<8x32xf32>
    %255 = arith.mulf %250, %254 : vector<8x32xf32>
    %256 = vector.broadcast %236 : vector<1x32xf32> to vector<8x32xf32>
    %257 = arith.mulf %255, %256 : vector<8x32xf32>
    %258 = vector.broadcast %237 : vector<1x32xf32> to vector<8x32xf32>
    %259 = arith.addf %257, %258 : vector<8x32xf32>
    %c0_111 = arith.constant 0 : index
    %c0_112 = arith.constant 0 : index
    %260 = vector.load %arg25[%c0_111, %c0_112] : memref<32x64xf32, #tpu.memory_space<vmem>>, vector<32x64xf32>
    %cst_113 = arith.constant dense<0.000000e+00> : vector<8x64xf32>
    %261 = tpu.matmul %259, %260, %cst_113 {dimension_numbers = #tpu.dot_dimension_numbers<[1], [0], [0], [1], [0, 0, 1, 1], [], []>} : vector<8x32xf32>, vector<32x64xf32>, vector<8x64xf32> -> vector<8x64xf32>
    %c0_114 = arith.constant 0 : index
    %c0_115 = arith.constant 0 : index
    %262 = vector.load %arg26[%c0_114, %c0_115] : memref<1x64xf32, #tpu.memory_space<vmem>>, vector<1x64xf32>
    %263 = vector.broadcast %262 : vector<1x64xf32> to vector<8x64xf32>
    %264 = arith.addf %261, %263 : vector<8x64xf32>
    %cst_116 = arith.constant 0.000000e+00 : f32
    %265 = vector.broadcast %cst_116 : f32 to vector<8x64xf32>
    %266 = arith.maximumf %264, %265 : vector<8x64xf32>
    %c0_117 = arith.constant 0 : index
    %c0_118 = arith.constant 0 : index
    %267 = vector.load %arg27[%c0_117, %c0_118] : memref<64x32xf32, #tpu.memory_space<vmem>>, vector<64x32xf32>
    %cst_119 = arith.constant dense<0.000000e+00> : vector<8x32xf32>
    %268 = tpu.matmul %266, %267, %cst_119 {dimension_numbers = #tpu.dot_dimension_numbers<[1], [0], [0], [1], [0, 0, 1, 1], [], []>} : vector<8x64xf32>, vector<64x32xf32>, vector<8x32xf32> -> vector<8x32xf32>
    %c0_120 = arith.constant 0 : index
    %c0_121 = arith.constant 0 : index
    %269 = vector.load %arg28[%c0_120, %c0_121] : memref<1x32xf32, #tpu.memory_space<vmem>>, vector<1x32xf32>
    %270 = vector.broadcast %269 : vector<1x32xf32> to vector<8x32xf32>
    %271 = arith.addf %268, %270 : vector<8x32xf32>
    %272 = arith.addf %271, %259 : vector<8x32xf32>
    %c0_122 = arith.constant 0 : index
    %c0_123 = arith.constant 0 : index
    %273 = vector.load %arg23[%c0_122, %c0_123] : memref<1x32xf32, #tpu.memory_space<vmem>>, vector<1x32xf32>
    %c0_124 = arith.constant 0 : index
    %c0_125 = arith.constant 0 : index
    %274 = vector.load %arg24[%c0_124, %c0_125] : memref<1x32xf32, #tpu.memory_space<vmem>>, vector<1x32xf32>
    %cst_126 = arith.constant dense<0.000000e+00> : vector<8xf32>
    %275 = vector.multi_reduction <add>, %272, %cst_126 [1] : vector<8x32xf32> to vector<8xf32>
    %276 = vector.shape_cast %275 : vector<8xf32> to vector<8x1xf32>
    %cst_127 = arith.constant 3.200000e+01 : f32
    %277 = vector.broadcast %cst_127 : f32 to vector<8x1xf32>
    %278 = arith.divf %276, %277 : vector<8x1xf32>
    %279 = vector.broadcast %278 : vector<8x1xf32> to vector<8x32xf32>
    %280 = arith.subf %272, %279 : vector<8x32xf32>
    %281 = arith.mulf %280, %280 : vector<8x32xf32>
    %cst_128 = arith.constant dense<0.000000e+00> : vector<8xf32>
    %282 = vector.multi_reduction <add>, %281, %cst_128 [1] : vector<8x32xf32> to vector<8xf32>
    %283 = vector.shape_cast %282 : vector<8xf32> to vector<8x1xf32>
    %cst_129 = arith.constant 3.200000e+01 : f32
    %284 = vector.broadcast %cst_129 : f32 to vector<8x1xf32>
    %285 = arith.divf %283, %284 : vector<8x1xf32>
    %286 = vector.broadcast %278 : vector<8x1xf32> to vector<8x32xf32>
    %287 = arith.subf %272, %286 : vector<8x32xf32>
    %cst_130 = arith.constant 9.99999974E-6 : f32
    %288 = vector.broadcast %cst_130 : f32 to vector<8x1xf32>
    %289 = arith.addf %285, %288 : vector<8x1xf32>
    %290 = math.rsqrt %289 : vector<8x1xf32>
    %291 = vector.broadcast %290 : vector<8x1xf32> to vector<8x32xf32>
    %292 = arith.mulf %287, %291 : vector<8x32xf32>
    %293 = vector.broadcast %273 : vector<1x32xf32> to vector<8x32xf32>
    %294 = arith.mulf %292, %293 : vector<8x32xf32>
    %295 = vector.broadcast %274 : vector<1x32xf32> to vector<8x32xf32>
    %296 = arith.addf %294, %295 : vector<8x32xf32>
    %c0_131 = arith.constant 0 : index
    %c0_132 = arith.constant 0 : index
    %c0_133 = arith.constant 0 : index
    %297 = vector.load %arg29[%c0_131, %c0_132, %c0_133] : memref<1x8x32xf32, #tpu.memory_space<vmem>>, vector<1x8x32xf32>
    %298 = vector.shape_cast %297 : vector<1x8x32xf32> to vector<8x32xf32>
    %299 = vector.shape_cast %296 : vector<8x32xf32> to vector<1x8x32xf32>
    tpu.vector_store %arg29[%c0_131, %c0_132, %c0_133], %299 {strides = array<i32>} : memref<1x8x32xf32, #tpu.memory_space<vmem>>, vector<1x8x32xf32>,
    return
  }
  func.func @transform_0(%arg0: i32, %arg1: i32) -> (i32, i32, i32) {
    %c0_i32 = arith.constant 0 : i32
    %c0_i32_0 = arith.constant 0 : i32
    return %arg0, %arg1, %c0_i32 : i32, i32, i32
  }
  func.func @transform_1(%arg0: i32, %arg1: i32) -> (i32, i32, i32) {
    %c0_i32 = arith.constant 0 : i32
    %c0_i32_0 = arith.constant 0 : i32
    %c0_i32_1 = arith.constant 0 : i32
    return %arg0, %c0_i32, %c0_i32_0 : i32, i32, i32
  }
  func.func @transform_2(%arg0: i32, %arg1: i32) -> (i32, i32, i32) {
    %c0_i32 = arith.constant 0 : i32
    %c0_i32_0 = arith.constant 0 : i32
    %c0_i32_1 = arith.constant 0 : i32
    return %arg0, %c0_i32, %c0_i32_0 : i32, i32, i32
  }
  func.func @transform_3(%arg0: i32, %arg1: i32) -> (i32, i32, i32) {
    %c0_i32 = arith.constant 0 : i32
    %c0_i32_0 = arith.constant 0 : i32
    %c0_i32_1 = arith.constant 0 : i32
    return %arg0, %c0_i32, %c0_i32_0 : i32, i32, i32
  }
  func.func @transform_4(%arg0: i32, %arg1: i32) -> (i32, i32, i32) {
    %c0_i32 = arith.constant 0 : i32
    %c0_i32_0 = arith.constant 0 : i32
    return %arg0, %arg1, %c0_i32 : i32, i32, i32
  }
  func.func @transform_5(%arg0: i32, %arg1: i32) -> (i32, i32) {
    %c0_i32 = arith.constant 0 : i32
    %c0_i32_0 = arith.constant 0 : i32
    %c0_i32_1 = arith.constant 0 : i32
    return %c0_i32, %c0_i32_0 : i32, i32
  }
  func.func @transform_6(%arg0: i32, %arg1: i32) -> (i32, i32) {
    %c0_i32 = arith.constant 0 : i32
    %c0_i32_0 = arith.constant 0 : i32
    %c0_i32_1 = arith.constant 0 : i32
    return %c0_i32, %c0_i32_0 : i32, i32
  }
  func.func @transform_7(%arg0: i32, %arg1: i32) -> (i32, i32) {
    %c0_i32 = arith.constant 0 : i32
    %c0_i32_0 = arith.constant 0 : i32
    %c0_i32_1 = arith.constant 0 : i32
    return %c0_i32, %c0_i32_0 : i32, i32
  }
  func.func @transform_8(%arg0: i32, %arg1: i32) -> (i32, i32) {
    %c0_i32 = arith.constant 0 : i32
    %c0_i32_0 = arith.constant 0 : i32
    %c0_i32_1 = arith.constant 0 : i32
    return %c0_i32, %c0_i32_0 : i32, i32
  }
  func.func @transform_9(%arg0: i32, %arg1: i32) -> (i32, i32) {
    %c0_i32 = arith.constant 0 : i32
    %c0_i32_0 = arith.constant 0 : i32
    %c0_i32_1 = arith.constant 0 : i32
    return %c0_i32, %c0_i32_0 : i32, i32
  }
  func.func @transform_10(%arg0: i32, %arg1: i32) -> (i32, i32) {
    %c0_i32 = arith.constant 0 : i32
    %c0_i32_0 = arith.constant 0 : i32
    %c0_i32_1 = arith.constant 0 : i32
    return %c0_i32, %c0_i32_0 : i32, i32
  }
  func.func @transform_11(%arg0: i32, %arg1: i32) -> (i32, i32) {
    %c0_i32 = arith.constant 0 : i32
    %c0_i32_0 = arith.constant 0 : i32
    %c0_i32_1 = arith.constant 0 : i32
    return %c0_i32, %c0_i32_0 : i32, i32
  }
  func.func @transform_12(%arg0: i32, %arg1: i32) -> (i32, i32) {
    %c0_i32 = arith.constant 0 : i32
    %c0_i32_0 = arith.constant 0 : i32
    %c0_i32_1 = arith.constant 0 : i32
    return %c0_i32, %c0_i32_0 : i32, i32
  }
  func.func @transform_13(%arg0: i32, %arg1: i32) -> (i32, i32) {
    %c0_i32 = arith.constant 0 : i32
    %c0_i32_0 = arith.constant 0 : i32
    %c0_i32_1 = arith.constant 0 : i32
    return %c0_i32, %c0_i32_0 : i32, i32
  }
  func.func @transform_14(%arg0: i32, %arg1: i32) -> (i32, i32) {
    %c0_i32 = arith.constant 0 : i32
    %c0_i32_0 = arith.constant 0 : i32
    %c0_i32_1 = arith.constant 0 : i32
    return %c0_i32, %c0_i32_0 : i32, i32
  }
  func.func @transform_15(%arg0: i32, %arg1: i32) -> (i32, i32) {
    %c0_i32 = arith.constant 0 : i32
    %c0_i32_0 = arith.constant 0 : i32
    %c0_i32_1 = arith.constant 0 : i32
    return %c0_i32, %c0_i32_0 : i32, i32
  }
  func.func @transform_16(%arg0: i32, %arg1: i32) -> (i32, i32) {
    %c0_i32 = arith.constant 0 : i32
    %c0_i32_0 = arith.constant 0 : i32
    %c0_i32_1 = arith.constant 0 : i32
    return %c0_i32, %c0_i32_0 : i32, i32
  }
  func.func @transform_17(%arg0: i32, %arg1: i32) -> (i32, i32) {
    %c0_i32 = arith.constant 0 : i32
    %c0_i32_0 = arith.constant 0 : i32
    %c0_i32_1 = arith.constant 0 : i32
    return %c0_i32, %c0_i32_0 : i32, i32
  }
  func.func @transform_18(%arg0: i32, %arg1: i32) -> (i32, i32) {
    %c0_i32 = arith.constant 0 : i32
    %c0_i32_0 = arith.constant 0 : i32
    %c0_i32_1 = arith.constant 0 : i32
    return %c0_i32, %c0_i32_0 : i32, i32
  }
  func.func @transform_19(%arg0: i32, %arg1: i32) -> (i32, i32) {
    %c0_i32 = arith.constant 0 : i32
    %c0_i32_0 = arith.constant 0 : i32
    %c0_i32_1 = arith.constant 0 : i32
    return %c0_i32, %c0_i32_0 : i32, i32
  }
  func.func @transform_20(%arg0: i32, %arg1: i32) -> (i32, i32) {
    %c0_i32 = arith.constant 0 : i32
    %c0_i32_0 = arith.constant 0 : i32
    %c0_i32_1 = arith.constant 0 : i32
    return %c0_i32, %c0_i32_0 : i32, i32
  }
  func.func @transform_21(%arg0: i32, %arg1: i32) -> (i32, i32) {
    %c0_i32 = arith.constant 0 : i32
    %c0_i32_0 = arith.constant 0 : i32
    %c0_i32_1 = arith.constant 0 : i32
    return %c0_i32, %c0_i32_0 : i32, i32
  }
  func.func @transform_22(%arg0: i32, %arg1: i32) -> (i32, i32) {
    %c0_i32 = arith.constant 0 : i32
    %c0_i32_0 = arith.constant 0 : i32
    %c0_i32_1 = arith.constant 0 : i32
    return %c0_i32, %c0_i32_0 : i32, i32
  }
  func.func @transform_23(%arg0: i32, %arg1: i32) -> (i32, i32) {
    %c0_i32 = arith.constant 0 : i32
    %c0_i32_0 = arith.constant 0 : i32
    %c0_i32_1 = arith.constant 0 : i32
    return %c0_i32, %c0_i32_0 : i32, i32
  }
  func.func @transform_24(%arg0: i32, %arg1: i32) -> (i32, i32) {
    %c0_i32 = arith.constant 0 : i32
    %c0_i32_0 = arith.constant 0 : i32
    %c0_i32_1 = arith.constant 0 : i32
    return %c0_i32, %c0_i32_0 : i32, i32
  }
  func.func @transform_25(%arg0: i32, %arg1: i32) -> (i32, i32) {
    %c0_i32 = arith.constant 0 : i32
    %c0_i32_0 = arith.constant 0 : i32
    %c0_i32_1 = arith.constant 0 : i32
    return %c0_i32, %c0_i32_0 : i32, i32
  }
  func.func @transform_26(%arg0: i32, %arg1: i32) -> (i32, i32) {
    %c0_i32 = arith.constant 0 : i32
    %c0_i32_0 = arith.constant 0 : i32
    %c0_i32_1 = arith.constant 0 : i32
    return %c0_i32, %c0_i32_0 : i32, i32
  }
  func.func @transform_27(%arg0: i32, %arg1: i32) -> (i32, i32, i32) {
    %c0_i32 = arith.constant 0 : i32
    %c0_i32_0 = arith.constant 0 : i32
    return %arg0, %arg1, %c0_i32 : i32, i32, i32
  }
}

</mosaic_0001>

<llo_original>
// kernel: tpu_custom_call.1
$region0: #{tpu_custom_call.1}
  #allocation0 [shape = 'u32[]', space=smem, size = 0x4, offset = 0x4, fixed_abs, tag = 'smem constant byte address 0x4 - core index']
  #allocation1 [shape = 'u32[144,128]{1,0:T(1,128)}', space=vmem, size = 0x12000, scoped, tag = 'internal scratch']
  %s0 = inlined_call_operand.vmem [shape: f32[2,16,32], index: 0, kind: input, shape index: {}]
  %s1 = inlined_call_operand.vmem [shape: f32[2,16,32], index: 1, kind: input, shape index: {}]
  %s2 = inlined_call_operand.hbm [shape: f32[2,8,32], index: 2, kind: input, shape index: {}]
  %s3 = inlined_call_operand.hbm [shape: f32[2,1,8], index: 3, kind: input, shape index: {}]
  %s4 = inlined_call_operand.vmem [shape: f32[2,16,16], index: 4, kind: input, shape index: {}]
  %s5 = inlined_call_operand.hbm [shape: f32[32,32], index: 5, kind: input, shape index: {}]
  %s6 = inlined_call_operand.hbm [shape: f32[1,32], index: 6, kind: input, shape index: {}]
  %s7 = inlined_call_operand.hbm [shape: f32[32,64], index: 7, kind: input, shape index: {}]
  %s8 = inlined_call_operand.hbm [shape: f32[1,64], index: 8, kind: input, shape index: {}]
  %s9 = inlined_call_operand.vmem [shape: f32[32,32], index: 9, kind: input, shape index: {}]
  %s10 = inlined_call_operand.hbm [shape: f32[1,32], index: 10, kind: input, shape index: {}]
  %s11 = inlined_call_operand.hbm [shape: f32[32,32], index: 11, kind: input, shape index: {}]
  %s12 = inlined_call_operand.hbm [shape: f32[1,32], index: 12, kind: input, shape index: {}]
  %s13 = inlined_call_operand.hbm [shape: f32[32,64], index: 13, kind: input, shape index: {}]
  %s14 = inlined_call_operand.hbm [shape: f32[1,64], index: 14, kind: input, shape index: {}]
  %s15 = inlined_call_operand.hbm [shape: f32[32,32], index: 15, kind: input, shape index: {}]
  %s16 = inlined_call_operand.hbm [shape: f32[1,32], index: 16, kind: input, shape index: {}]
  %s17 = inlined_call_operand.hbm [shape: f32[1,32], index: 17, kind: input, shape index: {}]
  %s18 = inlined_call_operand.vmem [shape: f32[1,32], index: 18, kind: input, shape index: {}]
  %s19 = inlined_call_operand.vmem [shape: f32[1,32], index: 19, kind: input, shape index: {}]
  %s20 = inlined_call_operand.vmem [shape: f32[1,32], index: 20, kind: input, shape index: {}]
  %s21 = inlined_call_operand.vmem [shape: f32[1,32], index: 21, kind: input, shape index: {}]
  %s22 = inlined_call_operand.vmem [shape: f32[1,32], index: 22, kind: input, shape index: {}]
  %s23 = inlined_call_operand.vmem [shape: f32[32,64], index: 23, kind: input, shape index: {}]
  %s24 = inlined_call_operand.vmem [shape: f32[1,64], index: 24, kind: input, shape index: {}]
  %s25 = inlined_call_operand.vmem [shape: f32[64,32], index: 25, kind: input, shape index: {}]
  %s26 = inlined_call_operand.vmem [shape: f32[1,32], index: 26, kind: input, shape index: {}]
  %s27 = inlined_call_operand.hbm [shape: f32[2,16,32], index: 27, kind: output, shape index: {}]
  %s28 = sld [smem:[#allocation0]]
  $region197: #{tpu_custom_call.1} parent=0
    _
  %s30 = ssub.s32 1, %s28
  %s31 = scalar_select 0, %s30, %s28
  $region1: #{tpu_custom_call.1} parent=0
    #allocation2 [shape = 'u8[8192]{0}', space=vmem, size = 0x2000, scoped, tag = 'input window, operand 2']
    #allocation3 [shape = 's32[2]{0}', space=sflag, size = 0x8, scoped, tag = 'scoped memory for tpu_custom_call.1']
    #allocation4 [shape = 's32[2]{0}', space=sflag, size = 0x8, scoped, tag = 'scoped memory for tpu_custom_call.1']
    #allocation5 [shape = 'u8[1024]{0}', space=vmem, size = 0x400, scoped, tag = 'input window, operand 3']
    #allocation6 [shape = 's32[2]{0}', space=sflag, size = 0x8, scoped, tag = 'scoped memory for tpu_custom_call.1']
    #allocation7 [shape = 'u8[16384]{0}', space=vmem, size = 0x4000, scoped, tag = 'input window, operand 5, single buffered']
    #allocation8 [shape = 'u8[512]{0}', space=vmem, size = 0x400, scoped, tag = 'input window, operand 6, single buffered']
    #allocation9 [shape = 's32[1]{0}', space=sflag, size = 0x4, scoped, tag = 'scoped memory for tpu_custom_call.1']
    #allocation10 [shape = 'u8[16384]{0}', space=vmem, size = 0x4000, scoped, tag = 'input window, operand 7, single buffered']
    #allocation11 [shape = 'u8[512]{0}', space=vmem, size = 0x400, scoped, tag = 'input window, operand 8, single buffered']
    #allocation12 [shape = 's32[1]{0}', space=sflag, size = 0x4, scoped, tag = 'scoped memory for tpu_custom_call.1']
    #allocation13 [shape = 'u8[512]{0}', space=vmem, size = 0x400, scoped, tag = 'input window, operand 10, single buffered']
    #allocation14 [shape = 'u8[16384]{0}', space=vmem, size = 0x4000, scoped, tag = 'input window, operand 11, single buffered']
    #allocation15 [shape = 's32[1]{0}', space=sflag, size = 0x4, scoped, tag = 'scoped memory for tpu_custom_call.1']
    #allocation16 [shape = 'u8[512]{0}', space=vmem, size = 0x400, scoped, tag = 'input window, operand 12, single buffered']
    #allocation17 [shape = 'u8[16384]{0}', space=vmem, size = 0x4000, scoped, tag = 'input window, operand 13, single buffered']
    #allocation18 [shape = 's32[1]{0}', space=sflag, size = 0x4, scoped, tag = 'scoped memory for tpu_custom_call.1']
    #allocation19 [shape = 'u8[512]{0}', space=vmem, size = 0x400, scoped, tag = 'input window, operand 14, single buffered']
    #allocation20 [shape = 'u8[16384]{0}', space=vmem, size = 0x4000, scoped, tag = 'input window, operand 15, single buffered']
    #allocation21 [shape = 's32[1]{0}', space=sflag, size = 0x4, scoped, tag = 'scoped memory for tpu_custom_call.1']
    #allocation22 [shape = 'u8[512]{0}', space=vmem, size = 0x400, scoped, tag = 'input window, operand 16, single buffered']
    #allocation23 [shape = 'u8[512]{0}', space=vmem, size = 0x400, scoped, tag = 'input window, operand 17, single buffered']
    #allocation24 [shape = 's32[1]{0}', space=sflag, size = 0x4, scoped, tag = 'scoped memory for tpu_custom_call.1']
    #allocation25 [shape = 'u8[8192]{0}', space=vmem, size = 0x2000, scoped, tag = 'output window, operand 0']
    %32 = vsyncpa [#allocation3], 0
    %s33 = scalar_lea.sflag [#allocation3], 1
    %34 = vsyncpa %s33, 0
    %35 = vsyncpa [#allocation6], 0
    %s36 = scalar_lea.sflag [#allocation6], 1
    %37 = vsyncpa %s36, 0
    %38 = vsyncpa [#allocation9], 0
    %39 = vsyncpa [#allocation12], 0
    %40 = vsyncpa [#allocation15], 0
    %41 = vsyncpa [#allocation18], 0
    %42 = vsyncpa [#allocation21], 0
    %43 = vsyncpa [#allocation24], 0
    %44 = vsyncpa [#allocation4], 0
    %s45 = scalar_lea.sflag [#allocation4], 1
    %46 = vsyncpa %s45, 0
    loop: start=0, step=1, limit=6
    $region2: #{tpu_custom_call.1} parent=1 // loop_pre_header
      _
    $region3: #{tpu_custom_call.1} parent=1 // loop_header
      %s48 = sphi 0, %s52
      %p49 = scmp.ge.s32.totalorder %s48, 6
      %s55 = sphi 0, %s67
      %s56 = sphi 0, %s63
      %s57 = sphi 0, %s55
      %s58 = sphi 0, %s56
      %s59 = sphi 0, %s57
      %s60 = sphi 0, %s58
      %s72 = sphi 0, %s74
      %s75 = sphi 0, %s72
      %s76 = sphi 0, %s75
      %s92 = sphi 0, %s76
      %s98 = sphi 0, %s100
      %s101 = sphi 0, %s98
      %s102 = sphi 0, %s101
      %s118 = sphi 0, %s102
      %s124 = sphi 0, %s126
      %s127 = sphi 0, %s124
      %s128 = sphi 0, %s127
      %s144 = sphi 0, %s128
      %s150 = sphi 0, %s152
      %s153 = sphi 0, %s150
      %s154 = sphi 0, %s153
      %s170 = sphi 0, %s154
      %s178 = sphi 0, %s180
      %s181 = sphi 0, %s178
      %s182 = sphi 0, %s181
      %s198 = sphi 0, %s182
      %s202 = sphi 0, %s202
      %s204 = sphi 0, %s202
      %s205 = sphi 0, %s204
      %s219 = sphi 0, %s205
      %s223 = sphi 0, %s223
      %s225 = sphi 0, %s223
      %s226 = sphi 0, %s225
      %s240 = sphi 0, %s226
      %s244 = sphi 0, %s244
      %s246 = sphi 0, %s244
      %s247 = sphi 0, %s246
      %s261 = sphi 0, %s247
      %s265 = sphi 0, %s265
      %s267 = sphi 0, %s265
      %s268 = sphi 0, %s267
      %s282 = sphi 0, %s268
      %s286 = sphi 0, %s286
      %s288 = sphi 0, %s286
      %s289 = sphi 0, %s288
      %s303 = sphi 0, %s289
      %s307 = sphi 0, %s307
      %s309 = sphi 0, %s307
      %s310 = sphi 0, %s309
      %s324 = sphi 0, %s310
      %s328 = sphi 0, %s328
      %s330 = sphi 0, %s328
      %s331 = sphi 0, %s330
      %s345 = sphi 0, %s331
      %s349 = sphi 0, %s349
      %s351 = sphi 0, %s349
      %s352 = sphi 0, %s351
      %s366 = sphi 0, %s352
      %s370 = sphi 0, %s370
      %s372 = sphi 0, %s370
      %s373 = sphi 0, %s372
      %s387 = sphi 0, %s373
      %s391 = sphi 0, %s391
      %s393 = sphi 0, %s391
      %s394 = sphi 0, %s393
      %s408 = sphi 0, %s394
      %s412 = sphi 0, %s412
      %s414 = sphi 0, %s412
      %s415 = sphi 0, %s414
      %s429 = sphi 0, %s415
      %s433 = sphi 0, %s433
      %s435 = sphi 0, %s433
      %s436 = sphi 0, %s435
      %s450 = sphi 0, %s436
      %s454 = sphi 0, %s454
      %s456 = sphi 0, %s454
      %s457 = sphi 0, %s456
      %s471 = sphi 0, %s457
      %s475 = sphi 0, %s475
      %s477 = sphi 0, %s475
      %s478 = sphi 0, %s477
      %s492 = sphi 0, %s478
      %s496 = sphi 0, %s496
      %s498 = sphi 0, %s496
      %s499 = sphi 0, %s498
      %s513 = sphi 0, %s499
      %s517 = sphi 0, %s517
      %s519 = sphi 0, %s517
      %s520 = sphi 0, %s519
      %s534 = sphi 0, %s520
      %s538 = sphi 0, %s538
      %s540 = sphi 0, %s538
      %s541 = sphi 0, %s540
      %s555 = sphi 0, %s541
      %s559 = sphi 0, %s559
      %s561 = sphi 0, %s559
      %s562 = sphi 0, %s561
      %s576 = sphi 0, %s562
      %s580 = sphi 0, %s580
      %s582 = sphi 0, %s580
      %s583 = sphi 0, %s582
      %s597 = sphi 0, %s583
      %s601 = sphi 0, %s601
      %s603 = sphi 0, %s601
      %s604 = sphi 0, %s603
      %s618 = sphi 0, %s604
      %s622 = sphi 0, %s622
      %s624 = sphi 0, %s622
      %s625 = sphi 0, %s624
      %s639 = sphi 0, %s625
      %s643 = sphi 0, %s643
      %s645 = sphi 0, %s643
      %s646 = sphi 0, %s645
      %s660 = sphi 0, %s646
      %s668 = sphi 0, %s670
      %s671 = sphi 0, %s668
      %s672 = sphi 0, %s671
      %s688 = sphi 0, %s672
    $region4: #{tpu_custom_call.1} parent=1 // loop_header_branch
      %51 = sbr.rel (%p49) target = $region8
    $region5: #{tpu_custom_call.1} parent=1 // loop_body
      %s53 = ssub.s32 %s48, 1
      %s54 = ssub.s32 %s48, 2
      %s61 = sadd.s32 1, %s56
      %p62 = scmp.ge.s32.totalorder %s61, 2
      %s63 = scalar_select %p62, 0, %s61
      %s64 = sadd.s32 1, %s55
      %s65 = scalar_select %p62, %s64, %s55
      %p66 = scmp.ge.s32.totalorder %s65, 2
      %s67 = scalar_select %p66, 0, %s65
      %s68 = ssub.s32 %s55, %s67
      %s69 = ssub.s32 %s56, %s63
      %s70 = sor.u32 %s68, %s69
      %p71 = scmp.eq.s32.totalorder %s70, 0
      %s73 = sadd.s32 %s72, 1
      %s74 = scalar_select %p71, %s72, %s73
      %p77 = pneg %p71
      %p78 = scmp.eq.s32.totalorder %s48, 3
      %p79 = por %p77, %p78
      %p80 = scmp.ne.s32.totalorder %s72, %s75
      %p81 = scmp.eq.s32.totalorder %s48, 0
      %p82 = por %p80, %p81
      %p83 = scmp.ne.s32.totalorder %s72, %s75
      %p84 = scmp.eq.s32.totalorder %s53, 3
      %p85 = por %p83, %p84
      %p86 = scmp.ne.s32.totalorder %s75, %s76
      %p87 = scmp.eq.s32.totalorder %s53, 0
      %p88 = por %p86, %p87
      %p89 = scmp.ne.s32.totalorder %s75, %s76
      %p90 = scmp.eq.s32.totalorder %s54, 3
      %p91 = por %p89, %p90
      %p93 = scmp.ne.s32.totalorder %s76, %s92
      %p94 = scmp.eq.s32.totalorder %s54, 0
      %p95 = por %p93, %p94
      %s96 = ssub.s32 %s55, %s67
      %p97 = scmp.eq.s32.totalorder %s96, 0
      %s99 = sadd.s32 %s98, 1
      %s100 = scalar_select %p97, %s98, %s99
      %p103 = pneg %p97
      %p104 = scmp.eq.s32.totalorder %s48, 3
      %p105 = por %p103, %p104
      %p106 = scmp.ne.s32.totalorder %s98, %s101
      %p107 = scmp.eq.s32.totalorder %s48, 0
      %p108 = por %p106, %p107
      %p109 = scmp.ne.s32.totalorder %s98, %s101
      %p110 = scmp.eq.s32.totalorder %s53, 3
      %p111 = por %p109, %p110
      %p112 = scmp.ne.s32.totalorder %s101, %s102
      %p113 = scmp.eq.s32.totalorder %s53, 0
      %p114 = por %p112, %p113
      %p115 = scmp.ne.s32.totalorder %s101, %s102
      %p116 = scmp.eq.s32.totalorder %s54, 3
      %p117 = por %p115, %p116
      %p119 = scmp.ne.s32.totalorder %s102, %s118
      %p120 = scmp.eq.s32.totalorder %s54, 0
      %p121 = por %p119, %p120
      %s122 = ssub.s32 %s55, %s67
      %p123 = scmp.eq.s32.totalorder %s122, 0
      %s125 = sadd.s32 %s124, 1
      %s126 = scalar_select %p123, %s124, %s125
      %p129 = pneg %p123
      %p130 = scmp.eq.s32.totalorder %s48, 3
      %p131 = por %p129, %p130
      %p132 = scmp.ne.s32.totalorder %s124, %s127
      %p133 = scmp.eq.s32.totalorder %s48, 0
      %p134 = por %p132, %p133
      %p135 = scmp.ne.s32.totalorder %s124, %s127
      %p136 = scmp.eq.s32.totalorder %s53, 3
      %p137 = por %p135, %p136
      %p138 = scmp.ne.s32.totalorder %s127, %s128
      %p139 = scmp.eq.s32.totalorder %s53, 0
      %p140 = por %p138, %p139
      %p141 = scmp.ne.s32.totalorder %s127, %s128
      %p142 = scmp.eq.s32.totalorder %s54, 3
      %p143 = por %p141, %p142
      %p145 = scmp.ne.s32.totalorder %s128, %s144
      %p146 = scmp.eq.s32.totalorder %s54, 0
      %p147 = por %p145, %p146
      %s148 = ssub.s32 %s55, %s67
      %p149 = scmp.eq.s32.totalorder %s148, 0
      %s151 = sadd.s32 %s150, 1
      %s152 = scalar_select %p149, %s150, %s151
      %p155 = pneg %p149
      %p156 = scmp.eq.s32.totalorder %s48, 3
      %p157 = por %p155, %p156
      %p158 = scmp.ne.s32.totalorder %s150, %s153
      %p159 = scmp.eq.s32.totalorder %s48, 0
      %p160 = por %p158, %p159
      %p161 = scmp.ne.s32.totalorder %s150, %s153
      %p162 = scmp.eq.s32.totalorder %s53, 3
      %p163 = por %p161, %p162
      %p164 = scmp.ne.s32.totalorder %s153, %s154
      %p165 = scmp.eq.s32.totalorder %s53, 0
      %p166 = por %p164, %p165
      %p167 = scmp.ne.s32.totalorder %s153, %s154
      %p168 = scmp.eq.s32.totalorder %s54, 3
      %p169 = por %p167, %p168
      %p171 = scmp.ne.s32.totalorder %s154, %s170
      %p172 = scmp.eq.s32.totalorder %s54, 0
      %p173 = por %p171, %p172
      %s174 = ssub.s32 %s55, %s67
      %s175 = ssub.s32 %s56, %s63
      %s176 = sor.u32 %s174, %s175
      %p177 = scmp.eq.s32.totalorder %s176, 0
      %s179 = sadd.s32 %s178, 1
      %s180 = scalar_select %p177, %s178, %s179
      %p183 = pneg %p177
      %p184 = scmp.eq.s32.totalorder %s48, 3
      %p185 = por %p183, %p184
      %p186 = scmp.ne.s32.totalorder %s178, %s181
      %p187 = scmp.eq.s32.totalorder %s48, 0
      %p188 = por %p186, %p187
      %p189 = scmp.ne.s32.totalorder %s178, %s181
      %p190 = scmp.eq.s32.totalorder %s53, 3
      %p191 = por %p189, %p190
      %p192 = scmp.ne.s32.totalorder %s181, %s182
      %p193 = scmp.eq.s32.totalorder %s53, 0
      %p194 = por %p192, %p193
      %p195 = scmp.ne.s32.totalorder %s181, %s182
      %p196 = scmp.eq.s32.totalorder %s54, 3
      %p197 = por %p195, %p196
      %p199 = scmp.ne.s32.totalorder %s182, %s198
      %p200 = scmp.eq.s32.totalorder %s54, 0
      %p201 = por %p199, %p200
      %s203 = sadd.s32 %s202, 1
      %p206 = scmp.eq.s32.totalorder %s48, 3
      %p207 = scmp.ne.s32.totalorder %s202, %s204
      %p208 = scmp.eq.s32.totalorder %s48, 0
      %p209 = por %p207, %p208
      %p210 = scmp.ne.s32.totalorder %s202, %s204
      %p211 = scmp.eq.s32.totalorder %s53, 3
      %p212 = por %p210, %p211
      %p213 = scmp.ne.s32.totalorder %s204, %s205
      %p214 = scmp.eq.s32.totalorder %s53, 0
      %p215 = por %p213, %p214
      %p216 = scmp.ne.s32.totalorder %s204, %s205
      %p217 = scmp.eq.s32.totalorder %s54, 3
      %p218 = por %p216, %p217
      %p220 = scmp.ne.s32.totalorder %s205, %s219
      %p221 = scmp.eq.s32.totalorder %s54, 0
      %p222 = por %p220, %p221
      %s224 = sadd.s32 %s223, 1
      %p227 = scmp.eq.s32.totalorder %s48, 3
      %p228 = scmp.ne.s32.totalorder %s223, %s225
      %p229 = scmp.eq.s32.totalorder %s48, 0
      %p230 = por %p228, %p229
      %p231 = scmp.ne.s32.totalorder %s223, %s225
      %p232 = scmp.eq.s32.totalorder %s53, 3
      %p233 = por %p231, %p232
      %p234 = scmp.ne.s32.totalorder %s225, %s226
      %p235 = scmp.eq.s32.totalorder %s53, 0
      %p236 = por %p234, %p235
      %p237 = scmp.ne.s32.totalorder %s225, %s226
      %p238 = scmp.eq.s32.totalorder %s54, 3
      %p239 = por %p237, %p238
      %p241 = scmp.ne.s32.totalorder %s226, %s240
      %p242 = scmp.eq.s32.totalorder %s54, 0
      %p243 = por %p241, %p242
      %s245 = sadd.s32 %s244, 1
      %p248 = scmp.eq.s32.totalorder %s48, 3
      %p249 = scmp.ne.s32.totalorder %s244, %s246
      %p250 = scmp.eq.s32.totalorder %s48, 0
      %p251 = por %p249, %p250
      %p252 = scmp.ne.s32.totalorder %s244, %s246
      %p253 = scmp.eq.s32.totalorder %s53, 3
      %p254 = por %p252, %p253
      %p255 = scmp.ne.s32.totalorder %s246, %s247
      %p256 = scmp.eq.s32.totalorder %s53, 0
      %p257 = por %p255, %p256
      %p258 = scmp.ne.s32.totalorder %s246, %s247
      %p259 = scmp.eq.s32.totalorder %s54, 3
      %p260 = por %p258, %p259
      %p262 = scmp.ne.s32.totalorder %s247, %s261
      %p263 = scmp.eq.s32.totalorder %s54, 0
      %p264 = por %p262, %p263
      %s266 = sadd.s32 %s265, 1
      %p269 = scmp.eq.s32.totalorder %s48, 3
      %p270 = scmp.ne.s32.totalorder %s265, %s267
      %p271 = scmp.eq.s32.totalorder %s48, 0
      %p272 = por %p270, %p271
      %p273 = scmp.ne.s32.totalorder %s265, %s267
      %p274 = scmp.eq.s32.totalorder %s53, 3
      %p275 = por %p273, %p274
      %p276 = scmp.ne.s32.totalorder %s267, %s268
      %p277 = scmp.eq.s32.totalorder %s53, 0
      %p278 = por %p276, %p277
      %p279 = scmp.ne.s32.totalorder %s267, %s268
      %p280 = scmp.eq.s32.totalorder %s54, 3
      %p281 = por %p279, %p280
      %p283 = scmp.ne.s32.totalorder %s268, %s282
      %p284 = scmp.eq.s32.totalorder %s54, 0
      %p285 = por %p283, %p284
      %s287 = sadd.s32 %s286, 1
      %p290 = scmp.eq.s32.totalorder %s48, 3
      %p291 = scmp.ne.s32.totalorder %s286, %s288
      %p292 = scmp.eq.s32.totalorder %s48, 0
      %p293 = por %p291, %p292
      %p294 = scmp.ne.s32.totalorder %s286, %s288
      %p295 = scmp.eq.s32.totalorder %s53, 3
      %p296 = por %p294, %p295
      %p297 = scmp.ne.s32.totalorder %s288, %s289
      %p298 = scmp.eq.s32.totalorder %s53, 0
      %p299 = por %p297, %p298
      %p300 = scmp.ne.s32.totalorder %s288, %s289
      %p301 = scmp.eq.s32.totalorder %s54, 3
      %p302 = por %p300, %p301
      %p304 = scmp.ne.s32.totalorder %s289, %s303
      %p305 = scmp.eq.s32.totalorder %s54, 0
      %p306 = por %p304, %p305
      %s308 = sadd.s32 %s307, 1
      %p311 = scmp.eq.s32.totalorder %s48, 3
      %p312 = scmp.ne.s32.totalorder %s307, %s309
      %p313 = scmp.eq.s32.totalorder %s48, 0
      %p314 = por %p312, %p313
      %p315 = scmp.ne.s32.totalorder %s307, %s309
      %p316 = scmp.eq.s32.totalorder %s53, 3
      %p317 = por %p315, %p316
      %p318 = scmp.ne.s32.totalorder %s309, %s310
      %p319 = scmp.eq.s32.totalorder %s53, 0
      %p320 = por %p318, %p319
      %p321 = scmp.ne.s32.totalorder %s309, %s310
      %p322 = scmp.eq.s32.totalorder %s54, 3
      %p323 = por %p321, %p322
      %p325 = scmp.ne.s32.totalorder %s310, %s324
      %p326 = scmp.eq.s32.totalorder %s54, 0
      %p327 = por %p325, %p326
      %s329 = sadd.s32 %s328, 1
      %p332 = scmp.eq.s32.totalorder %s48, 3
      %p333 = scmp.ne.s32.totalorder %s328, %s330
      %p334 = scmp.eq.s32.totalorder %s48, 0
      %p335 = por %p333, %p334
      %p336 = scmp.ne.s32.totalorder %s328, %s330
      %p337 = scmp.eq.s32.totalorder %s53, 3
      %p338 = por %p336, %p337
      %p339 = scmp.ne.s32.totalorder %s330, %s331
      %p340 = scmp.eq.s32.totalorder %s53, 0
      %p341 = por %p339, %p340
      %p342 = scmp.ne.s32.totalorder %s330, %s331
      %p343 = scmp.eq.s32.totalorder %s54, 3
      %p344 = por %p342, %p343
      %p346 = scmp.ne.s32.totalorder %s331, %s345
      %p347 = scmp.eq.s32.totalorder %s54, 0
      %p348 = por %p346, %p347
      %s350 = sadd.s32 %s349, 1
      %p353 = scmp.eq.s32.totalorder %s48, 3
      %p354 = scmp.ne.s32.totalorder %s349, %s351
      %p355 = scmp.eq.s32.totalorder %s48, 0
      %p356 = por %p354, %p355
      %p357 = scmp.ne.s32.totalorder %s349, %s351
      %p358 = scmp.eq.s32.totalorder %s53, 3
      %p359 = por %p357, %p358
      %p360 = scmp.ne.s32.totalorder %s351, %s352
      %p361 = scmp.eq.s32.totalorder %s53, 0
      %p362 = por %p360, %p361
      %p363 = scmp.ne.s32.totalorder %s351, %s352
      %p364 = scmp.eq.s32.totalorder %s54, 3
      %p365 = por %p363, %p364
      %p367 = scmp.ne.s32.totalorder %s352, %s366
      %p368 = scmp.eq.s32.totalorder %s54, 0
      %p369 = por %p367, %p368
      %s371 = sadd.s32 %s370, 1
      %p374 = scmp.eq.s32.totalorder %s48, 3
      %p375 = scmp.ne.s32.totalorder %s370, %s372
      %p376 = scmp.eq.s32.totalorder %s48, 0
      %p377 = por %p375, %p376
      %p378 = scmp.ne.s32.totalorder %s370, %s372
      %p379 = scmp.eq.s32.totalorder %s53, 3
      %p380 = por %p378, %p379
      %p381 = scmp.ne.s32.totalorder %s372, %s373
      %p382 = scmp.eq.s32.totalorder %s53, 0
      %p383 = por %p381, %p382
      %p384 = scmp.ne.s32.totalorder %s372, %s373
      %p385 = scmp.eq.s32.totalorder %s54, 3
      %p386 = por %p384, %p385
      %p388 = scmp.ne.s32.totalorder %s373, %s387
      %p389 = scmp.eq.s32.totalorder %s54, 0
      %p390 = por %p388, %p389
      %s392 = sadd.s32 %s391, 1
      %p395 = scmp.eq.s32.totalorder %s48, 3
      %p396 = scmp.ne.s32.totalorder %s391, %s393
      %p397 = scmp.eq.s32.totalorder %s48, 0
      %p398 = por %p396, %p397
      %p399 = scmp.ne.s32.totalorder %s391, %s393
      %p400 = scmp.eq.s32.totalorder %s53, 3
      %p401 = por %p399, %p400
      %p402 = scmp.ne.s32.totalorder %s393, %s394
      %p403 = scmp.eq.s32.totalorder %s53, 0
      %p404 = por %p402, %p403
      %p405 = scmp.ne.s32.totalorder %s393, %s394
      %p406 = scmp.eq.s32.totalorder %s54, 3
      %p407 = por %p405, %p406
      %p409 = scmp.ne.s32.totalorder %s394, %s408
      %p410 = scmp.eq.s32.totalorder %s54, 0
      %p411 = por %p409, %p410
      %s413 = sadd.s32 %s412, 1
      %p416 = scmp.eq.s32.totalorder %s48, 3
      %p417 = scmp.ne.s32.totalorder %s412, %s414
      %p418 = scmp.eq.s32.totalorder %s48, 0
      %p419 = por %p417, %p418
      %p420 = scmp.ne.s32.totalorder %s412, %s414
      %p421 = scmp.eq.s32.totalorder %s53, 3
      %p422 = por %p420, %p421
      %p423 = scmp.ne.s32.totalorder %s414, %s415
      %p424 = scmp.eq.s32.totalorder %s53, 0
      %p425 = por %p423, %p424
      %p426 = scmp.ne.s32.totalorder %s414, %s415
      %p427 = scmp.eq.s32.totalorder %s54, 3
      %p428 = por %p426, %p427
      %p430 = scmp.ne.s32.totalorder %s415, %s429
      %p431 = scmp.eq.s32.totalorder %s54, 0
      %p432 = por %p430, %p431
      %s434 = sadd.s32 %s433, 1
      %p437 = scmp.eq.s32.totalorder %s48, 3
      %p438 = scmp.ne.s32.totalorder %s433, %s435
      %p439 = scmp.eq.s32.totalorder %s48, 0
      %p440 = por %p438, %p439
      %p441 = scmp.ne.s32.totalorder %s433, %s435
      %p442 = scmp.eq.s32.totalorder %s53, 3
      %p443 = por %p441, %p442
      %p444 = scmp.ne.s32.totalorder %s435, %s436
      %p445 = scmp.eq.s32.totalorder %s53, 0
      %p446 = por %p444, %p445
      %p447 = scmp.ne.s32.totalorder %s435, %s436
      %p448 = scmp.eq.s32.totalorder %s54, 3
      %p449 = por %p447, %p448
      %p451 = scmp.ne.s32.totalorder %s436, %s450
      %p452 = scmp.eq.s32.totalorder %s54, 0
      %p453 = por %p451, %p452
      %s455 = sadd.s32 %s454, 1
      %p458 = scmp.eq.s32.totalorder %s48, 3
      %p459 = scmp.ne.s32.totalorder %s454, %s456
      %p460 = scmp.eq.s32.totalorder %s48, 0
      %p461 = por %p459, %p460
      %p462 = scmp.ne.s32.totalorder %s454, %s456
      %p463 = scmp.eq.s32.totalorder %s53, 3
      %p464 = por %p462, %p463
      %p465 = scmp.ne.s32.totalorder %s456, %s457
      %p466 = scmp.eq.s32.totalorder %s53, 0
      %p467 = por %p465, %p466
      %p468 = scmp.ne.s32.totalorder %s456, %s457
      %p469 = scmp.eq.s32.totalorder %s54, 3
      %p470 = por %p468, %p469
      %p472 = scmp.ne.s32.totalorder %s457, %s471
      %p473 = scmp.eq.s32.totalorder %s54, 0
      %p474 = por %p472, %p473
      %s476 = sadd.s32 %s475, 1
      %p479 = scmp.eq.s32.totalorder %s48, 3
      %p480 = scmp.ne.s32.totalorder %s475, %s477
      %p481 = scmp.eq.s32.totalorder %s48, 0
      %p482 = por %p480, %p481
      %p483 = scmp.ne.s32.totalorder %s475, %s477
      %p484 = scmp.eq.s32.totalorder %s53, 3
      %p485 = por %p483, %p484
      %p486 = scmp.ne.s32.totalorder %s477, %s478
      %p487 = scmp.eq.s32.totalorder %s53, 0
      %p488 = por %p486, %p487
      %p489 = scmp.ne.s32.totalorder %s477, %s478
      %p490 = scmp.eq.s32.totalorder %s54, 3
      %p491 = por %p489, %p490
      %p493 = scmp.ne.s32.totalorder %s478, %s492
      %p494 = scmp.eq.s32.totalorder %s54, 0
      %p495 = por %p493, %p494
      %s497 = sadd.s32 %s496, 1
      %p500 = scmp.eq.s32.totalorder %s48, 3
      %p501 = scmp.ne.s32.totalorder %s496, %s498
      %p502 = scmp.eq.s32.totalorder %s48, 0
      %p503 = por %p501, %p502
      %p504 = scmp.ne.s32.totalorder %s496, %s498
      %p505 = scmp.eq.s32.totalorder %s53, 3
      %p506 = por %p504, %p505
      %p507 = scmp.ne.s32.totalorder %s498, %s499
      %p508 = scmp.eq.s32.totalorder %s53, 0
      %p509 = por %p507, %p508
      %p510 = scmp.ne.s32.totalorder %s498, %s499
      %p511 = scmp.eq.s32.totalorder %s54, 3
      %p512 = por %p510, %p511
      %p514 = scmp.ne.s32.totalorder %s499, %s513
      %p515 = scmp.eq.s32.totalorder %s54, 0
      %p516 = por %p514, %p515
      %s518 = sadd.s32 %s517, 1
      %p521 = scmp.eq.s32.totalorder %s48, 3
      %p522 = scmp.ne.s32.totalorder %s517, %s519
      %p523 = scmp.eq.s32.totalorder %s48, 0
      %p524 = por %p522, %p523
      %p525 = scmp.ne.s32.totalorder %s517, %s519
      %p526 = scmp.eq.s32.totalorder %s53, 3
      %p527 = por %p525, %p526
      %p528 = scmp.ne.s32.totalorder %s519, %s520
      %p529 = scmp.eq.s32.totalorder %s53, 0
      %p530 = por %p528, %p529
      %p531 = scmp.ne.s32.totalorder %s519, %s520
      %p532 = scmp.eq.s32.totalorder %s54, 3
      %p533 = por %p531, %p532
      %p535 = scmp.ne.s32.totalorder %s520, %s534
      %p536 = scmp.eq.s32.totalorder %s54, 0
      %p537 = por %p535, %p536
      %s539 = sadd.s32 %s538, 1
      %p542 = scmp.eq.s32.totalorder %s48, 3
      %p543 = scmp.ne.s32.totalorder %s538, %s540
      %p544 = scmp.eq.s32.totalorder %s48, 0
      %p545 = por %p543, %p544
      %p546 = scmp.ne.s32.totalorder %s538, %s540
      %p547 = scmp.eq.s32.totalorder %s53, 3
      %p548 = por %p546, %p547
      %p549 = scmp.ne.s32.totalorder %s540, %s541
      %p550 = scmp.eq.s32.totalorder %s53, 0
      %p551 = por %p549, %p550
      %p552 = scmp.ne.s32.totalorder %s540, %s541
      %p553 = scmp.eq.s32.totalorder %s54, 3
      %p554 = por %p552, %p553
      %p556 = scmp.ne.s32.totalorder %s541, %s555
      %p557 = scmp.eq.s32.totalorder %s54, 0
      %p558 = por %p556, %p557
      %s560 = sadd.s32 %s559, 1
      %p563 = scmp.eq.s32.totalorder %s48, 3
      %p564 = scmp.ne.s32.totalorder %s559, %s561
      %p565 = scmp.eq.s32.totalorder %s48, 0
      %p566 = por %p564, %p565
      %p567 = scmp.ne.s32.totalorder %s559, %s561
      %p568 = scmp.eq.s32.totalorder %s53, 3
      %p569 = por %p567, %p568
      %p570 = scmp.ne.s32.totalorder %s561, %s562
      %p571 = scmp.eq.s32.totalorder %s53, 0
      %p572 = por %p570, %p571
      %p573 = scmp.ne.s32.totalorder %s561, %s562
      %p574 = scmp.eq.s32.totalorder %s54, 3
      %p575 = por %p573, %p574
      %p577 = scmp.ne.s32.totalorder %s562, %s576
      %p578 = scmp.eq.s32.totalorder %s54, 0
      %p579 = por %p577, %p578
      %s581 = sadd.s32 %s580, 1
      %p584 = scmp.eq.s32.totalorder %s48, 3
      %p585 = scmp.ne.s32.totalorder %s580, %s582
      %p586 = scmp.eq.s32.totalorder %s48, 0
      %p587 = por %p585, %p586
      %p588 = scmp.ne.s32.totalorder %s580, %s582
      %p589 = scmp.eq.s32.totalorder %s53, 3
      %p590 = por %p588, %p589
      %p591 = scmp.ne.s32.totalorder %s582, %s583
      %p592 = scmp.eq.s32.totalorder %s53, 0
      %p593 = por %p591, %p592
      %p594 = scmp.ne.s32.totalorder %s582, %s583
      %p595 = scmp.eq.s32.totalorder %s54, 3
      %p596 = por %p594, %p595
      %p598 = scmp.ne.s32.totalorder %s583, %s597
      %p599 = scmp.eq.s32.totalorder %s54, 0
      %p600 = por %p598, %p599
      %s602 = sadd.s32 %s601, 1
      %p605 = scmp.eq.s32.totalorder %s48, 3
      %p606 = scmp.ne.s32.totalorder %s601, %s603
      %p607 = scmp.eq.s32.totalorder %s48, 0
      %p608 = por %p606, %p607
      %p609 = scmp.ne.s32.totalorder %s601, %s603
      %p610 = scmp.eq.s32.totalorder %s53, 3
      %p611 = por %p609, %p610
      %p612 = scmp.ne.s32.totalorder %s603, %s604
      %p613 = scmp.eq.s32.totalorder %s53, 0
      %p614 = por %p612, %p613
      %p615 = scmp.ne.s32.totalorder %s603, %s604
      %p616 = scmp.eq.s32.totalorder %s54, 3
      %p617 = por %p615, %p616
      %p619 = scmp.ne.s32.totalorder %s604, %s618
      %p620 = scmp.eq.s32.totalorder %s54, 0
      %p621 = por %p619, %p620
      %s623 = sadd.s32 %s622, 1
      %p626 = scmp.eq.s32.totalorder %s48, 3
      %p627 = scmp.ne.s32.totalorder %s622, %s624
      %p628 = scmp.eq.s32.totalorder %s48, 0
      %p629 = por %p627, %p628
      %p630 = scmp.ne.s32.totalorder %s622, %s624
      %p631 = scmp.eq.s32.totalorder %s53, 3
      %p632 = por %p630, %p631
      %p633 = scmp.ne.s32.totalorder %s624, %s625
      %p634 = scmp.eq.s32.totalorder %s53, 0
      %p635 = por %p633, %p634
      %p636 = scmp.ne.s32.totalorder %s624, %s625
      %p637 = scmp.eq.s32.totalorder %s54, 3
      %p638 = por %p636, %p637
      %p640 = scmp.ne.s32.totalorder %s625, %s639
      %p641 = scmp.eq.s32.totalorder %s54, 0
      %p642 = por %p640, %p641
      %s644 = sadd.s32 %s643, 1
      %p647 = scmp.eq.s32.totalorder %s48, 3
      %p648 = scmp.ne.s32.totalorder %s643, %s645
      %p649 = scmp.eq.s32.totalorder %s48, 0
      %p650 = por %p648, %p649
      %p651 = scmp.ne.s32.totalorder %s643, %s645
      %p652 = scmp.eq.s32.totalorder %s53, 3
      %p653 = por %p651, %p652
      %p654 = scmp.ne.s32.totalorder %s645, %s646
      %p655 = scmp.eq.s32.totalorder %s53, 0
      %p656 = por %p654, %p655
      %p657 = scmp.ne.s32.totalorder %s645, %s646
      %p658 = scmp.eq.s32.totalorder %s54, 3
      %p659 = por %p657, %p658
      %p661 = scmp.ne.s32.totalorder %s646, %s660
      %p662 = scmp.eq.s32.totalorder %s54, 0
      %p663 = por %p661, %p662
      %s664 = ssub.s32 %s55, %s67
      %s665 = ssub.s32 %s56, %s63
      %s666 = sor.u32 %s664, %s665
      %p667 = scmp.eq.s32.totalorder %s666, 0
      %s669 = sadd.s32 %s668, 1
      %s670 = scalar_select %p667, %s668, %s669
      %p673 = pneg %p667
      %p674 = scmp.eq.s32.totalorder %s48, 3
      %p675 = por %p673, %p674
      %p676 = scmp.ne.s32.totalorder %s668, %s671
      %p677 = scmp.eq.s32.totalorder %s48, 0
      %p678 = por %p676, %p677
      %p679 = scmp.ne.s32.totalorder %s668, %s671
      %p680 = scmp.eq.s32.totalorder %s53, 3
      %p681 = por %p679, %p680
      %p682 = scmp.ne.s32.totalorder %s671, %s672
      %p683 = scmp.eq.s32.totalorder %s53, 0
      %p684 = por %p682, %p683
      %p685 = scmp.ne.s32.totalorder %s671, %s672
      %p686 = scmp.eq.s32.totalorder %s54, 3
      %p687 = por %p685, %p686
      %p689 = scmp.ne.s32.totalorder %s672, %s688
      %p690 = scmp.eq.s32.totalorder %s54, 0
      %p691 = por %p689, %p690
      %p692 = scmp.le.s32.totalorder 1, %s48
      %p693 = scmp.lt.s32.totalorder %s48, 5
      %p694 = pnand %p692, %p693
      %p695 = pneg %p694
      // Predicated region
      $region9: #{tpu_custom_call.1} parent=5 // pred_check
        _
      $region10: #{tpu_custom_call.1} parent=5 // pred_check_branch
        %697 = sbr.rel (%p694) target = $region12
      $region11: #{tpu_custom_call.1} parent=5 // pred_region
        %s698 = ssub.s32 %s48, 1
        // Predicated region
        $region13: #{tpu_custom_call.1} parent=11 // pred_check
          %p699 = pneg %p215
        $region14: #{tpu_custom_call.1} parent=11 // pred_check_branch
          %701 = sbr.rel (%p699) target = $region16
        $region15: #{tpu_custom_call.1} parent=11 // pred_region
          %s703 = ssub.s32 512, 512
          %704 = vsyncadd [#allocation6], %s703
          %s705 = sshll.u32 [#allocation7], 4
          %s706 = int_to_ptr.vmem [resolvable:$true] %s705
          %711 = dma.hbm_to_vmem [thread:$0]  %s5, 512, %s706, [#allocation6], 128, 128, 8
        $region16: #{tpu_custom_call.1} parent=11 // pred_fallthru
          _
        // Predicated region
        $region17: #{tpu_custom_call.1} parent=11 // pred_check
          %p712 = pneg %p236
        $region18: #{tpu_custom_call.1} parent=11 // pred_check_branch
          %714 = sbr.rel (%p712) target = $region20
        $region19: #{tpu_custom_call.1} parent=11 // pred_region
          %s716 = ssub.s32 16, 16
          %717 = vsyncadd [#allocation9], %s716
          %s719 = sshll.u32 [#allocation8], 4
          %s720 = int_to_ptr.vmem [resolvable:$true] %s719
          %722 = dma.hbm_to_vmem [thread:$0]  %s6, 16, %s720, [#allocation9]
        $region20: #{tpu_custom_call.1} parent=11 // pred_fallthru
          _
        // Predicated region
        $region21: #{tpu_custom_call.1} parent=11 // pred_check
          %p723 = pneg %p257
        $region22: #{tpu_custom_call.1} parent=11 // pred_check_branch
          %725 = sbr.rel (%p723) target = $region24
        $region23: #{tpu_custom_call.1} parent=11 // pred_region
          %s727 = ssub.s32 512, 512
          %728 = vsyncadd [#allocation9], %s727
          %s729 = sshll.u32 [#allocation10], 4
          %s730 = int_to_ptr.vmem [resolvable:$true] %s729
          %735 = dma.hbm_to_vmem [thread:$0]  %s7, 512, %s730, [#allocation9], 128, 128, 8
        $region24: #{tpu_custom_call.1} parent=11 // pred_fallthru
          _
        // Predicated region
        $region25: #{tpu_custom_call.1} parent=11 // pred_check
          %p736 = pneg %p278
        $region26: #{tpu_custom_call.1} parent=11 // pred_check_branch
          %738 = sbr.rel (%p736) target = $region28
        $region27: #{tpu_custom_call.1} parent=11 // pred_region
          %s740 = ssub.s32 16, 16
          %741 = vsyncadd [#allocation12], %s740
          %s743 = sshll.u32 [#allocation11], 4
          %s744 = int_to_ptr.vmem [resolvable:$true] %s743
          %746 = dma.hbm_to_vmem [thread:$0]  %s8, 16, %s744, [#allocation12]
        $region28: #{tpu_custom_call.1} parent=11 // pred_fallthru
          _
        // Predicated region
        $region29: #{tpu_custom_call.1} parent=11 // pred_check
          %p747 = pneg %p299
        $region30: #{tpu_custom_call.1} parent=11 // pred_check_branch
          %749 = sbr.rel (%p747) target = $region32
        $region31: #{tpu_custom_call.1} parent=11 // pred_region
          _
        $region32: #{tpu_custom_call.1} parent=11 // pred_fallthru
          _
        // Predicated region
        $region33: #{tpu_custom_call.1} parent=11 // pred_check
          %p750 = pneg %p320
        $region34: #{tpu_custom_call.1} parent=11 // pred_check_branch
          %752 = sbr.rel (%p750) target = $region36
        $region35: #{tpu_custom_call.1} parent=11 // pred_region
          %s754 = ssub.s32 16, 16
          %755 = vsyncadd [#allocation12], %s754
          %s757 = sshll.u32 [#allocation13], 4
          %s758 = int_to_ptr.vmem [resolvable:$true] %s757
          %760 = dma.hbm_to_vmem [thread:$0]  %s10, 16, %s758, [#allocation12]
        $region36: #{tpu_custom_call.1} parent=11 // pred_fallthru
          _
        // Predicated region
        $region37: #{tpu_custom_call.1} parent=11 // pred_check
          %p761 = pneg %p341
        $region38: #{tpu_custom_call.1} parent=11 // pred_check_branch
          %763 = sbr.rel (%p761) target = $region40
        $region39: #{tpu_custom_call.1} parent=11 // pred_region
          %s765 = ssub.s32 512, 512
          %766 = vsyncadd [#allocation15], %s765
          %s767 = sshll.u32 [#allocation14], 4
          %s768 = int_to_ptr.vmem [resolvable:$true] %s767
          %773 = dma.hbm_to_vmem [thread:$0]  %s11, 512, %s768, [#allocation15], 128, 128, 8
        $region40: #{tpu_custom_call.1} parent=11 // pred_fallthru
          _
        // Predicated region
        $region41: #{tpu_custom_call.1} parent=11 // pred_check
          %p774 = pneg %p362
        $region42: #{tpu_custom_call.1} parent=11 // pred_check_branch
          %776 = sbr.rel (%p774) target = $region44
        $region43: #{tpu_custom_call.1} parent=11 // pred_region
          %s778 = ssub.s32 16, 16
          %779 = vsyncadd [#allocation15], %s778
          %s781 = sshll.u32 [#allocation16], 4
          %s782 = int_to_ptr.vmem [resolvable:$true] %s781
          %784 = dma.hbm_to_vmem [thread:$0]  %s12, 16, %s782, [#allocation15]
        $region44: #{tpu_custom_call.1} parent=11 // pred_fallthru
          _
        // Predicated region
        $region45: #{tpu_custom_call.1} parent=11 // pred_check
          %p785 = pneg %p383
        $region46: #{tpu_custom_call.1} parent=11 // pred_check_branch
          %787 = sbr.rel (%p785) target = $region48
        $region47: #{tpu_custom_call.1} parent=11 // pred_region
          %s789 = ssub.s32 512, 512
          %790 = vsyncadd [#allocation18], %s789
          %s791 = sshll.u32 [#allocation17], 4
          %s792 = int_to_ptr.vmem [resolvable:$true] %s791
          %797 = dma.hbm_to_vmem [thread:$0]  %s13, 512, %s792, [#allocation18], 128, 128, 8
        $region48: #{tpu_custom_call.1} parent=11 // pred_fallthru
          _
        // Predicated region
        $region49: #{tpu_custom_call.1} parent=11 // pred_check
          %p798 = pneg %p404
        $region50: #{tpu_custom_call.1} parent=11 // pred_check_branch
          %800 = sbr.rel (%p798) target = $region52
        $region51: #{tpu_custom_call.1} parent=11 // pred_region
          %s802 = ssub.s32 16, 16
          %803 = vsyncadd [#allocation18], %s802
          %s805 = sshll.u32 [#allocation19], 4
          %s806 = int_to_ptr.vmem [resolvable:$true] %s805
          %808 = dma.hbm_to_vmem [thread:$0]  %s14, 16, %s806, [#allocation18]
        $region52: #{tpu_custom_call.1} parent=11 // pred_fallthru
          _
        // Predicated region
        $region53: #{tpu_custom_call.1} parent=11 // pred_check
          %p809 = pneg %p425
        $region54: #{tpu_custom_call.1} parent=11 // pred_check_branch
          %811 = sbr.rel (%p809) target = $region56
        $region55: #{tpu_custom_call.1} parent=11 // pred_region
          %s813 = ssub.s32 512, 512
          %814 = vsyncadd [#allocation21], %s813
          %s815 = sshll.u32 [#allocation20], 4
          %s816 = int_to_ptr.vmem [resolvable:$true] %s815
          %821 = dma.hbm_to_vmem [thread:$0]  %s15, 512, %s816, [#allocation21], 128, 128, 8
        $region56: #{tpu_custom_call.1} parent=11 // pred_fallthru
          _
        // Predicated region
        $region57: #{tpu_custom_call.1} parent=11 // pred_check
          %p822 = pneg %p446
        $region58: #{tpu_custom_call.1} parent=11 // pred_check_branch
          %824 = sbr.rel (%p822) target = $region60
        $region59: #{tpu_custom_call.1} parent=11 // pred_region
          %s826 = ssub.s32 16, 16
          %827 = vsyncadd [#allocation21], %s826
          %s829 = sshll.u32 [#allocation22], 4
          %s830 = int_to_ptr.vmem [resolvable:$true] %s829
          %832 = dma.hbm_to_vmem [thread:$0]  %s16, 16, %s830, [#allocation21]
        $region60: #{tpu_custom_call.1} parent=11 // pred_fallthru
          _
        // Predicated region
        $region61: #{tpu_custom_call.1} parent=11 // pred_check
          %p833 = pneg %p467
        $region62: #{tpu_custom_call.1} parent=11 // pred_check_branch
          %835 = sbr.rel (%p833) target = $region64
        $region63: #{tpu_custom_call.1} parent=11 // pred_region
          %s837 = ssub.s32 16, 16
          %838 = vsyncadd [#allocation24], %s837
          %s840 = sshll.u32 [#allocation23], 4
          %s841 = int_to_ptr.vmem [resolvable:$true] %s840
          %843 = dma.hbm_to_vmem [thread:$0]  %s17, 16, %s841, [#allocation24]
        $region64: #{tpu_custom_call.1} parent=11 // pred_fallthru
          _
        // Predicated region
        $region65: #{tpu_custom_call.1} parent=11 // pred_check
          %p844 = pneg %p488
        $region66: #{tpu_custom_call.1} parent=11 // pred_check_branch
          %846 = sbr.rel (%p844) target = $region68
        $region67: #{tpu_custom_call.1} parent=11 // pred_region
          _
        $region68: #{tpu_custom_call.1} parent=11 // pred_fallthru
          _
        // Predicated region
        $region69: #{tpu_custom_call.1} parent=11 // pred_check
          %p847 = pneg %p509
        $region70: #{tpu_custom_call.1} parent=11 // pred_check_branch
          %849 = sbr.rel (%p847) target = $region72
        $region71: #{tpu_custom_call.1} parent=11 // pred_region
          _
        $region72: #{tpu_custom_call.1} parent=11 // pred_fallthru
          _
        // Predicated region
        $region73: #{tpu_custom_call.1} parent=11 // pred_check
          %p850 = pneg %p530
        $region74: #{tpu_custom_call.1} parent=11 // pred_check_branch
          %852 = sbr.rel (%p850) target = $region76
        $region75: #{tpu_custom_call.1} parent=11 // pred_region
          _
        $region76: #{tpu_custom_call.1} parent=11 // pred_fallthru
          _
        // Predicated region
        $region77: #{tpu_custom_call.1} parent=11 // pred_check
          %p853 = pneg %p551
        $region78: #{tpu_custom_call.1} parent=11 // pred_check_branch
          %855 = sbr.rel (%p853) target = $region80
        $region79: #{tpu_custom_call.1} parent=11 // pred_region
          _
        $region80: #{tpu_custom_call.1} parent=11 // pred_fallthru
          _
        // Predicated region
        $region81: #{tpu_custom_call.1} parent=11 // pred_check
          %p856 = pneg %p572
        $region82: #{tpu_custom_call.1} parent=11 // pred_check_branch
          %858 = sbr.rel (%p856) target = $region84
        $region83: #{tpu_custom_call.1} parent=11 // pred_region
          _
        $region84: #{tpu_custom_call.1} parent=11 // pred_fallthru
          _
        // Predicated region
        $region85: #{tpu_custom_call.1} parent=11 // pred_check
          %p859 = pneg %p593
        $region86: #{tpu_custom_call.1} parent=11 // pred_check_branch
          %861 = sbr.rel (%p859) target = $region88
        $region87: #{tpu_custom_call.1} parent=11 // pred_region
          _
        $region88: #{tpu_custom_call.1} parent=11 // pred_fallthru
          _
        // Predicated region
        $region89: #{tpu_custom_call.1} parent=11 // pred_check
          %p862 = pneg %p614
        $region90: #{tpu_custom_call.1} parent=11 // pred_check_branch
          %864 = sbr.rel (%p862) target = $region92
        $region91: #{tpu_custom_call.1} parent=11 // pred_region
          _
        $region92: #{tpu_custom_call.1} parent=11 // pred_fallthru
          _
        // Predicated region
        $region93: #{tpu_custom_call.1} parent=11 // pred_check
          %p865 = pneg %p635
        $region94: #{tpu_custom_call.1} parent=11 // pred_check_branch
          %867 = sbr.rel (%p865) target = $region96
        $region95: #{tpu_custom_call.1} parent=11 // pred_region
          _
        $region96: #{tpu_custom_call.1} parent=11 // pred_fallthru
          _
        // Predicated region
        $region97: #{tpu_custom_call.1} parent=11 // pred_check
          %p868 = pneg %p656
        $region98: #{tpu_custom_call.1} parent=11 // pred_check_branch
          %870 = sbr.rel (%p868) target = $region100
        $region99: #{tpu_custom_call.1} parent=11 // pred_region
          _
        $region100: #{tpu_custom_call.1} parent=11 // pred_fallthru
          _
      $region12: #{tpu_custom_call.1} parent=5 // pred_fallthru
        _
      %p871 = scmp.lt.s32.totalorder %s48, 4
      // Predicated region
      $region101: #{tpu_custom_call.1} parent=5 // pred_check
        %p872 = pneg %p871
      $region102: #{tpu_custom_call.1} parent=5 // pred_check_branch
        %874 = sbr.rel (%p872) target = $region104
      $region103: #{tpu_custom_call.1} parent=5 // pred_region
        // Predicated region
        $region105: #{tpu_custom_call.1} parent=103 // pred_check
          %p875 = pneg %p82
        $region106: #{tpu_custom_call.1} parent=103 // pred_check_branch
          %877 = sbr.rel (%p875) target = $region108
        $region107: #{tpu_custom_call.1} parent=103 // pred_region
          %p878 = scmp.lt.s32.totalorder %s55, 1
          %s879 = scalar_select %p878, %s55, 1
          %p880 = scmp.lt.s32.totalorder %s56, 1
          %s881 = scalar_select %p880, %s56, 1
          %s882 = smul.addr %s879, 2
          %s883 = sadd.s32 %s881, %s882
          %s884 = smul.addr %s883, 8
          %s885 = scalar_lea.vmem %s0, %s884
        $region108: #{tpu_custom_call.1} parent=103 // pred_fallthru
          _
        // Predicated region
        $region109: #{tpu_custom_call.1} parent=103 // pred_check
          %p886 = pneg %p108
        $region110: #{tpu_custom_call.1} parent=103 // pred_check_branch
          %888 = sbr.rel (%p886) target = $region112
        $region111: #{tpu_custom_call.1} parent=103 // pred_region
          %p889 = scmp.lt.s32.totalorder %s55, 1
          %s890 = scalar_select %p889, %s55, 1
          %s891 = smul.addr %s890, 2
          %s892 = smul.addr %s891, 8
          %s893 = scalar_lea.vmem %s1, %s892
        $region112: #{tpu_custom_call.1} parent=103 // pred_fallthru
          _
        // Predicated region
        $region113: #{tpu_custom_call.1} parent=103 // pred_check
          %p894 = pneg %p134
        $region114: #{tpu_custom_call.1} parent=103 // pred_check_branch
          %896 = sbr.rel (%p894) target = $region116
        $region115: #{tpu_custom_call.1} parent=103 // pred_region
          %s897 = sand.u32 %s124, 1
          %s898 = scalar_lea.sflag [#allocation3], %s897
          %s899 = sand.u32 %s124, 1
          %s900 = smul.addr %s899, 8
          %s901 = scalar_lea.vmem [#allocation2], %s900
          %s903 = ssub.s32 128, 128
          %904 = vsyncadd %s898, %s903
          %s905 = smul.addr %s55, 128
          %s906 = scalar_lea.hbm %s2, %s905
          %s908 = sshll.u32 %s901, 4
          %s909 = int_to_ptr.vmem [resolvable:$true] %s908
          %911 = dma.hbm_to_vmem [thread:$0]  %s906, 128, %s909, %s898
        $region116: #{tpu_custom_call.1} parent=103 // pred_fallthru
          _
        // Predicated region
        $region117: #{tpu_custom_call.1} parent=103 // pred_check
          %p912 = pneg %p160
        $region118: #{tpu_custom_call.1} parent=103 // pred_check_branch
          %914 = sbr.rel (%p912) target = $region120
        $region119: #{tpu_custom_call.1} parent=103 // pred_region
          %s915 = sand.u32 %s48, 1
          %s916 = scalar_lea.sflag [#allocation6], %s915
          %s917 = sand.u32 %s150, 1
          %s918 = scalar_lea.vmem [#allocation5], %s917
          %s920 = ssub.s32 16, 16
          %921 = vsyncadd %s916, %s920
          %s922 = smul.addr %s55, 16
          %s923 = scalar_lea.hbm %s3, %s922
          %s925 = sshll.u32 %s918, 4
          %s926 = int_to_ptr.vmem [resolvable:$true] %s925
          %928 = dma.hbm_to_vmem [thread:$0]  %s923, 16, %s926, %s916
        $region120: #{tpu_custom_call.1} parent=103 // pred_fallthru
          _
        // Predicated region
        $region121: #{tpu_custom_call.1} parent=103 // pred_check
          %p929 = pneg %p188
        $region122: #{tpu_custom_call.1} parent=103 // pred_check_branch
          %931 = sbr.rel (%p929) target = $region124
        $region123: #{tpu_custom_call.1} parent=103 // pred_region
          %p932 = scmp.lt.s32.totalorder %s55, 1
          %s933 = scalar_select %p932, %s55, 1
          %p934 = scmp.lt.s32.totalorder %s56, 1
          %s935 = scalar_select %p934, %s56, 1
          %s936 = smul.addr %s933, 2
          %s937 = sadd.s32 %s935, %s936
          %s938 = smul.addr %s937, 8
          %s939 = scalar_lea.vmem %s4, %s938
        $region124: #{tpu_custom_call.1} parent=103 // pred_fallthru
          _
      $region104: #{tpu_custom_call.1} parent=5 // pred_fallthru
        _
      %p940 = scmp.le.s32.totalorder 1, %s48
      %p941 = scmp.lt.s32.totalorder %s48, 5
      %p942 = pnand %p940, %p941
      %p943 = pneg %p942
      // Predicated region
      $region125: #{tpu_custom_call.1} parent=5 // pred_check
        _
      $region126: #{tpu_custom_call.1} parent=5 // pred_check_branch
        %945 = sbr.rel (%p942) target = $region128
      $region127: #{tpu_custom_call.1} parent=5 // pred_region
        %s946 = ssub.s32 %s48, 1
        %s947 = sand.u32 %s127, 1
        %s948 = scalar_lea.sflag [#allocation3], %s947
        %s949 = sand.u32 %s127, 1
        %s950 = smul.addr %s949, 8
        %s951 = scalar_lea.vmem [#allocation2], %s950
        // Predicated region
        $region129: #{tpu_custom_call.1} parent=127 // pred_check
          %p952 = pneg %p140
        $region130: #{tpu_custom_call.1} parent=127 // pred_check_branch
          %954 = sbr.rel (%p952) target = $region132
        $region131: #{tpu_custom_call.1} parent=127 // pred_region
          %955 = dma.done %s948, 128
        $region132: #{tpu_custom_call.1} parent=127 // pred_fallthru
          _
        %s956 = sand.u32 %s53, 1
        %s957 = scalar_lea.sflag [#allocation6], %s956
        %s958 = sand.u32 %s153, 1
        %s959 = scalar_lea.vmem [#allocation5], %s958
        // Predicated region
        $region133: #{tpu_custom_call.1} parent=127 // pred_check
          %p960 = pneg %p166
        $region134: #{tpu_custom_call.1} parent=127 // pred_check_branch
          %962 = sbr.rel (%p960) target = $region136
        $region135: #{tpu_custom_call.1} parent=127 // pred_region
          %963 = dma.done %s957, 16
        $region136: #{tpu_custom_call.1} parent=127 // pred_fallthru
          _
        // Predicated region
        $region137: #{tpu_custom_call.1} parent=127 // pred_check
          %p964 = pneg %p215
        $region138: #{tpu_custom_call.1} parent=127 // pred_check_branch
          %966 = sbr.rel (%p964) target = $region140
        $region139: #{tpu_custom_call.1} parent=127 // pred_region
          %967 = dma.done [#allocation6], 512
        $region140: #{tpu_custom_call.1} parent=127 // pred_fallthru
          _
        // Predicated region
        $region141: #{tpu_custom_call.1} parent=127 // pred_check
          %p968 = pneg %p236
        $region142: #{tpu_custom_call.1} parent=127 // pred_check_branch
          %970 = sbr.rel (%p968) target = $region144
        $region143: #{tpu_custom_call.1} parent=127 // pred_region
          %971 = dma.done [#allocation9], 16
        $region144: #{tpu_custom_call.1} parent=127 // pred_fallthru
          _
        // Predicated region
        $region145: #{tpu_custom_call.1} parent=127 // pred_check
          %p972 = pneg %p257
        $region146: #{tpu_custom_call.1} parent=127 // pred_check_branch
          %974 = sbr.rel (%p972) target = $region148
        $region147: #{tpu_custom_call.1} parent=127 // pred_region
          %975 = dma.done [#allocation9], 512
        $region148: #{tpu_custom_call.1} parent=127 // pred_fallthru
          _
        // Predicated region
        $region149: #{tpu_custom_call.1} parent=127 // pred_check
          %p976 = pneg %p278
        $region150: #{tpu_custom_call.1} parent=127 // pred_check_branch
          %978 = sbr.rel (%p976) target = $region152
        $region151: #{tpu_custom_call.1} parent=127 // pred_region
          %979 = dma.done [#allocation12], 16
        $region152: #{tpu_custom_call.1} parent=127 // pred_fallthru
          _
        // Predicated region
        $region153: #{tpu_custom_call.1} parent=127 // pred_check
          %p980 = pneg %p320
        $region154: #{tpu_custom_call.1} parent=127 // pred_check_branch
          %982 = sbr.rel (%p980) target = $region156
        $region155: #{tpu_custom_call.1} parent=127 // pred_region
          %983 = dma.done [#allocation12], 16
        $region156: #{tpu_custom_call.1} parent=127 // pred_fallthru
          _
        // Predicated region
        $region157: #{tpu_custom_call.1} parent=127 // pred_check
          %p984 = pneg %p341
        $region158: #{tpu_custom_call.1} parent=127 // pred_check_branch
          %986 = sbr.rel (%p984) target = $region160
        $region159: #{tpu_custom_call.1} parent=127 // pred_region
          %987 = dma.done [#allocation15], 512
        $region160: #{tpu_custom_call.1} parent=127 // pred_fallthru
          _
        // Predicated region
        $region161: #{tpu_custom_call.1} parent=127 // pred_check
          %p988 = pneg %p362
        $region162: #{tpu_custom_call.1} parent=127 // pred_check_branch
          %990 = sbr.rel (%p988) target = $region164
        $region163: #{tpu_custom_call.1} parent=127 // pred_region
          %991 = dma.done [#allocation15], 16
        $region164: #{tpu_custom_call.1} parent=127 // pred_fallthru
          _
        // Predicated region
        $region165: #{tpu_custom_call.1} parent=127 // pred_check
          %p992 = pneg %p383
        $region166: #{tpu_custom_call.1} parent=127 // pred_check_branch
          %994 = sbr.rel (%p992) target = $region168
        $region167: #{tpu_custom_call.1} parent=127 // pred_region
          %995 = dma.done [#allocation18], 512
        $region168: #{tpu_custom_call.1} parent=127 // pred_fallthru
          _
        // Predicated region
        $region169: #{tpu_custom_call.1} parent=127 // pred_check
          %p996 = pneg %p404
        $region170: #{tpu_custom_call.1} parent=127 // pred_check_branch
          %998 = sbr.rel (%p996) target = $region172
        $region171: #{tpu_custom_call.1} parent=127 // pred_region
          %999 = dma.done [#allocation18], 16
        $region172: #{tpu_custom_call.1} parent=127 // pred_fallthru
          _
        // Predicated region
        $region173: #{tpu_custom_call.1} parent=127 // pred_check
          %p1000 = pneg %p425
        $region174: #{tpu_custom_call.1} parent=127 // pred_check_branch
          %1002 = sbr.rel (%p1000) target = $region176
        $region175: #{tpu_custom_call.1} parent=127 // pred_region
          %1003 = dma.done [#allocation21], 512
        $region176: #{tpu_custom_call.1} parent=127 // pred_fallthru
          _
        // Predicated region
        $region177: #{tpu_custom_call.1} parent=127 // pred_check
          %p1004 = pneg %p446
        $region178: #{tpu_custom_call.1} parent=127 // pred_check_branch
          %1006 = sbr.rel (%p1004) target = $region180
        $region179: #{tpu_custom_call.1} parent=127 // pred_region
          %1007 = dma.done [#allocation21], 16
        $region180: #{tpu_custom_call.1} parent=127 // pred_fallthru
          _
        // Predicated region
        $region181: #{tpu_custom_call.1} parent=127 // pred_check
          %p1008 = pneg %p467
        $region182: #{tpu_custom_call.1} parent=127 // pred_check_branch
          %1010 = sbr.rel (%p1008) target = $region184
        $region183: #{tpu_custom_call.1} parent=127 // pred_region
          %1011 = dma.done [#allocation24], 16
        $region184: #{tpu_custom_call.1} parent=127 // pred_fallthru
          _
        %p1012 = scmp.lt.s32.totalorder %s57, 1
        %s1013 = scalar_select %p1012, %s57, 1
        %p1014 = scmp.lt.s32.totalorder %s58, 1
        %s1015 = scalar_select %p1014, %s58, 1
        %s1016 = smul.addr %s1013, 2
        %s1017 = sadd.s32 %s1015, %s1016
        %s1018 = smul.addr %s1017, 8
        %s1019 = scalar_lea.vmem %s0, %s1018
        %p1020 = pneg %p88
        %p1021 = pneg %p85
        %p1022 = scmp.lt.s32.totalorder %s57, 1
        %s1023 = scalar_select %p1022, %s57, 1
        %s1024 = smul.addr %s1023, 2
        %s1025 = smul.addr %s1024, 8
        %s1026 = scalar_lea.vmem %s1, %s1025
        %p1027 = pneg %p114
        %p1028 = pneg %p111
        %s1029 = sand.u32 %s127, 1
        %s1030 = scalar_lea.sflag [#allocation3], %s1029
        %s1031 = sand.u32 %s127, 1
        %s1032 = smul.addr %s1031, 8
        %s1033 = scalar_lea.vmem [#allocation2], %s1032
        %p1034 = pneg %p140
        %p1035 = pneg %p137
        %s1036 = sand.u32 %s53, 1
        %s1037 = scalar_lea.sflag [#allocation6], %s1036
        %s1038 = sand.u32 %s153, 1
        %s1039 = scalar_lea.vmem [#allocation5], %s1038
        %p1040 = pneg %p166
        %p1041 = pneg %p163
        %p1042 = scmp.lt.s32.totalorder %s57, 1
        %s1043 = scalar_select %p1042, %s57, 1
        %p1044 = scmp.lt.s32.totalorder %s58, 1
        %s1045 = scalar_select %p1044, %s58, 1
        %s1046 = smul.addr %s1043, 2
        %s1047 = sadd.s32 %s1045, %s1046
        %s1048 = smul.addr %s1047, 8
        %s1049 = scalar_lea.vmem %s4, %s1048
        %p1050 = pneg %p194
        %p1051 = pneg %p191
        %p1052 = pneg %p215
        %p1053 = pneg %p212
        %p1054 = pneg %p236
        %p1055 = pneg %p233
        %p1056 = pneg %p257
        %p1057 = pneg %p254
        %p1058 = pneg %p278
        %p1059 = pneg %p275
        %p1060 = pneg %p299
        %p1061 = pneg %p296
        %p1062 = pneg %p320
        %p1063 = pneg %p317
        %p1064 = pneg %p341
        %p1065 = pneg %p338
        %p1066 = pneg %p362
        %p1067 = pneg %p359
        %p1068 = pneg %p383
        %p1069 = pneg %p380
        %p1070 = pneg %p404
        %p1071 = pneg %p401
        %p1072 = pneg %p425
        %p1073 = pneg %p422
        %p1074 = pneg %p446
        %p1075 = pneg %p443
        %p1076 = pneg %p467
        %p1077 = pneg %p464
        %p1078 = pneg %p488
        %p1079 = pneg %p485
        %p1080 = pneg %p509
        %p1081 = pneg %p506
        %p1082 = pneg %p530
        %p1083 = pneg %p527
        %p1084 = pneg %p551
        %p1085 = pneg %p548
        %p1086 = pneg %p572
        %p1087 = pneg %p569
        %p1088 = pneg %p593
        %p1089 = pneg %p590
        %p1090 = pneg %p614
        %p1091 = pneg %p611
        %p1092 = pneg %p635
        %p1093 = pneg %p632
        %p1094 = pneg %p656
        %p1095 = pneg %p653
        %p1096 = pneg %p684
        %p1097 = pneg %p681
        %s1098 = sand.u32 %s671, 1
        %s1099 = scalar_lea.sflag [#allocation4], %s1098
        %s1100 = sand.u32 %s671, 1
        %s1101 = smul.addr %s1100, 8
        %s1102 = scalar_lea.vmem [#allocation25], %s1101
        %p1103 = scmp.lt.s32.totalorder %s57, 1
        %s1104 = scalar_select %p1103, %s57, 1
        %p1105 = scmp.lt.s32.totalorder %s58, 1
        %s1106 = scalar_select %p1105, %s58, 1
        %s1107 = smul.addr %s1104, 2
        %s1108 = sadd.s32 %s1106, %s1107
        %s1109 = smul.addr %s1108, 8
        %s1110 = scalar_lea.vmem %s0, %s1109
        %p1111 = scmp.lt.s32.totalorder %s57, 1
        %s1112 = scalar_select %p1111, %s57, 1
        %s1113 = smul.addr %s1112, 2
        %s1114 = smul.addr %s1113, 8
        %s1115 = scalar_lea.vmem %s1, %s1114
        %p1116 = scmp.lt.s32.totalorder %s57, 1
        %s1117 = scalar_select %p1116, %s57, 1
        %p1118 = scmp.lt.s32.totalorder %s58, 1
        %s1119 = scalar_select %p1118, %s58, 1
        %s1120 = smul.addr %s1117, 2
        %s1121 = sadd.s32 %s1119, %s1120
        %s1122 = smul.addr %s1121, 8
        %s1123 = scalar_lea.vmem %s4, %s1122
        %v1124 = vld [vmem:[%s1110] sm:$0xff]
        %v1125 = vld [vmem:[%s1115] sm:$0xff]
        %v1126 = vld [vmem:[%s1115 + $0x8] sm:$0xff]
        %v1127 = vld [vmem:[%s951] sm:$0xff]
        %v1128 = vld [vmem:[%s1123] sm:$0xff]
        %vm1129 = vcmp.gt.f32.partialorder %v1128, 0.0
        %v1130 = vld [vmem:[%s959] sm:$0x1]
        %vm1131 = vcmp.gt.f32.partialorder %v1130, 0.0
        %v1132 = vld [vmem:[#allocation7] sm:$0xff]
        %v1133 = vld [vmem:[#allocation7 + $0x8] sm:$0xff]
        %v1134 = vld [vmem:[#allocation7 + $0x10] sm:$0xff]
        %v1135 = vld [vmem:[#allocation7 + $0x18] sm:$0xff]
        %v1136 = vld [vmem:[#allocation8] sm:$0x1]
        %v1137 = vld [vmem:[#allocation10] sm:$0xff]
        %v1138 = vld [vmem:[#allocation10 + $0x8] sm:$0xff]
        %v1139 = vld [vmem:[#allocation10 + $0x10] sm:$0xff]
        %v1140 = vld [vmem:[#allocation10 + $0x18] sm:$0xff]
        %v1141 = vld [vmem:[#allocation11] sm:$0x1]
        %v1142 = vld [vmem:[%s9] sm:$0xff]
        %v1143 = vld [vmem:[%s9 + $0x8] sm:$0xff]
        %v1144 = vld [vmem:[%s9 + $0x10] sm:$0xff]
        %v1145 = vld [vmem:[%s9 + $0x18] sm:$0xff]
        %v1146 = vld [vmem:[#allocation13] sm:$0x1]
        %v1148 = vlaneseq
        %v1149 = vshrl.u32 %v1148, 7
        %v1150 = vsub.s32 0, %v1149
        %v1151 = vrot.slane %v1136, %v1150
        %vm1153 = vcmask 261120
        %v1155 = vsel %vm1153, %v1124, 0
        %1157 = vmatprep.subr.mxu0 0.0
        %1158 = vmatpush1.msra.mxu0 %v1132
        %1159 = vmatprep.subr.mxu0 0.0
        %1160 = vmatpush1.msra.mxu0 %v1133
        %1161 = vmatprep.subr.mxu0 0.0
        %1162 = vmatpush1.msra.mxu0 %v1134
        %1163 = vmatprep.subr.mxu0 0.0
        %1164 = vmatpush1.msra.mxu0 %v1135
        %1165 = vmatprep.subr.mxu0 0.0
        %1166 = vmatpush1.msra.mxu0 0.0
        %1167 = vmatprep.subr.mxu0 0.0
        %1168 = vmatpush1.msra.mxu0 0.0
        %1169 = vmatprep.subr.mxu0 0.0
        %1170 = vmatpush1.msra.mxu0 0.0
        %1171 = vmatprep.subr.mxu0 0.0
        %1172 = vmatpush1.msra.mxu0 0.0
        %1173 = vmatprep.subr.mxu0 0.0
        %1174 = vmatpush1.msra.mxu0 0.0
        %1175 = vmatprep.subr.mxu0 0.0
        %1176 = vmatpush1.msra.mxu0 0.0
        %1177 = vmatprep.subr.mxu0 0.0
        %1178 = vmatpush1.msra.mxu0 0.0
        %1179 = vmatprep.subr.mxu0 0.0
        %1180 = vmatpush1.msra.mxu0 0.0
        %1181 = vmatprep.subr.mxu0 0.0
        %1182 = vmatpush1.msra.mxu0 0.0
        %1183 = vmatprep.subr.mxu0 0.0
        %1184 = vmatpush1.msra.mxu0 0.0
        %1185 = vmatprep.subr.mxu0 0.0
        %1186 = vmatpush1.msra.mxu0 0.0
        %1187 = vmatprep.subr.mxu0 0.0
        %1188 = vmatpush1.msra.mxu0 0.0
        %1189 = vmatprep.subr.mxu0 0.0
        %1190 = vmatpush1.msra.mxu0 0.0
        %1191 = vmatprep.subr.mxu0 0.0
        %1192 = vmatpush1.msra.mxu0 0.0
        %1193 = vmatprep.subr.mxu0 0.0
        %1194 = vmatpush1.msra.mxu0 0.0
        %1195 = vmatprep.subr.mxu0 0.0
        %1196 = vmatpush1.msra.mxu0 0.0
        %1197 = vmatprep.subr.mxu0 0.0
        %1198 = vmatpush1.msra.mxu0 0.0
        %1199 = vmatprep.subr.mxu0 0.0
        %1200 = vmatpush1.msra.mxu0 0.0
        %1201 = vmatprep.subr.mxu0 0.0
        %1202 = vmatpush1.msra.mxu0 0.0
        %1203 = vmatprep.subr.mxu0 0.0
        %1204 = vmatpush1.msra.mxu0 0.0
        %1205 = vmatprep.subr.mxu0 0.0
        %1206 = vmatpush1.msra.mxu0 0.0
        %1207 = vmatprep.subr.mxu0 0.0
        %1208 = vmatpush1.msra.mxu0 0.0
        %1209 = vmatprep.subr.mxu0 0.0
        %1210 = vmatpush1.msra.mxu0 0.0
        %1211 = vmatprep.subr.mxu0 0.0
        %1212 = vmatpush1.msra.mxu0 0.0
        %1213 = vmatprep.subr.mxu0 0.0
        %1214 = vmatpush1.msra.mxu0 0.0
        %1215 = vmatprep.subr.mxu0 0.0
        %1216 = vmatpush1.msra.mxu0 0.0
        %1217 = vmatprep.subr.mxu0 0.0
        %1218 = vmatpush1.msra.mxu0 0.0
        %1219 = vmatprep.subr.mxu0 0.0
        %1220 = vmatpush1.msra.mxu0 0.0
        %1221 = vmatprep.mubr.f32.mxu0 0.0
        %1222 = vmatmul.mubr.f32.gmra.mrb[0].mxu0 %v1155
        %v1223 = vpop.f32.mrb[0].mxu0
        %v1224 = vadd.f32 %v1151, %v1223
        %v1225 = vpop.f32.mrb[0].mxu0
        %1226 = vdwg.mxu0
        %v1228 = vlaneseq
        %v1229 = vshrl.u32 %v1228, 7
        %v1230 = vsub.s32 0, %v1229
        %v1231 = vrot.slane %v1141, %v1230
        %v1234 = vsel %vm1153, %v1125, 0
        %v1237 = vsel %vm1153, %v1126, 0
        %1239 = vmatprep.subr.mxu0 0.0
        %1240 = vmatpush1.msra.mxu0 %v1137
        %1241 = vmatprep.subr.mxu0 0.0
        %1242 = vmatpush1.msra.mxu0 %v1138
        %1243 = vmatprep.subr.mxu0 0.0
        %1244 = vmatpush1.msra.mxu0 %v1139
        %1245 = vmatprep.subr.mxu0 0.0
        %1246 = vmatpush1.msra.mxu0 %v1140
        %1247 = vmatprep.subr.mxu0 0.0
        %1248 = vmatpush1.msra.mxu0 0.0
        %1249 = vmatprep.subr.mxu0 0.0
        %1250 = vmatpush1.msra.mxu0 0.0
        %1251 = vmatprep.subr.mxu0 0.0
        %1252 = vmatpush1.msra.mxu0 0.0
        %1253 = vmatprep.subr.mxu0 0.0
        %1254 = vmatpush1.msra.mxu0 0.0
        %1255 = vmatprep.subr.mxu0 0.0
        %1256 = vmatpush1.msra.mxu0 0.0
        %1257 = vmatprep.subr.mxu0 0.0
        %1258 = vmatpush1.msra.mxu0 0.0
        %1259 = vmatprep.subr.mxu0 0.0
        %1260 = vmatpush1.msra.mxu0 0.0
        %1261 = vmatprep.subr.mxu0 0.0
        %1262 = vmatpush1.msra.mxu0 0.0
        %1263 = vmatprep.subr.mxu0 0.0
        %1264 = vmatpush1.msra.mxu0 0.0
        %1265 = vmatprep.subr.mxu0 0.0
        %1266 = vmatpush1.msra.mxu0 0.0
        %1267 = vmatprep.subr.mxu0 0.0
        %1268 = vmatpush1.msra.mxu0 0.0
        %1269 = vmatprep.subr.mxu0 0.0
        %1270 = vmatpush1.msra.mxu0 0.0
        %1271 = vmatprep.subr.mxu0 0.0
        %1272 = vmatpush1.msra.mxu0 0.0
        %1273 = vmatprep.subr.mxu0 0.0
        %1274 = vmatpush1.msra.mxu0 0.0
        %1275 = vmatprep.subr.mxu0 0.0
        %1276 = vmatpush1.msra.mxu0 0.0
        %1277 = vmatprep.subr.mxu0 0.0
        %1278 = vmatpush1.msra.mxu0 0.0
        %1279 = vmatprep.subr.mxu0 0.0
        %1280 = vmatpush1.msra.mxu0 0.0
        %1281 = vmatprep.subr.mxu0 0.0
        %1282 = vmatpush1.msra.mxu0 0.0
        %1283 = vmatprep.subr.mxu0 0.0
        %1284 = vmatpush1.msra.mxu0 0.0
        %1285 = vmatprep.subr.mxu0 0.0
        %1286 = vmatpush1.msra.mxu0 0.0
        %1287 = vmatprep.subr.mxu0 0.0
        %1288 = vmatpush1.msra.mxu0 0.0
        %1289 = vmatprep.subr.mxu0 0.0
        %1290 = vmatpush1.msra.mxu0 0.0
        %1291 = vmatprep.subr.mxu0 0.0
        %1292 = vmatpush1.msra.mxu0 0.0
        %1293 = vmatprep.subr.mxu0 0.0
        %1294 = vmatpush1.msra.mxu0 0.0
        %1295 = vmatprep.subr.mxu0 0.0
        %1296 = vmatpush1.msra.mxu0 0.0
        %1297 = vmatprep.subr.mxu0 0.0
        %1298 = vmatpush1.msra.mxu0 0.0
        %1299 = vmatprep.subr.mxu0 0.0
        %1300 = vmatpush1.msra.mxu0 0.0
        %1301 = vmatprep.subr.mxu0 0.0
        %1302 = vmatpush1.msra.mxu0 0.0
        %1303 = vmatprep.mubr.f32.mxu0 0.0
        %1304 = vmatmul.mubr.f32.gmra.mrb[0].mxu0 %v1234
        %v1305 = vpop.f32.mrb[0].mxu0
        %v1306 = vadd.f32 %v1231, %v1305
        %v1307 = vpop.f32.mrb[0].mxu0
        %1308 = vmatprep.mubr.f32.mxu0 0.0
        %1309 = vmatmul.mubr.f32.gmra.mrb[0].mxu0 %v1237
        %v1310 = vpop.f32.mrb[0].mxu0
        %v1311 = vadd.f32 %v1231, %v1310
        %v1312 = vpop.f32.mrb[0].mxu0
        %1313 = vdwg.mxu0
        %vm1314 = vcmask 64512
        %v1316 = vsel %vm1314, %v1224, 0
        %v1319 = vsel %vm1314, %v1306, 0
        %v1322 = vsel %vm1314, %v1311, 0
        %1324 = vmatprep.subr.mxu0 0.0
        %1325 = vmatpush1.xpose.msra.mxu0 %v1319
        %1326 = vmatprep.subr.mxu0 0.0
        %1327 = vmatpush1.xpose.msra.mxu0 %v1322
        %1328 = vmatprep.subr.mxu0 0.0
        %1329 = vmatpush1.xpose.msra.mxu0 0.0
        %1330 = vmatprep.subr.mxu0 0.0
        %1331 = vmatpush1.xpose.msra.mxu0 0.0
        %1332 = vmatprep.subr.mxu0 0.0
        %1333 = vmatpush1.xpose.msra.mxu0 0.0
        %1334 = vmatprep.subr.mxu0 0.0
        %1335 = vmatpush1.xpose.msra.mxu0 0.0
        %1336 = vmatprep.subr.mxu0 0.0
        %1337 = vmatpush1.xpose.msra.mxu0 0.0
        %1338 = vmatprep.subr.mxu0 0.0
        %1339 = vmatpush1.xpose.msra.mxu0 0.0
        %1340 = vmatprep.subr.mxu0 0.0
        %1341 = vmatpush1.xpose.msra.mxu0 0.0
        %1342 = vmatprep.subr.mxu0 0.0
        %1343 = vmatpush1.xpose.msra.mxu0 0.0
        %1344 = vmatprep.subr.mxu0 0.0
        %1345 = vmatpush1.xpose.msra.mxu0 0.0
        %1346 = vmatprep.subr.mxu0 0.0
        %1347 = vmatpush1.xpose.msra.mxu0 0.0
        %1348 = vmatprep.subr.mxu0 0.0
        %1349 = vmatpush1.xpose.msra.mxu0 0.0
        %1350 = vmatprep.subr.mxu0 0.0
        %1351 = vmatpush1.xpose.msra.mxu0 0.0
        %1352 = vmatprep.subr.mxu0 0.0
        %1353 = vmatpush1.xpose.msra.mxu0 0.0
        %1354 = vmatprep.subr.mxu0 0.0
        %1355 = vmatpush1.xpose.msra.mxu0 0.0
        %1356 = vmatprep.subr.mxu0 0.0
        %1357 = vmatpush1.xpose.msra.mxu0 0.0
        %1358 = vmatprep.subr.mxu0 0.0
        %1359 = vmatpush1.xpose.msra.mxu0 0.0
        %1360 = vmatprep.subr.mxu0 0.0
        %1361 = vmatpush1.xpose.msra.mxu0 0.0
        %1362 = vmatprep.subr.mxu0 0.0
        %1363 = vmatpush1.xpose.msra.mxu0 0.0
        %1364 = vmatprep.subr.mxu0 0.0
        %1365 = vmatpush1.xpose.msra.mxu0 0.0
        %1366 = vmatprep.subr.mxu0 0.0
        %1367 = vmatpush1.xpose.msra.mxu0 0.0
        %1368 = vmatprep.subr.mxu0 0.0
        %1369 = vmatpush1.xpose.msra.mxu0 0.0
        %1370 = vmatprep.subr.mxu0 0.0
        %1371 = vmatpush1.xpose.msra.mxu0 0.0
        %1372 = vmatprep.subr.mxu0 0.0
        %1373 = vmatpush1.xpose.msra.mxu0 0.0
        %1374 = vmatprep.subr.mxu0 0.0
        %1375 = vmatpush1.xpose.msra.mxu0 0.0
        %1376 = vmatprep.subr.mxu0 0.0
        %1377 = vmatpush1.xpose.msra.mxu0 0.0
        %1378 = vmatprep.subr.mxu0 0.0
        %1379 = vmatpush1.xpose.msra.mxu0 0.0
        %1380 = vmatprep.subr.mxu0 0.0
        %1381 = vmatpush1.xpose.msra.mxu0 0.0
        %1382 = vmatprep.subr.mxu0 0.0
        %1383 = vmatpush1.xpose.msra.mxu0 0.0
        %1384 = vmatprep.subr.mxu0 0.0
        %1385 = vmatpush1.xpose.msra.mxu0 0.0
        %1386 = vmatprep.subr.mxu0 0.0
        %1387 = vmatpush1.xpose.msra.mxu0 0.0
        %1388 = vmatprep.mubr.f32.mxu0 0.0
        %1389 = vmatmul.mubr.f32.gmra.mrb[0].mxu0 %v1316
        %v1390 = vpop.f32.mrb[0].mxu0
        %v1391 = vadd.f32 0.0, %v1390
        %v1392 = vpop.f32.mrb[0].mxu0
        %1393 = vdwg.mxu0
        %v1394 = vmul.f32 %v1391, 0.35355338
        %v1395 = vsel %vm1129, %v1394, -1e+09
        %vm1396 = vcmask 130048
        %v1397 = vsel %vm1396, %v1395, -inf
        %1398 = vmax.xlane.f32.xlu0 %v1397
        %v1399 = vpop.xlane.xlu0 %1398
        %v1400 = vsub.f32 %v1395, %v1399
        %v1401 = vmul.f32 %v1400, 1.442695
        %v1402 = vpow.pop %v1401
        %v1403 = vsel %vm1396, %v1402, 0.0
        %1404 = vadd.xlane.f32.xlu0 %v1403
        %v1405 = vpop.xlane.xlu0 %1404
        %v1406 = vrcp.pop %v1405
        %v1407 = vmul.f32 %v1402, %v1406
        %1408 = vrot.lane.b32.xlu0 %v1306, 96
        %v1409 = vpop.permute.xlu0 %1408
        %1410 = vrot.lane.b32.xlu0 %v1311, 96
        %v1411 = vpop.permute.xlu0 %1410
        %v1415 = vsel %vm1396, %v1407, 0
        %1417 = vmatprep.subr.mxu0 0.0
        %1418 = vmatpush1.msra.mxu0 %v1409
        %1419 = vmatprep.subr.mxu0 0.0
        %1420 = vmatpush1.msra.mxu0 %v1411
        %1421 = vmatprep.subr.mxu0 0.0
        %1422 = vmatpush1.msra.mxu0 0.0
        %1423 = vmatprep.subr.mxu0 0.0
        %1424 = vmatpush1.msra.mxu0 0.0
        %1425 = vmatprep.subr.mxu0 0.0
        %1426 = vmatpush1.msra.mxu0 0.0
        %1427 = vmatprep.subr.mxu0 0.0
        %1428 = vmatpush1.msra.mxu0 0.0
        %1429 = vmatprep.subr.mxu0 0.0
        %1430 = vmatpush1.msra.mxu0 0.0
        %1431 = vmatprep.subr.mxu0 0.0
        %1432 = vmatpush1.msra.mxu0 0.0
        %1433 = vmatprep.subr.mxu0 0.0
        %1434 = vmatpush1.msra.mxu0 0.0
        %1435 = vmatprep.subr.mxu0 0.0
        %1436 = vmatpush1.msra.mxu0 0.0
        %1437 = vmatprep.subr.mxu0 0.0
        %1438 = vmatpush1.msra.mxu0 0.0
        %1439 = vmatprep.subr.mxu0 0.0
        %1440 = vmatpush1.msra.mxu0 0.0
        %1441 = vmatprep.subr.mxu0 0.0
        %1442 = vmatpush1.msra.mxu0 0.0
        %1443 = vmatprep.subr.mxu0 0.0
        %1444 = vmatpush1.msra.mxu0 0.0
        %1445 = vmatprep.subr.mxu0 0.0
        %1446 = vmatpush1.msra.mxu0 0.0
        %1447 = vmatprep.subr.mxu0 0.0
        %1448 = vmatpush1.msra.mxu0 0.0
        %1449 = vmatprep.subr.mxu0 0.0
        %1450 = vmatpush1.msra.mxu0 0.0
        %1451 = vmatprep.subr.mxu0 0.0
        %1452 = vmatpush1.msra.mxu0 0.0
        %1453 = vmatprep.subr.mxu0 0.0
        %1454 = vmatpush1.msra.mxu0 0.0
        %1455 = vmatprep.subr.mxu0 0.0
        %1456 = vmatpush1.msra.mxu0 0.0
        %1457 = vmatprep.subr.mxu0 0.0
        %1458 = vmatpush1.msra.mxu0 0.0
        %1459 = vmatprep.subr.mxu0 0.0
        %1460 = vmatpush1.msra.mxu0 0.0
        %1461 = vmatprep.subr.mxu0 0.0
        %1462 = vmatpush1.msra.mxu0 0.0
        %1463 = vmatprep.subr.mxu0 0.0
        %1464 = vmatpush1.msra.mxu0 0.0
        %1465 = vmatprep.subr.mxu0 0.0
        %1466 = vmatpush1.msra.mxu0 0.0
        %1467 = vmatprep.subr.mxu0 0.0
        %1468 = vmatpush1.msra.mxu0 0.0
        %1469 = vmatprep.subr.mxu0 0.0
        %1470 = vmatpush1.msra.mxu0 0.0
        %1471 = vmatprep.subr.mxu0 0.0
        %1472 = vmatpush1.msra.mxu0 0.0
        %1473 = vmatprep.subr.mxu0 0.0
        %1474 = vmatpush1.msra.mxu0 0.0
        %1475 = vmatprep.subr.mxu0 0.0
        %1476 = vmatpush1.msra.mxu0 0.0
        %1477 = vmatprep.subr.mxu0 0.0
        %1478 = vmatpush1.msra.mxu0 0.0
        %1479 = vmatprep.subr.mxu0 0.0
        %1480 = vmatpush1.msra.mxu0 0.0
        %1481 = vmatprep.mubr.f32.mxu0 0.0
        %1482 = vmatmul.mubr.f32.gmra.mrb[0].mxu0 %v1415
        %v1483 = vpop.f32.mrb[0].mxu0
        %v1484 = vadd.f32 0.0, %v1483
        %v1485 = vpop.f32.mrb[0].mxu0
        %1486 = vdwg.mxu0
        %1487 = vrot.lane.b32.xlu0 %v1224, 120
        %v1488 = vpop.permute.xlu0 %1487
        %1489 = vrot.lane.b32.xlu0 %v1306, 120
        %v1490 = vpop.permute.xlu0 %1489
        %1491 = vrot.lane.b32.xlu0 %v1311, 120
        %v1492 = vpop.permute.xlu0 %1491
        %v1493 = vsel %vm1314, %v1488, 0
        %v1495 = vsel %vm1314, %v1490, 0
        %v1497 = vsel %vm1314, %v1492, 0
        %1499 = vmatprep.subr.mxu0 0.0
        %1500 = vmatpush1.xpose.msra.mxu0 %v1495
        %1501 = vmatprep.subr.mxu0 0.0
        %1502 = vmatpush1.xpose.msra.mxu0 %v1497
        %1503 = vmatprep.subr.mxu0 0.0
        %1504 = vmatpush1.xpose.msra.mxu0 0.0
        %1505 = vmatprep.subr.mxu0 0.0
        %1506 = vmatpush1.xpose.msra.mxu0 0.0
        %1507 = vmatprep.subr.mxu0 0.0
        %1508 = vmatpush1.xpose.msra.mxu0 0.0
        %1509 = vmatprep.subr.mxu0 0.0
        %1510 = vmatpush1.xpose.msra.mxu0 0.0
        %1511 = vmatprep.subr.mxu0 0.0
        %1512 = vmatpush1.xpose.msra.mxu0 0.0
        %1513 = vmatprep.subr.mxu0 0.0
        %1514 = vmatpush1.xpose.msra.mxu0 0.0
        %1515 = vmatprep.subr.mxu0 0.0
        %1516 = vmatpush1.xpose.msra.mxu0 0.0
        %1517 = vmatprep.subr.mxu0 0.0
        %1518 = vmatpush1.xpose.msra.mxu0 0.0
        %1519 = vmatprep.subr.mxu0 0.0
        %1520 = vmatpush1.xpose.msra.mxu0 0.0
        %1521 = vmatprep.subr.mxu0 0.0
        %1522 = vmatpush1.xpose.msra.mxu0 0.0
        %1523 = vmatprep.subr.mxu0 0.0
        %1524 = vmatpush1.xpose.msra.mxu0 0.0
        %1525 = vmatprep.subr.mxu0 0.0
        %1526 = vmatpush1.xpose.msra.mxu0 0.0
        %1527 = vmatprep.subr.mxu0 0.0
        %1528 = vmatpush1.xpose.msra.mxu0 0.0
        %1529 = vmatprep.subr.mxu0 0.0
        %1530 = vmatpush1.xpose.msra.mxu0 0.0
        %1531 = vmatprep.subr.mxu0 0.0
        %1532 = vmatpush1.xpose.msra.mxu0 0.0
        %1533 = vmatprep.subr.mxu0 0.0
        %1534 = vmatpush1.xpose.msra.mxu0 0.0
        %1535 = vmatprep.subr.mxu0 0.0
        %1536 = vmatpush1.xpose.msra.mxu0 0.0
        %1537 = vmatprep.subr.mxu0 0.0
        %1538 = vmatpush1.xpose.msra.mxu0 0.0
        %1539 = vmatprep.subr.mxu0 0.0
        %1540 = vmatpush1.xpose.msra.mxu0 0.0
        %1541 = vmatprep.subr.mxu0 0.0
        %1542 = vmatpush1.xpose.msra.mxu0 0.0
        %1543 = vmatprep.subr.mxu0 0.0
        %1544 = vmatpush1.xpose.msra.mxu0 0.0
        %1545 = vmatprep.subr.mxu0 0.0
        %1546 = vmatpush1.xpose.msra.mxu0 0.0
        %1547 = vmatprep.subr.mxu0 0.0
        %1548 = vmatpush1.xpose.msra.mxu0 0.0
        %1549 = vmatprep.subr.mxu0 0.0
        %1550 = vmatpush1.xpose.msra.mxu0 0.0
        %1551 = vmatprep.subr.mxu0 0.0
        %1552 = vmatpush1.xpose.msra.mxu0 0.0
        %1553 = vmatprep.subr.mxu0 0.0
        %1554 = vmatpush1.xpose.msra.mxu0 0.0
        %1555 = vmatprep.subr.mxu0 0.0
        %1556 = vmatpush1.xpose.msra.mxu0 0.0
        %1557 = vmatprep.subr.mxu0 0.0
        %1558 = vmatpush1.xpose.msra.mxu0 0.0
        %1559 = vmatprep.subr.mxu0 0.0
        %1560 = vmatpush1.xpose.msra.mxu0 0.0
        %1561 = vmatprep.subr.mxu0 0.0
        %1562 = vmatpush1.xpose.msra.mxu0 0.0
        %1563 = vmatprep.mubr.f32.mxu0 0.0
        %1564 = vmatmul.mubr.f32.gmra.mrb[0].mxu0 %v1493
        %v1565 = vpop.f32.mrb[0].mxu0
        %v1566 = vadd.f32 0.0, %v1565
        %v1567 = vpop.f32.mrb[0].mxu0
        %1568 = vdwg.mxu0
        %v1569 = vmul.f32 %v1566, 0.35355338
        %v1570 = vsel %vm1129, %v1569, -1e+09
        %v1571 = vsel %vm1396, %v1570, -inf
        %1572 = vmax.xlane.f32.xlu0 %v1571
        %v1573 = vpop.xlane.xlu0 %1572
        %v1574 = vsub.f32 %v1570, %v1573
        %v1575 = vmul.f32 %v1574, 1.442695
        %v1576 = vpow.pop %v1575
        %v1577 = vsel %vm1396, %v1576, 0.0
        %1578 = vadd.xlane.f32.xlu0 %v1577
        %v1579 = vpop.xlane.xlu0 %1578
        %v1580 = vrcp.pop %v1579
        %v1581 = vmul.f32 %v1576, %v1580
        %1582 = vrot.lane.b32.xlu0 %v1306, 88
        %v1583 = vpop.permute.xlu0 %1582
        %1584 = vrot.lane.b32.xlu0 %v1311, 88
        %v1585 = vpop.permute.xlu0 %1584
        %v1589 = vsel %vm1396, %v1581, 0
        %1591 = vmatprep.subr.mxu0 0.0
        %1592 = vmatpush1.msra.mxu0 %v1583
        %1593 = vmatprep.subr.mxu0 0.0
        %1594 = vmatpush1.msra.mxu0 %v1585
        %1595 = vmatprep.subr.mxu0 0.0
        %1596 = vmatpush1.msra.mxu0 0.0
        %1597 = vmatprep.subr.mxu0 0.0
        %1598 = vmatpush1.msra.mxu0 0.0
        %1599 = vmatprep.subr.mxu0 0.0
        %1600 = vmatpush1.msra.mxu0 0.0
        %1601 = vmatprep.subr.mxu0 0.0
        %1602 = vmatpush1.msra.mxu0 0.0
        %1603 = vmatprep.subr.mxu0 0.0
        %1604 = vmatpush1.msra.mxu0 0.0
        %1605 = vmatprep.subr.mxu0 0.0
        %1606 = vmatpush1.msra.mxu0 0.0
        %1607 = vmatprep.subr.mxu0 0.0
        %1608 = vmatpush1.msra.mxu0 0.0
        %1609 = vmatprep.subr.mxu0 0.0
        %1610 = vmatpush1.msra.mxu0 0.0
        %1611 = vmatprep.subr.mxu0 0.0
        %1612 = vmatpush1.msra.mxu0 0.0
        %1613 = vmatprep.subr.mxu0 0.0
        %1614 = vmatpush1.msra.mxu0 0.0
        %1615 = vmatprep.subr.mxu0 0.0
        %1616 = vmatpush1.msra.mxu0 0.0
        %1617 = vmatprep.subr.mxu0 0.0
        %1618 = vmatpush1.msra.mxu0 0.0
        %1619 = vmatprep.subr.mxu0 0.0
        %1620 = vmatpush1.msra.mxu0 0.0
        %1621 = vmatprep.subr.mxu0 0.0
        %1622 = vmatpush1.msra.mxu0 0.0
        %1623 = vmatprep.subr.mxu0 0.0
        %1624 = vmatpush1.msra.mxu0 0.0
        %1625 = vmatprep.subr.mxu0 0.0
        %1626 = vmatpush1.msra.mxu0 0.0
        %1627 = vmatprep.subr.mxu0 0.0
        %1628 = vmatpush1.msra.mxu0 0.0
        %1629 = vmatprep.subr.mxu0 0.0
        %1630 = vmatpush1.msra.mxu0 0.0
        %1631 = vmatprep.subr.mxu0 0.0
        %1632 = vmatpush1.msra.mxu0 0.0
        %1633 = vmatprep.subr.mxu0 0.0
        %1634 = vmatpush1.msra.mxu0 0.0
        %1635 = vmatprep.subr.mxu0 0.0
        %1636 = vmatpush1.msra.mxu0 0.0
        %1637 = vmatprep.subr.mxu0 0.0
        %1638 = vmatpush1.msra.mxu0 0.0
        %1639 = vmatprep.subr.mxu0 0.0
        %1640 = vmatpush1.msra.mxu0 0.0
        %1641 = vmatprep.subr.mxu0 0.0
        %1642 = vmatpush1.msra.mxu0 0.0
        %1643 = vmatprep.subr.mxu0 0.0
        %1644 = vmatpush1.msra.mxu0 0.0
        %1645 = vmatprep.subr.mxu0 0.0
        %1646 = vmatpush1.msra.mxu0 0.0
        %1647 = vmatprep.subr.mxu0 0.0
        %1648 = vmatpush1.msra.mxu0 0.0
        %1649 = vmatprep.subr.mxu0 0.0
        %1650 = vmatpush1.msra.mxu0 0.0
        %1651 = vmatprep.subr.mxu0 0.0
        %1652 = vmatpush1.msra.mxu0 0.0
        %1653 = vmatprep.subr.mxu0 0.0
        %1654 = vmatpush1.msra.mxu0 0.0
        %1655 = vmatprep.mubr.f32.mxu0 0.0
        %1656 = vmatmul.mubr.f32.gmra.mrb[0].mxu0 %v1589
        %v1657 = vpop.f32.mrb[0].mxu0
        %v1658 = vadd.f32 0.0, %v1657
        %v1659 = vpop.f32.mrb[0].mxu0
        %1660 = vdwg.mxu0
        %1661 = vrot.lane.b32.xlu0 %v1224, 112
        %v1662 = vpop.permute.xlu0 %1661
        %1663 = vrot.lane.b32.xlu0 %v1306, 112
        %v1664 = vpop.permute.xlu0 %1663
        %1665 = vrot.lane.b32.xlu0 %v1311, 112
        %v1666 = vpop.permute.xlu0 %1665
        %v1667 = vsel %vm1314, %v1662, 0
        %v1669 = vsel %vm1314, %v1664, 0
        %v1671 = vsel %vm1314, %v1666, 0
        %1673 = vmatprep.subr.mxu0 0.0
        %1674 = vmatpush1.xpose.msra.mxu0 %v1669
        %1675 = vmatprep.subr.mxu0 0.0
        %1676 = vmatpush1.xpose.msra.mxu0 %v1671
        %1677 = vmatprep.subr.mxu0 0.0
        %1678 = vmatpush1.xpose.msra.mxu0 0.0
        %1679 = vmatprep.subr.mxu0 0.0
        %1680 = vmatpush1.xpose.msra.mxu0 0.0
        %1681 = vmatprep.subr.mxu0 0.0
        %1682 = vmatpush1.xpose.msra.mxu0 0.0
        %1683 = vmatprep.subr.mxu0 0.0
        %1684 = vmatpush1.xpose.msra.mxu0 0.0
        %1685 = vmatprep.subr.mxu0 0.0
        %1686 = vmatpush1.xpose.msra.mxu0 0.0
        %1687 = vmatprep.subr.mxu0 0.0
        %1688 = vmatpush1.xpose.msra.mxu0 0.0
        %1689 = vmatprep.subr.mxu0 0.0
        %1690 = vmatpush1.xpose.msra.mxu0 0.0
        %1691 = vmatprep.subr.mxu0 0.0
        %1692 = vmatpush1.xpose.msra.mxu0 0.0
        %1693 = vmatprep.subr.mxu0 0.0
        %1694 = vmatpush1.xpose.msra.mxu0 0.0
        %1695 = vmatprep.subr.mxu0 0.0
        %1696 = vmatpush1.xpose.msra.mxu0 0.0
        %1697 = vmatprep.subr.mxu0 0.0
        %1698 = vmatpush1.xpose.msra.mxu0 0.0
        %1699 = vmatprep.subr.mxu0 0.0
        %1700 = vmatpush1.xpose.msra.mxu0 0.0
        %1701 = vmatprep.subr.mxu0 0.0
        %1702 = vmatpush1.xpose.msra.mxu0 0.0
        %1703 = vmatprep.subr.mxu0 0.0
        %1704 = vmatpush1.xpose.msra.mxu0 0.0
        %1705 = vmatprep.subr.mxu0 0.0
        %1706 = vmatpush1.xpose.msra.mxu0 0.0
        %1707 = vmatprep.subr.mxu0 0.0
        %1708 = vmatpush1.xpose.msra.mxu0 0.0
        %1709 = vmatprep.subr.mxu0 0.0
        %1710 = vmatpush1.xpose.msra.mxu0 0.0
        %1711 = vmatprep.subr.mxu0 0.0
        %1712 = vmatpush1.xpose.msra.mxu0 0.0
        %1713 = vmatprep.subr.mxu0 0.0
        %1714 = vmatpush1.xpose.msra.mxu0 0.0
        %1715 = vmatprep.subr.mxu0 0.0
        %1716 = vmatpush1.xpose.msra.mxu0 0.0
        %1717 = vmatprep.subr.mxu0 0.0
        %1718 = vmatpush1.xpose.msra.mxu0 0.0
        %1719 = vmatprep.subr.mxu0 0.0
        %1720 = vmatpush1.xpose.msra.mxu0 0.0
        %1721 = vmatprep.subr.mxu0 0.0
        %1722 = vmatpush1.xpose.msra.mxu0 0.0
        %1723 = vmatprep.subr.mxu0 0.0
        %1724 = vmatpush1.xpose.msra.mxu0 0.0
        %1725 = vmatprep.subr.mxu0 0.0
        %1726 = vmatpush1.xpose.msra.mxu0 0.0
        %1727 = vmatprep.subr.mxu0 0.0
        %1728 = vmatpush1.xpose.msra.mxu0 0.0
        %1729 = vmatprep.subr.mxu0 0.0
        %1730 = vmatpush1.xpose.msra.mxu0 0.0
        %1731 = vmatprep.subr.mxu0 0.0
        %1732 = vmatpush1.xpose.msra.mxu0 0.0
        %1733 = vmatprep.subr.mxu0 0.0
        %1734 = vmatpush1.xpose.msra.mxu0 0.0
        %1735 = vmatprep.subr.mxu0 0.0
        %1736 = vmatpush1.xpose.msra.mxu0 0.0
        %1737 = vmatprep.mubr.f32.mxu0 0.0
        %1738 = vmatmul.mubr.f32.gmra.mrb[0].mxu0 %v1667
        %v1739 = vpop.f32.mrb[0].mxu0
        %v1740 = vadd.f32 0.0, %v1739
        %v1741 = vpop.f32.mrb[0].mxu0
        %1742 = vdwg.mxu0
        %v1743 = vmul.f32 %v1740, 0.35355338
        %v1744 = vsel %vm1129, %v1743, -1e+09
        %v1745 = vsel %vm1396, %v1744, -inf
        %1746 = vmax.xlane.f32.xlu0 %v1745
        %v1747 = vpop.xlane.xlu0 %1746
        %v1748 = vsub.f32 %v1744, %v1747
        %v1749 = vmul.f32 %v1748, 1.442695
        %v1750 = vpow.pop %v1749
        %v1751 = vsel %vm1396, %v1750, 0.0
        %1752 = vadd.xlane.f32.xlu0 %v1751
        %v1753 = vpop.xlane.xlu0 %1752
        %v1754 = vrcp.pop %v1753
        %v1755 = vmul.f32 %v1750, %v1754
        %1756 = vrot.lane.b32.xlu0 %v1306, 80
        %v1757 = vpop.permute.xlu0 %1756
        %1758 = vrot.lane.b32.xlu0 %v1311, 80
        %v1759 = vpop.permute.xlu0 %1758
        %v1763 = vsel %vm1396, %v1755, 0
        %1765 = vmatprep.subr.mxu0 0.0
        %1766 = vmatpush1.msra.mxu0 %v1757
        %1767 = vmatprep.subr.mxu0 0.0
        %1768 = vmatpush1.msra.mxu0 %v1759
        %1769 = vmatprep.subr.mxu0 0.0
        %1770 = vmatpush1.msra.mxu0 0.0
        %1771 = vmatprep.subr.mxu0 0.0
        %1772 = vmatpush1.msra.mxu0 0.0
        %1773 = vmatprep.subr.mxu0 0.0
        %1774 = vmatpush1.msra.mxu0 0.0
        %1775 = vmatprep.subr.mxu0 0.0
        %1776 = vmatpush1.msra.mxu0 0.0
        %1777 = vmatprep.subr.mxu0 0.0
        %1778 = vmatpush1.msra.mxu0 0.0
        %1779 = vmatprep.subr.mxu0 0.0
        %1780 = vmatpush1.msra.mxu0 0.0
        %1781 = vmatprep.subr.mxu0 0.0
        %1782 = vmatpush1.msra.mxu0 0.0
        %1783 = vmatprep.subr.mxu0 0.0
        %1784 = vmatpush1.msra.mxu0 0.0
        %1785 = vmatprep.subr.mxu0 0.0
        %1786 = vmatpush1.msra.mxu0 0.0
        %1787 = vmatprep.subr.mxu0 0.0
        %1788 = vmatpush1.msra.mxu0 0.0
        %1789 = vmatprep.subr.mxu0 0.0
        %1790 = vmatpush1.msra.mxu0 0.0
        %1791 = vmatprep.subr.mxu0 0.0
        %1792 = vmatpush1.msra.mxu0 0.0
        %1793 = vmatprep.subr.mxu0 0.0
        %1794 = vmatpush1.msra.mxu0 0.0
        %1795 = vmatprep.subr.mxu0 0.0
        %1796 = vmatpush1.msra.mxu0 0.0
        %1797 = vmatprep.subr.mxu0 0.0
        %1798 = vmatpush1.msra.mxu0 0.0
        %1799 = vmatprep.subr.mxu0 0.0
        %1800 = vmatpush1.msra.mxu0 0.0
        %1801 = vmatprep.subr.mxu0 0.0
        %1802 = vmatpush1.msra.mxu0 0.0
        %1803 = vmatprep.subr.mxu0 0.0
        %1804 = vmatpush1.msra.mxu0 0.0
        %1805 = vmatprep.subr.mxu0 0.0
        %1806 = vmatpush1.msra.mxu0 0.0
        %1807 = vmatprep.subr.mxu0 0.0
        %1808 = vmatpush1.msra.mxu0 0.0
        %1809 = vmatprep.subr.mxu0 0.0
        %1810 = vmatpush1.msra.mxu0 0.0
        %1811 = vmatprep.subr.mxu0 0.0
        %1812 = vmatpush1.msra.mxu0 0.0
        %1813 = vmatprep.subr.mxu0 0.0
        %1814 = vmatpush1.msra.mxu0 0.0
        %1815 = vmatprep.subr.mxu0 0.0
        %1816 = vmatpush1.msra.mxu0 0.0
        %1817 = vmatprep.subr.mxu0 0.0
        %1818 = vmatpush1.msra.mxu0 0.0
        %1819 = vmatprep.subr.mxu0 0.0
        %1820 = vmatpush1.msra.mxu0 0.0
        %1821 = vmatprep.subr.mxu0 0.0
        %1822 = vmatpush1.msra.mxu0 0.0
        %1823 = vmatprep.subr.mxu0 0.0
        %1824 = vmatpush1.msra.mxu0 0.0
        %1825 = vmatprep.subr.mxu0 0.0
        %1826 = vmatpush1.msra.mxu0 0.0
        %1827 = vmatprep.subr.mxu0 0.0
        %1828 = vmatpush1.msra.mxu0 0.0
        %1829 = vmatprep.mubr.f32.mxu0 0.0
        %1830 = vmatmul.mubr.f32.gmra.mrb[0].mxu0 %v1763
        %v1831 = vpop.f32.mrb[0].mxu0
        %v1832 = vadd.f32 0.0, %v1831
        %v1833 = vpop.f32.mrb[0].mxu0
        %1834 = vdwg.mxu0
        %1835 = vrot.lane.b32.xlu0 %v1224, 104
        %v1836 = vpop.permute.xlu0 %1835
        %1837 = vrot.lane.b32.xlu0 %v1306, 104
        %v1838 = vpop.permute.xlu0 %1837
        %1839 = vrot.lane.b32.xlu0 %v1311, 104
        %v1840 = vpop.permute.xlu0 %1839
        %v1841 = vsel %vm1314, %v1836, 0
        %v1843 = vsel %vm1314, %v1838, 0
        %v1845 = vsel %vm1314, %v1840, 0
        %1847 = vmatprep.subr.mxu0 0.0
        %1848 = vmatpush1.xpose.msra.mxu0 %v1843
        %1849 = vmatprep.subr.mxu0 0.0
        %1850 = vmatpush1.xpose.msra.mxu0 %v1845
        %1851 = vmatprep.subr.mxu0 0.0
        %1852 = vmatpush1.xpose.msra.mxu0 0.0
        %1853 = vmatprep.subr.mxu0 0.0
        %1854 = vmatpush1.xpose.msra.mxu0 0.0
        %1855 = vmatprep.subr.mxu0 0.0
        %1856 = vmatpush1.xpose.msra.mxu0 0.0
        %1857 = vmatprep.subr.mxu0 0.0
        %1858 = vmatpush1.xpose.msra.mxu0 0.0
        %1859 = vmatprep.subr.mxu0 0.0
        %1860 = vmatpush1.xpose.msra.mxu0 0.0
        %1861 = vmatprep.subr.mxu0 0.0
        %1862 = vmatpush1.xpose.msra.mxu0 0.0
        %1863 = vmatprep.subr.mxu0 0.0
        %1864 = vmatpush1.xpose.msra.mxu0 0.0
        %1865 = vmatprep.subr.mxu0 0.0
        %1866 = vmatpush1.xpose.msra.mxu0 0.0
        %1867 = vmatprep.subr.mxu0 0.0
        %1868 = vmatpush1.xpose.msra.mxu0 0.0
        %1869 = vmatprep.subr.mxu0 0.0
        %1870 = vmatpush1.xpose.msra.mxu0 0.0
        %1871 = vmatprep.subr.mxu0 0.0
        %1872 = vmatpush1.xpose.msra.mxu0 0.0
        %1873 = vmatprep.subr.mxu0 0.0
        %1874 = vmatpush1.xpose.msra.mxu0 0.0
        %1875 = vmatprep.subr.mxu0 0.0
        %1876 = vmatpush1.xpose.msra.mxu0 0.0
        %1877 = vmatprep.subr.mxu0 0.0
        %1878 = vmatpush1.xpose.msra.mxu0 0.0
        %1879 = vmatprep.subr.mxu0 0.0
        %1880 = vmatpush1.xpose.msra.mxu0 0.0
        %1881 = vmatprep.subr.mxu0 0.0
        %1882 = vmatpush1.xpose.msra.mxu0 0.0
        %1883 = vmatprep.subr.mxu0 0.0
        %1884 = vmatpush1.xpose.msra.mxu0 0.0
        %1885 = vmatprep.subr.mxu0 0.0
        %1886 = vmatpush1.xpose.msra.mxu0 0.0
        %1887 = vmatprep.subr.mxu0 0.0
        %1888 = vmatpush1.xpose.msra.mxu0 0.0
        %1889 = vmatprep.subr.mxu0 0.0
        %1890 = vmatpush1.xpose.msra.mxu0 0.0
        %1891 = vmatprep.subr.mxu0 0.0
        %1892 = vmatpush1.xpose.msra.mxu0 0.0
        %1893 = vmatprep.subr.mxu0 0.0
        %1894 = vmatpush1.xpose.msra.mxu0 0.0
        %1895 = vmatprep.subr.mxu0 0.0
        %1896 = vmatpush1.xpose.msra.mxu0 0.0
        %1897 = vmatprep.subr.mxu0 0.0
        %1898 = vmatpush1.xpose.msra.mxu0 0.0
        %1899 = vmatprep.subr.mxu0 0.0
        %1900 = vmatpush1.xpose.msra.mxu0 0.0
        %1901 = vmatprep.subr.mxu0 0.0
        %1902 = vmatpush1.xpose.msra.mxu0 0.0
        %1903 = vmatprep.subr.mxu0 0.0
        %1904 = vmatpush1.xpose.msra.mxu0 0.0
        %1905 = vmatprep.subr.mxu0 0.0
        %1906 = vmatpush1.xpose.msra.mxu0 0.0
        %1907 = vmatprep.subr.mxu0 0.0
        %1908 = vmatpush1.xpose.msra.mxu0 0.0
        %1909 = vmatprep.subr.mxu0 0.0
        %1910 = vmatpush1.xpose.msra.mxu0 0.0
        %1911 = vmatprep.mubr.f32.mxu0 0.0
        %1912 = vmatmul.mubr.f32.gmra.mrb[0].mxu0 %v1841
        %v1913 = vpop.f32.mrb[0].mxu0
        %v1914 = vadd.f32 0.0, %v1913
        %v1915 = vpop.f32.mrb[0].mxu0
        %1916 = vdwg.mxu0
        %v1917 = vmul.f32 %v1914, 0.35355338
        %v1918 = vsel %vm1129, %v1917, -1e+09
        %v1919 = vsel %vm1396, %v1918, -inf
        %1920 = vmax.xlane.f32.xlu0 %v1919
        %v1921 = vpop.xlane.xlu0 %1920
        %v1922 = vsub.f32 %v1918, %v1921
        %v1923 = vmul.f32 %v1922, 1.442695
        %v1924 = vpow.pop %v1923
        %v1925 = vsel %vm1396, %v1924, 0.0
        %1926 = vadd.xlane.f32.xlu0 %v1925
        %v1927 = vpop.xlane.xlu0 %1926
        %v1928 = vrcp.pop %v1927
        %v1929 = vmul.f32 %v1924, %v1928
        %1930 = vrot.lane.b32.xlu0 %v1306, 72
        %v1931 = vpop.permute.xlu0 %1930
        %1932 = vrot.lane.b32.xlu0 %v1311, 72
        %v1933 = vpop.permute.xlu0 %1932
        %v1937 = vsel %vm1396, %v1929, 0
        %1939 = vmatprep.subr.mxu0 0.0
        %1940 = vmatpush1.msra.mxu0 %v1931
        %1941 = vmatprep.subr.mxu0 0.0
        %1942 = vmatpush1.msra.mxu0 %v1933
        %1943 = vmatprep.subr.mxu0 0.0
        %1944 = vmatpush1.msra.mxu0 0.0
        %1945 = vmatprep.subr.mxu0 0.0
        %1946 = vmatpush1.msra.mxu0 0.0
        %1947 = vmatprep.subr.mxu0 0.0
        %1948 = vmatpush1.msra.mxu0 0.0
        %1949 = vmatprep.subr.mxu0 0.0
        %1950 = vmatpush1.msra.mxu0 0.0
        %1951 = vmatprep.subr.mxu0 0.0
        %1952 = vmatpush1.msra.mxu0 0.0
        %1953 = vmatprep.subr.mxu0 0.0
        %1954 = vmatpush1.msra.mxu0 0.0
        %1955 = vmatprep.subr.mxu0 0.0
        %1956 = vmatpush1.msra.mxu0 0.0
        %1957 = vmatprep.subr.mxu0 0.0
        %1958 = vmatpush1.msra.mxu0 0.0
        %1959 = vmatprep.subr.mxu0 0.0
        %1960 = vmatpush1.msra.mxu0 0.0
        %1961 = vmatprep.subr.mxu0 0.0
        %1962 = vmatpush1.msra.mxu0 0.0
        %1963 = vmatprep.subr.mxu0 0.0
        %1964 = vmatpush1.msra.mxu0 0.0
        %1965 = vmatprep.subr.mxu0 0.0
        %1966 = vmatpush1.msra.mxu0 0.0
        %1967 = vmatprep.subr.mxu0 0.0
        %1968 = vmatpush1.msra.mxu0 0.0
        %1969 = vmatprep.subr.mxu0 0.0
        %1970 = vmatpush1.msra.mxu0 0.0
        %1971 = vmatprep.subr.mxu0 0.0
        %1972 = vmatpush1.msra.mxu0 0.0
        %1973 = vmatprep.subr.mxu0 0.0
        %1974 = vmatpush1.msra.mxu0 0.0
        %1975 = vmatprep.subr.mxu0 0.0
        %1976 = vmatpush1.msra.mxu0 0.0
        %1977 = vmatprep.subr.mxu0 0.0
        %1978 = vmatpush1.msra.mxu0 0.0
        %1979 = vmatprep.subr.mxu0 0.0
        %1980 = vmatpush1.msra.mxu0 0.0
        %1981 = vmatprep.subr.mxu0 0.0
        %1982 = vmatpush1.msra.mxu0 0.0
        %1983 = vmatprep.subr.mxu0 0.0
        %1984 = vmatpush1.msra.mxu0 0.0
        %1985 = vmatprep.subr.mxu0 0.0
        %1986 = vmatpush1.msra.mxu0 0.0
        %1987 = vmatprep.subr.mxu0 0.0
        %1988 = vmatpush1.msra.mxu0 0.0
        %1989 = vmatprep.subr.mxu0 0.0
        %1990 = vmatpush1.msra.mxu0 0.0
        %1991 = vmatprep.subr.mxu0 0.0
        %1992 = vmatpush1.msra.mxu0 0.0
        %1993 = vmatprep.subr.mxu0 0.0
        %1994 = vmatpush1.msra.mxu0 0.0
        %1995 = vmatprep.subr.mxu0 0.0
        %1996 = vmatpush1.msra.mxu0 0.0
        %1997 = vmatprep.subr.mxu0 0.0
        %1998 = vmatpush1.msra.mxu0 0.0
        %1999 = vmatprep.subr.mxu0 0.0
        %2000 = vmatpush1.msra.mxu0 0.0
        %2001 = vmatprep.subr.mxu0 0.0
        %2002 = vmatpush1.msra.mxu0 0.0
        %2003 = vmatprep.mubr.f32.mxu0 0.0
        %2004 = vmatmul.mubr.f32.gmra.mrb[0].mxu0 %v1937
        %v2005 = vpop.f32.mrb[0].mxu0
        %v2006 = vadd.f32 0.0, %v2005
        %v2007 = vpop.f32.mrb[0].mxu0
        %2008 = vdwg.mxu0
        %2010 = vrot.lane.b32.xlu0 %v1658, 8
        %v2011 = vpop.permute.xlu0 %2010
        %2014 = vrot.lane.b32.xlu0 %v1832, 16
        %v2015 = vpop.permute.xlu0 %2014
        %2018 = vrot.lane.b32.xlu0 %v2006, 24
        %v2019 = vpop.permute.xlu0 %2018
        %v2021 = vsel %vm1314, %v1484, %v2011
        %v2022 = vsel %vm1396, %v2021, %v2015
        %vm2023 = vcmask 195584
        %v2024 = vsel %vm2023, %v2022, %v2019
        %v2026 = vlaneseq
        %v2027 = vshrl.u32 %v2026, 7
        %v2028 = vsub.s32 0, %v2027
        %v2029 = vrot.slane %v1146, %v2028
        %v2032 = vsel %vm1153, %v2024, 0
        %2034 = vmatprep.subr.mxu0 0.0
        %2035 = vmatpush1.msra.mxu0 %v1142
        %2036 = vmatprep.subr.mxu0 0.0
        %2037 = vmatpush1.msra.mxu0 %v1143
        %2038 = vmatprep.subr.mxu0 0.0
        %2039 = vmatpush1.msra.mxu0 %v1144
        %2040 = vmatprep.subr.mxu0 0.0
        %2041 = vmatpush1.msra.mxu0 %v1145
        %2042 = vmatprep.subr.mxu0 0.0
        %2043 = vmatpush1.msra.mxu0 0.0
        %2044 = vmatprep.subr.mxu0 0.0
        %2045 = vmatpush1.msra.mxu0 0.0
        %2046 = vmatprep.subr.mxu0 0.0
        %2047 = vmatpush1.msra.mxu0 0.0
        %2048 = vmatprep.subr.mxu0 0.0
        %2049 = vmatpush1.msra.mxu0 0.0
        %2050 = vmatprep.subr.mxu0 0.0
        %2051 = vmatpush1.msra.mxu0 0.0
        %2052 = vmatprep.subr.mxu0 0.0
        %2053 = vmatpush1.msra.mxu0 0.0
        %2054 = vmatprep.subr.mxu0 0.0
        %2055 = vmatpush1.msra.mxu0 0.0
        %2056 = vmatprep.subr.mxu0 0.0
        %2057 = vmatpush1.msra.mxu0 0.0
        %2058 = vmatprep.subr.mxu0 0.0
        %2059 = vmatpush1.msra.mxu0 0.0
        %2060 = vmatprep.subr.mxu0 0.0
        %2061 = vmatpush1.msra.mxu0 0.0
        %2062 = vmatprep.subr.mxu0 0.0
        %2063 = vmatpush1.msra.mxu0 0.0
        %2064 = vmatprep.subr.mxu0 0.0
        %2065 = vmatpush1.msra.mxu0 0.0
        %2066 = vmatprep.subr.mxu0 0.0
        %2067 = vmatpush1.msra.mxu0 0.0
        %2068 = vmatprep.subr.mxu0 0.0
        %2069 = vmatpush1.msra.mxu0 0.0
        %2070 = vmatprep.subr.mxu0 0.0
        %2071 = vmatpush1.msra.mxu0 0.0
        %2072 = vmatprep.subr.mxu0 0.0
        %2073 = vmatpush1.msra.mxu0 0.0
        %2074 = vmatprep.subr.mxu0 0.0
        %2075 = vmatpush1.msra.mxu0 0.0
        %2076 = vmatprep.subr.mxu0 0.0
        %2077 = vmatpush1.msra.mxu0 0.0
        %2078 = vmatprep.subr.mxu0 0.0
        %2079 = vmatpush1.msra.mxu0 0.0
        %2080 = vmatprep.subr.mxu0 0.0
        %2081 = vmatpush1.msra.mxu0 0.0
        %2082 = vmatprep.subr.mxu0 0.0
        %2083 = vmatpush1.msra.mxu0 0.0
        %2084 = vmatprep.subr.mxu0 0.0
        %2085 = vmatpush1.msra.mxu0 0.0
        %2086 = vmatprep.subr.mxu0 0.0
        %2087 = vmatpush1.msra.mxu0 0.0
        %2088 = vmatprep.subr.mxu0 0.0
        %2089 = vmatpush1.msra.mxu0 0.0
        %2090 = vmatprep.subr.mxu0 0.0
        %2091 = vmatpush1.msra.mxu0 0.0
        %2092 = vmatprep.subr.mxu0 0.0
        %2093 = vmatpush1.msra.mxu0 0.0
        %2094 = vmatprep.subr.mxu0 0.0
        %2095 = vmatpush1.msra.mxu0 0.0
        %2096 = vmatprep.subr.mxu0 0.0
        %2097 = vmatpush1.msra.mxu0 0.0
        %2098 = vmatprep.mubr.f32.mxu0 0.0
        %2099 = vmatmul.mubr.f32.gmra.mrb[0].mxu0 %v2032
        %v2100 = vpop.f32.mrb[0].mxu0
        %v2101 = vadd.f32 %v2029, %v2100
        %v2102 = vpop.f32.mrb[0].mxu0
        %2103 = vdwg.mxu0
        %v2104 = vadd.f32 %v2101, %v1124
        %v2105 = vld [vmem:[#allocation23] sm:$0x1]
        %v2106 = vld [vmem:[%s18] sm:$0x1]
        %v2107 = vsel %vm1153, %v2104, 0.0
        %2108 = vadd.xlane.f32.xlu0 %v2107
        %v2109 = vpop.xlane.xlu0 %2108
        %v2110 = vrcp.pop 32.0
        %v2111 = vmul.f32 %v2109, %v2110
        %v2112 = vsub.f32 %v2104, %v2111
        %v2113 = vmul.f32 %v2112, %v2112
        %v2114 = vsel %vm1153, %v2113, 0.0
        %2115 = vadd.xlane.f32.xlu0 %v2114
        %v2116 = vpop.xlane.xlu0 %2115
        %v2117 = vmul.f32 %v2116, %v2110
        %v2118 = vadd.f32 %v2117, 1e-05
        %v2119 = vrsqrt.pop %v2118
        %v2120 = vmul.f32 %v2112, %v2119
        %v2122 = vlaneseq
        %v2123 = vshrl.u32 %v2122, 7
        %v2124 = vsub.s32 0, %v2123
        %v2125 = vrot.slane %v2105, %v2124
        %v2127 = vmul.f32 %v2120, %v2125
        %v2129 = vlaneseq
        %v2130 = vshrl.u32 %v2129, 7
        %v2131 = vsub.s32 0, %v2130
        %v2132 = vrot.slane %v2106, %v2131
        %v2134 = vadd.f32 %v2127, %v2132
        %v2135 = vld [vmem:[#allocation14] sm:$0xff]
        %v2136 = vld [vmem:[#allocation14 + $0x8] sm:$0xff]
        %v2137 = vld [vmem:[#allocation14 + $0x10] sm:$0xff]
        %v2138 = vld [vmem:[#allocation14 + $0x18] sm:$0xff]
        %v2139 = vld [vmem:[#allocation16] sm:$0x1]
        %v2140 = vld [vmem:[#allocation17] sm:$0xff]
        %v2141 = vld [vmem:[#allocation17 + $0x8] sm:$0xff]
        %v2142 = vld [vmem:[#allocation17 + $0x10] sm:$0xff]
        %v2143 = vld [vmem:[#allocation17 + $0x18] sm:$0xff]
        %v2144 = vld [vmem:[#allocation19] sm:$0x1]
        %v2145 = vld [vmem:[#allocation20] sm:$0xff]
        %v2146 = vld [vmem:[#allocation20 + $0x8] sm:$0xff]
        %v2147 = vld [vmem:[#allocation20 + $0x10] sm:$0xff]
        %v2148 = vld [vmem:[#allocation20 + $0x18] sm:$0xff]
        %v2149 = vld [vmem:[#allocation22] sm:$0x1]
        %v2151 = vlaneseq
        %v2152 = vshrl.u32 %v2151, 7
        %v2153 = vsub.s32 0, %v2152
        %v2154 = vrot.slane %v2139, %v2153
        %v2157 = vsel %vm1153, %v2134, 0
        %2159 = vmatprep.subr.mxu0 0.0
        %2160 = vmatpush1.msra.mxu0 %v2135
        %2161 = vmatprep.subr.mxu0 0.0
        %2162 = vmatpush1.msra.mxu0 %v2136
        %2163 = vmatprep.subr.mxu0 0.0
        %2164 = vmatpush1.msra.mxu0 %v2137
        %2165 = vmatprep.subr.mxu0 0.0
        %2166 = vmatpush1.msra.mxu0 %v2138
        %2167 = vmatprep.subr.mxu0 0.0
        %2168 = vmatpush1.msra.mxu0 0.0
        %2169 = vmatprep.subr.mxu0 0.0
        %2170 = vmatpush1.msra.mxu0 0.0
        %2171 = vmatprep.subr.mxu0 0.0
        %2172 = vmatpush1.msra.mxu0 0.0
        %2173 = vmatprep.subr.mxu0 0.0
        %2174 = vmatpush1.msra.mxu0 0.0
        %2175 = vmatprep.subr.mxu0 0.0
        %2176 = vmatpush1.msra.mxu0 0.0
        %2177 = vmatprep.subr.mxu0 0.0
        %2178 = vmatpush1.msra.mxu0 0.0
        %2179 = vmatprep.subr.mxu0 0.0
        %2180 = vmatpush1.msra.mxu0 0.0
        %2181 = vmatprep.subr.mxu0 0.0
        %2182 = vmatpush1.msra.mxu0 0.0
        %2183 = vmatprep.subr.mxu0 0.0
        %2184 = vmatpush1.msra.mxu0 0.0
        %2185 = vmatprep.subr.mxu0 0.0
        %2186 = vmatpush1.msra.mxu0 0.0
        %2187 = vmatprep.subr.mxu0 0.0
        %2188 = vmatpush1.msra.mxu0 0.0
        %2189 = vmatprep.subr.mxu0 0.0
        %2190 = vmatpush1.msra.mxu0 0.0
        %2191 = vmatprep.subr.mxu0 0.0
        %2192 = vmatpush1.msra.mxu0 0.0
        %2193 = vmatprep.subr.mxu0 0.0
        %2194 = vmatpush1.msra.mxu0 0.0
        %2195 = vmatprep.subr.mxu0 0.0
        %2196 = vmatpush1.msra.mxu0 0.0
        %2197 = vmatprep.subr.mxu0 0.0
        %2198 = vmatpush1.msra.mxu0 0.0
        %2199 = vmatprep.subr.mxu0 0.0
        %2200 = vmatpush1.msra.mxu0 0.0
        %2201 = vmatprep.subr.mxu0 0.0
        %2202 = vmatpush1.msra.mxu0 0.0
        %2203 = vmatprep.subr.mxu0 0.0
        %2204 = vmatpush1.msra.mxu0 0.0
        %2205 = vmatprep.subr.mxu0 0.0
        %2206 = vmatpush1.msra.mxu0 0.0
        %2207 = vmatprep.subr.mxu0 0.0
        %2208 = vmatpush1.msra.mxu0 0.0
        %2209 = vmatprep.subr.mxu0 0.0
        %2210 = vmatpush1.msra.mxu0 0.0
        %2211 = vmatprep.subr.mxu0 0.0
        %2212 = vmatpush1.msra.mxu0 0.0
        %2213 = vmatprep.subr.mxu0 0.0
        %2214 = vmatpush1.msra.mxu0 0.0
        %2215 = vmatprep.subr.mxu0 0.0
        %2216 = vmatpush1.msra.mxu0 0.0
        %2217 = vmatprep.subr.mxu0 0.0
        %2218 = vmatpush1.msra.mxu0 0.0
        %2219 = vmatprep.subr.mxu0 0.0
        %2220 = vmatpush1.msra.mxu0 0.0
        %2221 = vmatprep.subr.mxu0 0.0
        %2222 = vmatpush1.msra.mxu0 0.0
        %2223 = vmatprep.mubr.f32.mxu0 0.0
        %2224 = vmatmul.mubr.f32.gmra.mrb[0].mxu0 %v2157
        %v2225 = vpop.f32.mrb[0].mxu0
        %v2226 = vadd.f32 %v2154, %v2225
        %v2227 = vpop.f32.mrb[0].mxu0
        %2228 = vdwg.mxu0
        %v2230 = vlaneseq
        %v2231 = vshrl.u32 %v2230, 7
        %v2232 = vsub.s32 0, %v2231
        %v2233 = vrot.slane %v2144, %v2232
        %v2236 = vsel %vm1153, %v1127, 0
        %2238 = vmatprep.subr.mxu0 0.0
        %2239 = vmatpush1.msra.mxu0 %v2140
        %2240 = vmatprep.subr.mxu0 0.0
        %2241 = vmatpush1.msra.mxu0 %v2141
        %2242 = vmatprep.subr.mxu0 0.0
        %2243 = vmatpush1.msra.mxu0 %v2142
        %2244 = vmatprep.subr.mxu0 0.0
        %2245 = vmatpush1.msra.mxu0 %v2143
        %2246 = vmatprep.subr.mxu0 0.0
        %2247 = vmatpush1.msra.mxu0 0.0
        %2248 = vmatprep.subr.mxu0 0.0
        %2249 = vmatpush1.msra.mxu0 0.0
        %2250 = vmatprep.subr.mxu0 0.0
        %2251 = vmatpush1.msra.mxu0 0.0
        %2252 = vmatprep.subr.mxu0 0.0
        %2253 = vmatpush1.msra.mxu0 0.0
        %2254 = vmatprep.subr.mxu0 0.0
        %2255 = vmatpush1.msra.mxu0 0.0
        %2256 = vmatprep.subr.mxu0 0.0
        %2257 = vmatpush1.msra.mxu0 0.0
        %2258 = vmatprep.subr.mxu0 0.0
        %2259 = vmatpush1.msra.mxu0 0.0
        %2260 = vmatprep.subr.mxu0 0.0
        %2261 = vmatpush1.msra.mxu0 0.0
        %2262 = vmatprep.subr.mxu0 0.0
        %2263 = vmatpush1.msra.mxu0 0.0
        %2264 = vmatprep.subr.mxu0 0.0
        %2265 = vmatpush1.msra.mxu0 0.0
        %2266 = vmatprep.subr.mxu0 0.0
        %2267 = vmatpush1.msra.mxu0 0.0
        %2268 = vmatprep.subr.mxu0 0.0
        %2269 = vmatpush1.msra.mxu0 0.0
        %2270 = vmatprep.subr.mxu0 0.0
        %2271 = vmatpush1.msra.mxu0 0.0
        %2272 = vmatprep.subr.mxu0 0.0
        %2273 = vmatpush1.msra.mxu0 0.0
        %2274 = vmatprep.subr.mxu0 0.0
        %2275 = vmatpush1.msra.mxu0 0.0
        %2276 = vmatprep.subr.mxu0 0.0
        %2277 = vmatpush1.msra.mxu0 0.0
        %2278 = vmatprep.subr.mxu0 0.0
        %2279 = vmatpush1.msra.mxu0 0.0
        %2280 = vmatprep.subr.mxu0 0.0
        %2281 = vmatpush1.msra.mxu0 0.0
        %2282 = vmatprep.subr.mxu0 0.0
        %2283 = vmatpush1.msra.mxu0 0.0
        %2284 = vmatprep.subr.mxu0 0.0
        %2285 = vmatpush1.msra.mxu0 0.0
        %2286 = vmatprep.subr.mxu0 0.0
        %2287 = vmatpush1.msra.mxu0 0.0
        %2288 = vmatprep.subr.mxu0 0.0
        %2289 = vmatpush1.msra.mxu0 0.0
        %2290 = vmatprep.subr.mxu0 0.0
        %2291 = vmatpush1.msra.mxu0 0.0
        %2292 = vmatprep.subr.mxu0 0.0
        %2293 = vmatpush1.msra.mxu0 0.0
        %2294 = vmatprep.subr.mxu0 0.0
        %2295 = vmatpush1.msra.mxu0 0.0
        %2296 = vmatprep.subr.mxu0 0.0
        %2297 = vmatpush1.msra.mxu0 0.0
        %2298 = vmatprep.subr.mxu0 0.0
        %2299 = vmatpush1.msra.mxu0 0.0
        %2300 = vmatprep.subr.mxu0 0.0
        %2301 = vmatpush1.msra.mxu0 0.0
        %2302 = vmatprep.mubr.f32.mxu0 0.0
        %2303 = vmatmul.mubr.f32.gmra.mrb[0].mxu0 %v2236
        %v2304 = vpop.f32.mrb[0].mxu0
        %v2305 = vadd.f32 %v2233, %v2304
        %v2306 = vpop.f32.mrb[0].mxu0
        %2307 = vdwg.mxu0
        %v2309 = vsel %vm1314, %v2226, 0
        %v2312 = vsel %vm1314, %v2305, 0
        %2314 = vmatprep.subr.mxu0 0.0
        %2315 = vmatpush1.xpose.msra.mxu0 %v2312
        %2316 = vmatprep.subr.mxu0 0.0
        %2317 = vmatpush1.xpose.msra.mxu0 0.0
        %2318 = vmatprep.subr.mxu0 0.0
        %2319 = vmatpush1.xpose.msra.mxu0 0.0
        %2320 = vmatprep.subr.mxu0 0.0
        %2321 = vmatpush1.xpose.msra.mxu0 0.0
        %2322 = vmatprep.subr.mxu0 0.0
        %2323 = vmatpush1.xpose.msra.mxu0 0.0
        %2324 = vmatprep.subr.mxu0 0.0
        %2325 = vmatpush1.xpose.msra.mxu0 0.0
        %2326 = vmatprep.subr.mxu0 0.0
        %2327 = vmatpush1.xpose.msra.mxu0 0.0
        %2328 = vmatprep.subr.mxu0 0.0
        %2329 = vmatpush1.xpose.msra.mxu0 0.0
        %2330 = vmatprep.subr.mxu0 0.0
        %2331 = vmatpush1.xpose.msra.mxu0 0.0
        %2332 = vmatprep.subr.mxu0 0.0
        %2333 = vmatpush1.xpose.msra.mxu0 0.0
        %2334 = vmatprep.subr.mxu0 0.0
        %2335 = vmatpush1.xpose.msra.mxu0 0.0
        %2336 = vmatprep.subr.mxu0 0.0
        %2337 = vmatpush1.xpose.msra.mxu0 0.0
        %2338 = vmatprep.subr.mxu0 0.0
        %2339 = vmatpush1.xpose.msra.mxu0 0.0
        %2340 = vmatprep.subr.mxu0 0.0
        %2341 = vmatpush1.xpose.msra.mxu0 0.0
        %2342 = vmatprep.subr.mxu0 0.0
        %2343 = vmatpush1.xpose.msra.mxu0 0.0
        %2344 = vmatprep.subr.mxu0 0.0
        %2345 = vmatpush1.xpose.msra.mxu0 0.0
        %2346 = vmatprep.subr.mxu0 0.0
        %2347 = vmatpush1.xpose.msra.mxu0 0.0
        %2348 = vmatprep.subr.mxu0 0.0
        %2349 = vmatpush1.xpose.msra.mxu0 0.0
        %2350 = vmatprep.subr.mxu0 0.0
        %2351 = vmatpush1.xpose.msra.mxu0 0.0
        %2352 = vmatprep.subr.mxu0 0.0
        %2353 = vmatpush1.xpose.msra.mxu0 0.0
        %2354 = vmatprep.subr.mxu0 0.0
        %2355 = vmatpush1.xpose.msra.mxu0 0.0
        %2356 = vmatprep.subr.mxu0 0.0
        %2357 = vmatpush1.xpose.msra.mxu0 0.0
        %2358 = vmatprep.subr.mxu0 0.0
        %2359 = vmatpush1.xpose.msra.mxu0 0.0
        %2360 = vmatprep.subr.mxu0 0.0
        %2361 = vmatpush1.xpose.msra.mxu0 0.0
        %2362 = vmatprep.subr.mxu0 0.0
        %2363 = vmatpush1.xpose.msra.mxu0 0.0
        %2364 = vmatprep.subr.mxu0 0.0
        %2365 = vmatpush1.xpose.msra.mxu0 0.0
        %2366 = vmatprep.subr.mxu0 0.0
        %2367 = vmatpush1.xpose.msra.mxu0 0.0
        %2368 = vmatprep.subr.mxu0 0.0
        %2369 = vmatpush1.xpose.msra.mxu0 0.0
        %2370 = vmatprep.subr.mxu0 0.0
        %2371 = vmatpush1.xpose.msra.mxu0 0.0
        %2372 = vmatprep.subr.mxu0 0.0
        %2373 = vmatpush1.xpose.msra.mxu0 0.0
        %2374 = vmatprep.subr.mxu0 0.0
        %2375 = vmatpush1.xpose.msra.mxu0 0.0
        %2376 = vmatprep.subr.mxu0 0.0
        %2377 = vmatpush1.xpose.msra.mxu0 0.0
        %2378 = vmatprep.mubr.f32.mxu0 0.0
        %2379 = vmatmul.mubr.f32.gmra.mrb[0].mxu0 %v2309
        %v2380 = vpop.f32.mrb[0].mxu0
        %v2381 = vadd.f32 0.0, %v2380
        %v2382 = vpop.f32.mrb[0].mxu0
        %2383 = vdwg.mxu0
        %v2384 = vmul.f32 %v2381, 0.35355338
        %v2385 = vsel %vm1131, 1, 0
        %v2386 = vlaneseq
        %v2387 = vshrl.u32 %v2386, 7
        %v2388 = vsub.s32 0, %v2387
        %v2389 = vrot.slane %v2385, %v2388
        %vm2390 = vcmp.eq.s32.totalorder %v2389, 1
        %v2391 = vsel %vm2390, %v2384, -1e+09
        %v2392 = vsel %vm1314, %v2391, -inf
        %2393 = vmax.xlane.f32.xlu0 %v2392
        %v2394 = vpop.xlane.xlu0 %2393
        %v2395 = vsub.f32 %v2391, %v2394
        %v2396 = vmul.f32 %v2395, 1.442695
        %v2397 = vpow.pop %v2396
        %v2398 = vsel %vm1314, %v2397, 0.0
        %2399 = vadd.xlane.f32.xlu0 %v2398
        %v2400 = vpop.xlane.xlu0 %2399
        %v2401 = vrcp.pop %v2400
        %v2402 = vmul.f32 %v2397, %v2401
        %2403 = vrot.lane.b32.xlu0 %v2305, 96
        %v2404 = vpop.permute.xlu0 %2403
        %v2407 = vsel %vm1314, %v2402, 0
        %2409 = vmatprep.subr.mxu0 0.0
        %2410 = vmatpush1.msra.mxu0 %v2404
        %2411 = vmatprep.subr.mxu0 0.0
        %2412 = vmatpush1.msra.mxu0 0.0
        %2413 = vmatprep.subr.mxu0 0.0
        %2414 = vmatpush1.msra.mxu0 0.0
        %2415 = vmatprep.subr.mxu0 0.0
        %2416 = vmatpush1.msra.mxu0 0.0
        %2417 = vmatprep.subr.mxu0 0.0
        %2418 = vmatpush1.msra.mxu0 0.0
        %2419 = vmatprep.subr.mxu0 0.0
        %2420 = vmatpush1.msra.mxu0 0.0
        %2421 = vmatprep.subr.mxu0 0.0
        %2422 = vmatpush1.msra.mxu0 0.0
        %2423 = vmatprep.subr.mxu0 0.0
        %2424 = vmatpush1.msra.mxu0 0.0
        %2425 = vmatprep.subr.mxu0 0.0
        %2426 = vmatpush1.msra.mxu0 0.0
        %2427 = vmatprep.subr.mxu0 0.0
        %2428 = vmatpush1.msra.mxu0 0.0
        %2429 = vmatprep.subr.mxu0 0.0
        %2430 = vmatpush1.msra.mxu0 0.0
        %2431 = vmatprep.subr.mxu0 0.0
        %2432 = vmatpush1.msra.mxu0 0.0
        %2433 = vmatprep.subr.mxu0 0.0
        %2434 = vmatpush1.msra.mxu0 0.0
        %2435 = vmatprep.subr.mxu0 0.0
        %2436 = vmatpush1.msra.mxu0 0.0
        %2437 = vmatprep.subr.mxu0 0.0
        %2438 = vmatpush1.msra.mxu0 0.0
        %2439 = vmatprep.subr.mxu0 0.0
        %2440 = vmatpush1.msra.mxu0 0.0
        %2441 = vmatprep.subr.mxu0 0.0
        %2442 = vmatpush1.msra.mxu0 0.0
        %2443 = vmatprep.subr.mxu0 0.0
        %2444 = vmatpush1.msra.mxu0 0.0
        %2445 = vmatprep.subr.mxu0 0.0
        %2446 = vmatpush1.msra.mxu0 0.0
        %2447 = vmatprep.subr.mxu0 0.0
        %2448 = vmatpush1.msra.mxu0 0.0
        %2449 = vmatprep.subr.mxu0 0.0
        %2450 = vmatpush1.msra.mxu0 0.0
        %2451 = vmatprep.subr.mxu0 0.0
        %2452 = vmatpush1.msra.mxu0 0.0
        %2453 = vmatprep.subr.mxu0 0.0
        %2454 = vmatpush1.msra.mxu0 0.0
        %2455 = vmatprep.subr.mxu0 0.0
        %2456 = vmatpush1.msra.mxu0 0.0
        %2457 = vmatprep.subr.mxu0 0.0
        %2458 = vmatpush1.msra.mxu0 0.0
        %2459 = vmatprep.subr.mxu0 0.0
        %2460 = vmatpush1.msra.mxu0 0.0
        %2461 = vmatprep.subr.mxu0 0.0
        %2462 = vmatpush1.msra.mxu0 0.0
        %2463 = vmatprep.subr.mxu0 0.0
        %2464 = vmatpush1.msra.mxu0 0.0
        %2465 = vmatprep.subr.mxu0 0.0
        %2466 = vmatpush1.msra.mxu0 0.0
        %2467 = vmatprep.subr.mxu0 0.0
        %2468 = vmatpush1.msra.mxu0 0.0
        %2469 = vmatprep.subr.mxu0 0.0
        %2470 = vmatpush1.msra.mxu0 0.0
        %2471 = vmatprep.subr.mxu0 0.0
        %2472 = vmatpush1.msra.mxu0 0.0
        %2473 = vmatprep.mubr.f32.mxu0 0.0
        %2474 = vmatmul.mubr.f32.gmra.mrb[0].mxu0 %v2407
        %v2475 = vpop.f32.mrb[0].mxu0
        %v2476 = vadd.f32 0.0, %v2475
        %v2477 = vpop.f32.mrb[0].mxu0
        %2478 = vdwg.mxu0
        %2479 = vrot.lane.b32.xlu0 %v2226, 120
        %v2480 = vpop.permute.xlu0 %2479
        %2481 = vrot.lane.b32.xlu0 %v2305, 120
        %v2482 = vpop.permute.xlu0 %2481
        %v2483 = vsel %vm1314, %v2480, 0
        %v2485 = vsel %vm1314, %v2482, 0
        %2487 = vmatprep.subr.mxu0 0.0
        %2488 = vmatpush1.xpose.msra.mxu0 %v2485
        %2489 = vmatprep.subr.mxu0 0.0
        %2490 = vmatpush1.xpose.msra.mxu0 0.0
        %2491 = vmatprep.subr.mxu0 0.0
        %2492 = vmatpush1.xpose.msra.mxu0 0.0
        %2493 = vmatprep.subr.mxu0 0.0
        %2494 = vmatpush1.xpose.msra.mxu0 0.0
        %2495 = vmatprep.subr.mxu0 0.0
        %2496 = vmatpush1.xpose.msra.mxu0 0.0
        %2497 = vmatprep.subr.mxu0 0.0
        %2498 = vmatpush1.xpose.msra.mxu0 0.0
        %2499 = vmatprep.subr.mxu0 0.0
        %2500 = vmatpush1.xpose.msra.mxu0 0.0
        %2501 = vmatprep.subr.mxu0 0.0
        %2502 = vmatpush1.xpose.msra.mxu0 0.0
        %2503 = vmatprep.subr.mxu0 0.0
        %2504 = vmatpush1.xpose.msra.mxu0 0.0
        %2505 = vmatprep.subr.mxu0 0.0
        %2506 = vmatpush1.xpose.msra.mxu0 0.0
        %2507 = vmatprep.subr.mxu0 0.0
        %2508 = vmatpush1.xpose.msra.mxu0 0.0
        %2509 = vmatprep.subr.mxu0 0.0
        %2510 = vmatpush1.xpose.msra.mxu0 0.0
        %2511 = vmatprep.subr.mxu0 0.0
        %2512 = vmatpush1.xpose.msra.mxu0 0.0
        %2513 = vmatprep.subr.mxu0 0.0
        %2514 = vmatpush1.xpose.msra.mxu0 0.0
        %2515 = vmatprep.subr.mxu0 0.0
        %2516 = vmatpush1.xpose.msra.mxu0 0.0
        %2517 = vmatprep.subr.mxu0 0.0
        %2518 = vmatpush1.xpose.msra.mxu0 0.0
        %2519 = vmatprep.subr.mxu0 0.0
        %2520 = vmatpush1.xpose.msra.mxu0 0.0
        %2521 = vmatprep.subr.mxu0 0.0
        %2522 = vmatpush1.xpose.msra.mxu0 0.0
        %2523 = vmatprep.subr.mxu0 0.0
        %2524 = vmatpush1.xpose.msra.mxu0 0.0
        %2525 = vmatprep.subr.mxu0 0.0
        %2526 = vmatpush1.xpose.msra.mxu0 0.0
        %2527 = vmatprep.subr.mxu0 0.0
        %2528 = vmatpush1.xpose.msra.mxu0 0.0
        %2529 = vmatprep.subr.mxu0 0.0
        %2530 = vmatpush1.xpose.msra.mxu0 0.0
        %2531 = vmatprep.subr.mxu0 0.0
        %2532 = vmatpush1.xpose.msra.mxu0 0.0
        %2533 = vmatprep.subr.mxu0 0.0
        %2534 = vmatpush1.xpose.msra.mxu0 0.0
        %2535 = vmatprep.subr.mxu0 0.0
        %2536 = vmatpush1.xpose.msra.mxu0 0.0
        %2537 = vmatprep.subr.mxu0 0.0
        %2538 = vmatpush1.xpose.msra.mxu0 0.0
        %2539 = vmatprep.subr.mxu0 0.0
        %2540 = vmatpush1.xpose.msra.mxu0 0.0
        %2541 = vmatprep.subr.mxu0 0.0
        %2542 = vmatpush1.xpose.msra.mxu0 0.0
        %2543 = vmatprep.subr.mxu0 0.0
        %2544 = vmatpush1.xpose.msra.mxu0 0.0
        %2545 = vmatprep.subr.mxu0 0.0
        %2546 = vmatpush1.xpose.msra.mxu0 0.0
        %2547 = vmatprep.subr.mxu0 0.0
        %2548 = vmatpush1.xpose.msra.mxu0 0.0
        %2549 = vmatprep.subr.mxu0 0.0
        %2550 = vmatpush1.xpose.msra.mxu0 0.0
        %2551 = vmatprep.mubr.f32.mxu0 0.0
        %2552 = vmatmul.mubr.f32.gmra.mrb[0].mxu0 %v2483
        %v2553 = vpop.f32.mrb[0].mxu0
        %v2554 = vadd.f32 0.0, %v2553
        %v2555 = vpop.f32.mrb[0].mxu0
        %2556 = vdwg.mxu0
        %v2557 = vmul.f32 %v2554, 0.35355338
        %v2558 = vsel %vm2390, %v2557, -1e+09
        %v2559 = vsel %vm1314, %v2558, -inf
        %2560 = vmax.xlane.f32.xlu0 %v2559
        %v2561 = vpop.xlane.xlu0 %2560
        %v2562 = vsub.f32 %v2558, %v2561
        %v2563 = vmul.f32 %v2562, 1.442695
        %v2564 = vpow.pop %v2563
        %v2565 = vsel %vm1314, %v2564, 0.0
        %2566 = vadd.xlane.f32.xlu0 %v2565
        %v2567 = vpop.xlane.xlu0 %2566
        %v2568 = vrcp.pop %v2567
        %v2569 = vmul.f32 %v2564, %v2568
        %2570 = vrot.lane.b32.xlu0 %v2305, 88
        %v2571 = vpop.permute.xlu0 %2570
        %v2574 = vsel %vm1314, %v2569, 0
        %2576 = vmatprep.subr.mxu0 0.0
        %2577 = vmatpush1.msra.mxu0 %v2571
        %2578 = vmatprep.subr.mxu0 0.0
        %2579 = vmatpush1.msra.mxu0 0.0
        %2580 = vmatprep.subr.mxu0 0.0
        %2581 = vmatpush1.msra.mxu0 0.0
        %2582 = vmatprep.subr.mxu0 0.0
        %2583 = vmatpush1.msra.mxu0 0.0
        %2584 = vmatprep.subr.mxu0 0.0
        %2585 = vmatpush1.msra.mxu0 0.0
        %2586 = vmatprep.subr.mxu0 0.0
        %2587 = vmatpush1.msra.mxu0 0.0
        %2588 = vmatprep.subr.mxu0 0.0
        %2589 = vmatpush1.msra.mxu0 0.0
        %2590 = vmatprep.subr.mxu0 0.0
        %2591 = vmatpush1.msra.mxu0 0.0
        %2592 = vmatprep.subr.mxu0 0.0
        %2593 = vmatpush1.msra.mxu0 0.0
        %2594 = vmatprep.subr.mxu0 0.0
        %2595 = vmatpush1.msra.mxu0 0.0
        %2596 = vmatprep.subr.mxu0 0.0
        %2597 = vmatpush1.msra.mxu0 0.0
        %2598 = vmatprep.subr.mxu0 0.0
        %2599 = vmatpush1.msra.mxu0 0.0
        %2600 = vmatprep.subr.mxu0 0.0
        %2601 = vmatpush1.msra.mxu0 0.0
        %2602 = vmatprep.subr.mxu0 0.0
        %2603 = vmatpush1.msra.mxu0 0.0
        %2604 = vmatprep.subr.mxu0 0.0
        %2605 = vmatpush1.msra.mxu0 0.0
        %2606 = vmatprep.subr.mxu0 0.0
        %2607 = vmatpush1.msra.mxu0 0.0
        %2608 = vmatprep.subr.mxu0 0.0
        %2609 = vmatpush1.msra.mxu0 0.0
        %2610 = vmatprep.subr.mxu0 0.0
        %2611 = vmatpush1.msra.mxu0 0.0
        %2612 = vmatprep.subr.mxu0 0.0
        %2613 = vmatpush1.msra.mxu0 0.0
        %2614 = vmatprep.subr.mxu0 0.0
        %2615 = vmatpush1.msra.mxu0 0.0
        %2616 = vmatprep.subr.mxu0 0.0
        %2617 = vmatpush1.msra.mxu0 0.0
        %2618 = vmatprep.subr.mxu0 0.0
        %2619 = vmatpush1.msra.mxu0 0.0
        %2620 = vmatprep.subr.mxu0 0.0
        %2621 = vmatpush1.msra.mxu0 0.0
        %2622 = vmatprep.subr.mxu0 0.0
        %2623 = vmatpush1.msra.mxu0 0.0
        %2624 = vmatprep.subr.mxu0 0.0
        %2625 = vmatpush1.msra.mxu0 0.0
        %2626 = vmatprep.subr.mxu0 0.0
        %2627 = vmatpush1.msra.mxu0 0.0
        %2628 = vmatprep.subr.mxu0 0.0
        %2629 = vmatpush1.msra.mxu0 0.0
        %2630 = vmatprep.subr.mxu0 0.0
        %2631 = vmatpush1.msra.mxu0 0.0
        %2632 = vmatprep.subr.mxu0 0.0
        %2633 = vmatpush1.msra.mxu0 0.0
        %2634 = vmatprep.subr.mxu0 0.0
        %2635 = vmatpush1.msra.mxu0 0.0
        %2636 = vmatprep.subr.mxu0 0.0
        %2637 = vmatpush1.msra.mxu0 0.0
        %2638 = vmatprep.subr.mxu0 0.0
        %2639 = vmatpush1.msra.mxu0 0.0
        %2640 = vmatprep.mubr.f32.mxu0 0.0
        %2641 = vmatmul.mubr.f32.gmra.mrb[0].mxu0 %v2574
        %v2642 = vpop.f32.mrb[0].mxu0
        %v2643 = vadd.f32 0.0, %v2642
        %v2644 = vpop.f32.mrb[0].mxu0
        %2645 = vdwg.mxu0
        %2646 = vrot.lane.b32.xlu0 %v2226, 112
        %v2647 = vpop.permute.xlu0 %2646
        %2648 = vrot.lane.b32.xlu0 %v2305, 112
        %v2649 = vpop.permute.xlu0 %2648
        %v2650 = vsel %vm1314, %v2647, 0
        %v2652 = vsel %vm1314, %v2649, 0
        %2654 = vmatprep.subr.mxu0 0.0
        %2655 = vmatpush1.xpose.msra.mxu0 %v2652
        %2656 = vmatprep.subr.mxu0 0.0
        %2657 = vmatpush1.xpose.msra.mxu0 0.0
        %2658 = vmatprep.subr.mxu0 0.0
        %2659 = vmatpush1.xpose.msra.mxu0 0.0
        %2660 = vmatprep.subr.mxu0 0.0
        %2661 = vmatpush1.xpose.msra.mxu0 0.0
        %2662 = vmatprep.subr.mxu0 0.0
        %2663 = vmatpush1.xpose.msra.mxu0 0.0
        %2664 = vmatprep.subr.mxu0 0.0
        %2665 = vmatpush1.xpose.msra.mxu0 0.0
        %2666 = vmatprep.subr.mxu0 0.0
        %2667 = vmatpush1.xpose.msra.mxu0 0.0
        %2668 = vmatprep.subr.mxu0 0.0
        %2669 = vmatpush1.xpose.msra.mxu0 0.0
        %2670 = vmatprep.subr.mxu0 0.0
        %2671 = vmatpush1.xpose.msra.mxu0 0.0
        %2672 = vmatprep.subr.mxu0 0.0
        %2673 = vmatpush1.xpose.msra.mxu0 0.0
        %2674 = vmatprep.subr.mxu0 0.0
        %2675 = vmatpush1.xpose.msra.mxu0 0.0
        %2676 = vmatprep.subr.mxu0 0.0
        %2677 = vmatpush1.xpose.msra.mxu0 0.0
        %2678 = vmatprep.subr.mxu0 0.0
        %2679 = vmatpush1.xpose.msra.mxu0 0.0
        %2680 = vmatprep.subr.mxu0 0.0
        %2681 = vmatpush1.xpose.msra.mxu0 0.0
        %2682 = vmatprep.subr.mxu0 0.0
        %2683 = vmatpush1.xpose.msra.mxu0 0.0
        %2684 = vmatprep.subr.mxu0 0.0
        %2685 = vmatpush1.xpose.msra.mxu0 0.0
        %2686 = vmatprep.subr.mxu0 0.0
        %2687 = vmatpush1.xpose.msra.mxu0 0.0
        %2688 = vmatprep.subr.mxu0 0.0
        %2689 = vmatpush1.xpose.msra.mxu0 0.0
        %2690 = vmatprep.subr.mxu0 0.0
        %2691 = vmatpush1.xpose.msra.mxu0 0.0
        %2692 = vmatprep.subr.mxu0 0.0
        %2693 = vmatpush1.xpose.msra.mxu0 0.0
        %2694 = vmatprep.subr.mxu0 0.0
        %2695 = vmatpush1.xpose.msra.mxu0 0.0
        %2696 = vmatprep.subr.mxu0 0.0
        %2697 = vmatpush1.xpose.msra.mxu0 0.0
        %2698 = vmatprep.subr.mxu0 0.0
        %2699 = vmatpush1.xpose.msra.mxu0 0.0
        %2700 = vmatprep.subr.mxu0 0.0
        %2701 = vmatpush1.xpose.msra.mxu0 0.0
        %2702 = vmatprep.subr.mxu0 0.0
        %2703 = vmatpush1.xpose.msra.mxu0 0.0
        %2704 = vmatprep.subr.mxu0 0.0
        %2705 = vmatpush1.xpose.msra.mxu0 0.0
        %2706 = vmatprep.subr.mxu0 0.0
        %2707 = vmatpush1.xpose.msra.mxu0 0.0
        %2708 = vmatprep.subr.mxu0 0.0
        %2709 = vmatpush1.xpose.msra.mxu0 0.0
        %2710 = vmatprep.subr.mxu0 0.0
        %2711 = vmatpush1.xpose.msra.mxu0 0.0
        %2712 = vmatprep.subr.mxu0 0.0
        %2713 = vmatpush1.xpose.msra.mxu0 0.0
        %2714 = vmatprep.subr.mxu0 0.0
        %2715 = vmatpush1.xpose.msra.mxu0 0.0
        %2716 = vmatprep.subr.mxu0 0.0
        %2717 = vmatpush1.xpose.msra.mxu0 0.0
        %2718 = vmatprep.mubr.f32.mxu0 0.0
        %2719 = vmatmul.mubr.f32.gmra.mrb[0].mxu0 %v2650
        %v2720 = vpop.f32.mrb[0].mxu0
        %v2721 = vadd.f32 0.0, %v2720
        %v2722 = vpop.f32.mrb[0].mxu0
        %2723 = vdwg.mxu0
        %v2724 = vmul.f32 %v2721, 0.35355338
        %v2725 = vsel %vm2390, %v2724, -1e+09
        %v2726 = vsel %vm1314, %v2725, -inf
        %2727 = vmax.xlane.f32.xlu0 %v2726
        %v2728 = vpop.xlane.xlu0 %2727
        %v2729 = vsub.f32 %v2725, %v2728
        %v2730 = vmul.f32 %v2729, 1.442695
        %v2731 = vpow.pop %v2730
        %v2732 = vsel %vm1314, %v2731, 0.0
        %2733 = vadd.xlane.f32.xlu0 %v2732
        %v2734 = vpop.xlane.xlu0 %2733
        %v2735 = vrcp.pop %v2734
        %v2736 = vmul.f32 %v2731, %v2735
        %2737 = vrot.lane.b32.xlu0 %v2305, 80
        %v2738 = vpop.permute.xlu0 %2737
        %v2741 = vsel %vm1314, %v2736, 0
        %2743 = vmatprep.subr.mxu0 0.0
        %2744 = vmatpush1.msra.mxu0 %v2738
        %2745 = vmatprep.subr.mxu0 0.0
        %2746 = vmatpush1.msra.mxu0 0.0
        %2747 = vmatprep.subr.mxu0 0.0
        %2748 = vmatpush1.msra.mxu0 0.0
        %2749 = vmatprep.subr.mxu0 0.0
        %2750 = vmatpush1.msra.mxu0 0.0
        %2751 = vmatprep.subr.mxu0 0.0
        %2752 = vmatpush1.msra.mxu0 0.0
        %2753 = vmatprep.subr.mxu0 0.0
        %2754 = vmatpush1.msra.mxu0 0.0
        %2755 = vmatprep.subr.mxu0 0.0
        %2756 = vmatpush1.msra.mxu0 0.0
        %2757 = vmatprep.subr.mxu0 0.0
        %2758 = vmatpush1.msra.mxu0 0.0
        %2759 = vmatprep.subr.mxu0 0.0
        %2760 = vmatpush1.msra.mxu0 0.0
        %2761 = vmatprep.subr.mxu0 0.0
        %2762 = vmatpush1.msra.mxu0 0.0
        %2763 = vmatprep.subr.mxu0 0.0
        %2764 = vmatpush1.msra.mxu0 0.0
        %2765 = vmatprep.subr.mxu0 0.0
        %2766 = vmatpush1.msra.mxu0 0.0
        %2767 = vmatprep.subr.mxu0 0.0
        %2768 = vmatpush1.msra.mxu0 0.0
        %2769 = vmatprep.subr.mxu0 0.0
        %2770 = vmatpush1.msra.mxu0 0.0
        %2771 = vmatprep.subr.mxu0 0.0
        %2772 = vmatpush1.msra.mxu0 0.0
        %2773 = vmatprep.subr.mxu0 0.0
        %2774 = vmatpush1.msra.mxu0 0.0
        %2775 = vmatprep.subr.mxu0 0.0
        %2776 = vmatpush1.msra.mxu0 0.0
        %2777 = vmatprep.subr.mxu0 0.0
        %2778 = vmatpush1.msra.mxu0 0.0
        %2779 = vmatprep.subr.mxu0 0.0
        %2780 = vmatpush1.msra.mxu0 0.0
        %2781 = vmatprep.subr.mxu0 0.0
        %2782 = vmatpush1.msra.mxu0 0.0
        %2783 = vmatprep.subr.mxu0 0.0
        %2784 = vmatpush1.msra.mxu0 0.0
        %2785 = vmatprep.subr.mxu0 0.0
        %2786 = vmatpush1.msra.mxu0 0.0
        %2787 = vmatprep.subr.mxu0 0.0
        %2788 = vmatpush1.msra.mxu0 0.0
        %2789 = vmatprep.subr.mxu0 0.0
        %2790 = vmatpush1.msra.mxu0 0.0
        %2791 = vmatprep.subr.mxu0 0.0
        %2792 = vmatpush1.msra.mxu0 0.0
        %2793 = vmatprep.subr.mxu0 0.0
        %2794 = vmatpush1.msra.mxu0 0.0
        %2795 = vmatprep.subr.mxu0 0.0
        %2796 = vmatpush1.msra.mxu0 0.0
        %2797 = vmatprep.subr.mxu0 0.0
        %2798 = vmatpush1.msra.mxu0 0.0
        %2799 = vmatprep.subr.mxu0 0.0
        %2800 = vmatpush1.msra.mxu0 0.0
        %2801 = vmatprep.subr.mxu0 0.0
        %2802 = vmatpush1.msra.mxu0 0.0
        %2803 = vmatprep.subr.mxu0 0.0
        %2804 = vmatpush1.msra.mxu0 0.0
        %2805 = vmatprep.subr.mxu0 0.0
        %2806 = vmatpush1.msra.mxu0 0.0
        %2807 = vmatprep.mubr.f32.mxu0 0.0
        %2808 = vmatmul.mubr.f32.gmra.mrb[0].mxu0 %v2741
        %v2809 = vpop.f32.mrb[0].mxu0
        %v2810 = vadd.f32 0.0, %v2809
        %v2811 = vpop.f32.mrb[0].mxu0
        %2812 = vdwg.mxu0
        %2813 = vrot.lane.b32.xlu0 %v2226, 104
        %v2814 = vpop.permute.xlu0 %2813
        %2815 = vrot.lane.b32.xlu0 %v2305, 104
        %v2816 = vpop.permute.xlu0 %2815
        %v2817 = vsel %vm1314, %v2814, 0
        %v2819 = vsel %vm1314, %v2816, 0
        %2821 = vmatprep.subr.mxu0 0.0
        %2822 = vmatpush1.xpose.msra.mxu0 %v2819
        %2823 = vmatprep.subr.mxu0 0.0
        %2824 = vmatpush1.xpose.msra.mxu0 0.0
        %2825 = vmatprep.subr.mxu0 0.0
        %2826 = vmatpush1.xpose.msra.mxu0 0.0
        %2827 = vmatprep.subr.mxu0 0.0
        %2828 = vmatpush1.xpose.msra.mxu0 0.0
        %2829 = vmatprep.subr.mxu0 0.0
        %2830 = vmatpush1.xpose.msra.mxu0 0.0
        %2831 = vmatprep.subr.mxu0 0.0
        %2832 = vmatpush1.xpose.msra.mxu0 0.0
        %2833 = vmatprep.subr.mxu0 0.0
        %2834 = vmatpush1.xpose.msra.mxu0 0.0
        %2835 = vmatprep.subr.mxu0 0.0
        %2836 = vmatpush1.xpose.msra.mxu0 0.0
        %2837 = vmatprep.subr.mxu0 0.0
        %2838 = vmatpush1.xpose.msra.mxu0 0.0
        %2839 = vmatprep.subr.mxu0 0.0
        %2840 = vmatpush1.xpose.msra.mxu0 0.0
        %2841 = vmatprep.subr.mxu0 0.0
        %2842 = vmatpush1.xpose.msra.mxu0 0.0
        %2843 = vmatprep.subr.mxu0 0.0
        %2844 = vmatpush1.xpose.msra.mxu0 0.0
        %2845 = vmatprep.subr.mxu0 0.0
        %2846 = vmatpush1.xpose.msra.mxu0 0.0
        %2847 = vmatprep.subr.mxu0 0.0
        %2848 = vmatpush1.xpose.msra.mxu0 0.0
        %2849 = vmatprep.subr.mxu0 0.0
        %2850 = vmatpush1.xpose.msra.mxu0 0.0
        %2851 = vmatprep.subr.mxu0 0.0
        %2852 = vmatpush1.xpose.msra.mxu0 0.0
        %2853 = vmatprep.subr.mxu0 0.0
        %2854 = vmatpush1.xpose.msra.mxu0 0.0
        %2855 = vmatprep.subr.mxu0 0.0
        %2856 = vmatpush1.xpose.msra.mxu0 0.0
        %2857 = vmatprep.subr.mxu0 0.0
        %2858 = vmatpush1.xpose.msra.mxu0 0.0
        %2859 = vmatprep.subr.mxu0 0.0
        %2860 = vmatpush1.xpose.msra.mxu0 0.0
        %2861 = vmatprep.subr.mxu0 0.0
        %2862 = vmatpush1.xpose.msra.mxu0 0.0
        %2863 = vmatprep.subr.mxu0 0.0
        %2864 = vmatpush1.xpose.msra.mxu0 0.0
        %2865 = vmatprep.subr.mxu0 0.0
        %2866 = vmatpush1.xpose.msra.mxu0 0.0
        %2867 = vmatprep.subr.mxu0 0.0
        %2868 = vmatpush1.xpose.msra.mxu0 0.0
        %2869 = vmatprep.subr.mxu0 0.0
        %2870 = vmatpush1.xpose.msra.mxu0 0.0
        %2871 = vmatprep.subr.mxu0 0.0
        %2872 = vmatpush1.xpose.msra.mxu0 0.0
        %2873 = vmatprep.subr.mxu0 0.0
        %2874 = vmatpush1.xpose.msra.mxu0 0.0
        %2875 = vmatprep.subr.mxu0 0.0
        %2876 = vmatpush1.xpose.msra.mxu0 0.0
        %2877 = vmatprep.subr.mxu0 0.0
        %2878 = vmatpush1.xpose.msra.mxu0 0.0
        %2879 = vmatprep.subr.mxu0 0.0
        %2880 = vmatpush1.xpose.msra.mxu0 0.0
        %2881 = vmatprep.subr.mxu0 0.0
        %2882 = vmatpush1.xpose.msra.mxu0 0.0
        %2883 = vmatprep.subr.mxu0 0.0
        %2884 = vmatpush1.xpose.msra.mxu0 0.0
        %2885 = vmatprep.mubr.f32.mxu0 0.0
        %2886 = vmatmul.mubr.f32.gmra.mrb[0].mxu0 %v2817
        %v2887 = vpop.f32.mrb[0].mxu0
        %v2888 = vadd.f32 0.0, %v2887
        %v2889 = vpop.f32.mrb[0].mxu0
        %2890 = vdwg.mxu0
        %v2891 = vmul.f32 %v2888, 0.35355338
        %v2892 = vsel %vm2390, %v2891, -1e+09
        %v2893 = vsel %vm1314, %v2892, -inf
        %2894 = vmax.xlane.f32.xlu0 %v2893
        %v2895 = vpop.xlane.xlu0 %2894
        %v2896 = vsub.f32 %v2892, %v2895
        %v2897 = vmul.f32 %v2896, 1.442695
        %v2898 = vpow.pop %v2897
        %v2899 = vsel %vm1314, %v2898, 0.0
        %2900 = vadd.xlane.f32.xlu0 %v2899
        %v2901 = vpop.xlane.xlu0 %2900
        %v2902 = vrcp.pop %v2901
        %v2903 = vmul.f32 %v2898, %v2902
        %2904 = vrot.lane.b32.xlu0 %v2305, 72
        %v2905 = vpop.permute.xlu0 %2904
        %v2908 = vsel %vm1314, %v2903, 0
        %2910 = vmatprep.subr.mxu0 0.0
        %2911 = vmatpush1.msra.mxu0 %v2905
        %2912 = vmatprep.subr.mxu0 0.0
        %2913 = vmatpush1.msra.mxu0 0.0
        %2914 = vmatprep.subr.mxu0 0.0
        %2915 = vmatpush1.msra.mxu0 0.0
        %2916 = vmatprep.subr.mxu0 0.0
        %2917 = vmatpush1.msra.mxu0 0.0
        %2918 = vmatprep.subr.mxu0 0.0
        %2919 = vmatpush1.msra.mxu0 0.0
        %2920 = vmatprep.subr.mxu0 0.0
        %2921 = vmatpush1.msra.mxu0 0.0
        %2922 = vmatprep.subr.mxu0 0.0
        %2923 = vmatpush1.msra.mxu0 0.0
        %2924 = vmatprep.subr.mxu0 0.0
        %2925 = vmatpush1.msra.mxu0 0.0
        %2926 = vmatprep.subr.mxu0 0.0
        %2927 = vmatpush1.msra.mxu0 0.0
        %2928 = vmatprep.subr.mxu0 0.0
        %2929 = vmatpush1.msra.mxu0 0.0
        %2930 = vmatprep.subr.mxu0 0.0
        %2931 = vmatpush1.msra.mxu0 0.0
        %2932 = vmatprep.subr.mxu0 0.0
        %2933 = vmatpush1.msra.mxu0 0.0
        %2934 = vmatprep.subr.mxu0 0.0
        %2935 = vmatpush1.msra.mxu0 0.0
        %2936 = vmatprep.subr.mxu0 0.0
        %2937 = vmatpush1.msra.mxu0 0.0
        %2938 = vmatprep.subr.mxu0 0.0
        %2939 = vmatpush1.msra.mxu0 0.0
        %2940 = vmatprep.subr.mxu0 0.0
        %2941 = vmatpush1.msra.mxu0 0.0
        %2942 = vmatprep.subr.mxu0 0.0
        %2943 = vmatpush1.msra.mxu0 0.0
        %2944 = vmatprep.subr.mxu0 0.0
        %2945 = vmatpush1.msra.mxu0 0.0
        %2946 = vmatprep.subr.mxu0 0.0
        %2947 = vmatpush1.msra.mxu0 0.0
        %2948 = vmatprep.subr.mxu0 0.0
        %2949 = vmatpush1.msra.mxu0 0.0
        %2950 = vmatprep.subr.mxu0 0.0
        %2951 = vmatpush1.msra.mxu0 0.0
        %2952 = vmatprep.subr.mxu0 0.0
        %2953 = vmatpush1.msra.mxu0 0.0
        %2954 = vmatprep.subr.mxu0 0.0
        %2955 = vmatpush1.msra.mxu0 0.0
        %2956 = vmatprep.subr.mxu0 0.0
        %2957 = vmatpush1.msra.mxu0 0.0
        %2958 = vmatprep.subr.mxu0 0.0
        %2959 = vmatpush1.msra.mxu0 0.0
        %2960 = vmatprep.subr.mxu0 0.0
        %2961 = vmatpush1.msra.mxu0 0.0
        %2962 = vmatprep.subr.mxu0 0.0
        %2963 = vmatpush1.msra.mxu0 0.0
        %2964 = vmatprep.subr.mxu0 0.0
        %2965 = vmatpush1.msra.mxu0 0.0
        %2966 = vmatprep.subr.mxu0 0.0
        %2967 = vmatpush1.msra.mxu0 0.0
        %2968 = vmatprep.subr.mxu0 0.0
        %2969 = vmatpush1.msra.mxu0 0.0
        %2970 = vmatprep.subr.mxu0 0.0
        %2971 = vmatpush1.msra.mxu0 0.0
        %2972 = vmatprep.subr.mxu0 0.0
        %2973 = vmatpush1.msra.mxu0 0.0
        %2974 = vmatprep.mubr.f32.mxu0 0.0
        %2975 = vmatmul.mubr.f32.gmra.mrb[0].mxu0 %v2908
        %v2976 = vpop.f32.mrb[0].mxu0
        %v2977 = vadd.f32 0.0, %v2976
        %v2978 = vpop.f32.mrb[0].mxu0
        %2979 = vdwg.mxu0
        %2981 = vrot.lane.b32.xlu0 %v2643, 8
        %v2982 = vpop.permute.xlu0 %2981
        %2985 = vrot.lane.b32.xlu0 %v2810, 16
        %v2986 = vpop.permute.xlu0 %2985
        %2989 = vrot.lane.b32.xlu0 %v2977, 24
        %v2990 = vpop.permute.xlu0 %2989
        %v2992 = vsel %vm1314, %v2476, %v2982
        %v2993 = vsel %vm1396, %v2992, %v2986
        %v2994 = vsel %vm2023, %v2993, %v2990
        %v2996 = vlaneseq
        %v2997 = vshrl.u32 %v2996, 7
        %v2998 = vsub.s32 0, %v2997
        %v2999 = vrot.slane %v2149, %v2998
        %v3002 = vsel %vm1153, %v2994, 0
        %3004 = vmatprep.subr.mxu0 0.0
        %3005 = vmatpush1.msra.mxu0 %v2145
        %3006 = vmatprep.subr.mxu0 0.0
        %3007 = vmatpush1.msra.mxu0 %v2146
        %3008 = vmatprep.subr.mxu0 0.0
        %3009 = vmatpush1.msra.mxu0 %v2147
        %3010 = vmatprep.subr.mxu0 0.0
        %3011 = vmatpush1.msra.mxu0 %v2148
        %3012 = vmatprep.subr.mxu0 0.0
        %3013 = vmatpush1.msra.mxu0 0.0
        %3014 = vmatprep.subr.mxu0 0.0
        %3015 = vmatpush1.msra.mxu0 0.0
        %3016 = vmatprep.subr.mxu0 0.0
        %3017 = vmatpush1.msra.mxu0 0.0
        %3018 = vmatprep.subr.mxu0 0.0
        %3019 = vmatpush1.msra.mxu0 0.0
        %3020 = vmatprep.subr.mxu0 0.0
        %3021 = vmatpush1.msra.mxu0 0.0
        %3022 = vmatprep.subr.mxu0 0.0
        %3023 = vmatpush1.msra.mxu0 0.0
        %3024 = vmatprep.subr.mxu0 0.0
        %3025 = vmatpush1.msra.mxu0 0.0
        %3026 = vmatprep.subr.mxu0 0.0
        %3027 = vmatpush1.msra.mxu0 0.0
        %3028 = vmatprep.subr.mxu0 0.0
        %3029 = vmatpush1.msra.mxu0 0.0
        %3030 = vmatprep.subr.mxu0 0.0
        %3031 = vmatpush1.msra.mxu0 0.0
        %3032 = vmatprep.subr.mxu0 0.0
        %3033 = vmatpush1.msra.mxu0 0.0
        %3034 = vmatprep.subr.mxu0 0.0
        %3035 = vmatpush1.msra.mxu0 0.0
        %3036 = vmatprep.subr.mxu0 0.0
        %3037 = vmatpush1.msra.mxu0 0.0
        %3038 = vmatprep.subr.mxu0 0.0
        %3039 = vmatpush1.msra.mxu0 0.0
        %3040 = vmatprep.subr.mxu0 0.0
        %3041 = vmatpush1.msra.mxu0 0.0
        %3042 = vmatprep.subr.mxu0 0.0
        %3043 = vmatpush1.msra.mxu0 0.0
        %3044 = vmatprep.subr.mxu0 0.0
        %3045 = vmatpush1.msra.mxu0 0.0
        %3046 = vmatprep.subr.mxu0 0.0
        %3047 = vmatpush1.msra.mxu0 0.0
        %3048 = vmatprep.subr.mxu0 0.0
        %3049 = vmatpush1.msra.mxu0 0.0
        %3050 = vmatprep.subr.mxu0 0.0
        %3051 = vmatpush1.msra.mxu0 0.0
        %3052 = vmatprep.subr.mxu0 0.0
        %3053 = vmatpush1.msra.mxu0 0.0
        %3054 = vmatprep.subr.mxu0 0.0
        %3055 = vmatpush1.msra.mxu0 0.0
        %3056 = vmatprep.subr.mxu0 0.0
        %3057 = vmatpush1.msra.mxu0 0.0
        %3058 = vmatprep.subr.mxu0 0.0
        %3059 = vmatpush1.msra.mxu0 0.0
        %3060 = vmatprep.subr.mxu0 0.0
        %3061 = vmatpush1.msra.mxu0 0.0
        %3062 = vmatprep.subr.mxu0 0.0
        %3063 = vmatpush1.msra.mxu0 0.0
        %3064 = vmatprep.subr.mxu0 0.0
        %3065 = vmatpush1.msra.mxu0 0.0
        %3066 = vmatprep.subr.mxu0 0.0
        %3067 = vmatpush1.msra.mxu0 0.0
        %3068 = vmatprep.mubr.f32.mxu0 0.0
        %3069 = vmatmul.mubr.f32.gmra.mrb[0].mxu0 %v3002
        %v3070 = vpop.f32.mrb[0].mxu0
        %v3071 = vadd.f32 %v2999, %v3070
        %v3072 = vpop.f32.mrb[0].mxu0
        %3073 = vdwg.mxu0
        %v3074 = vadd.f32 %v3071, %v2134
        %v3075 = vld [vmem:[%s19] sm:$0x1]
        %v3076 = vld [vmem:[%s20] sm:$0x1]
        %v3077 = vsel %vm1153, %v3074, 0.0
        %3078 = vadd.xlane.f32.xlu0 %v3077
        %v3079 = vpop.xlane.xlu0 %3078
        %v3080 = vmul.f32 %v3079, %v2110
        %v3081 = vsub.f32 %v3074, %v3080
        %v3082 = vmul.f32 %v3081, %v3081
        %v3083 = vsel %vm1153, %v3082, 0.0
        %3084 = vadd.xlane.f32.xlu0 %v3083
        %v3085 = vpop.xlane.xlu0 %3084
        %v3086 = vmul.f32 %v3085, %v2110
        %v3087 = vadd.f32 %v3086, 1e-05
        %v3088 = vrsqrt.pop %v3087
        %v3089 = vmul.f32 %v3081, %v3088
        %v3091 = vlaneseq
        %v3092 = vshrl.u32 %v3091, 7
        %v3093 = vsub.s32 0, %v3092
        %v3094 = vrot.slane %v3075, %v3093
        %v3096 = vmul.f32 %v3089, %v3094
        %v3098 = vlaneseq
        %v3099 = vshrl.u32 %v3098, 7
        %v3100 = vsub.s32 0, %v3099
        %v3101 = vrot.slane %v3076, %v3100
        %v3103 = vadd.f32 %v3096, %v3101
        %v3104 = vld [vmem:[%s23] sm:$0xff]
        %v3105 = vld [vmem:[%s23 + $0x8] sm:$0xff]
        %v3106 = vld [vmem:[%s23 + $0x10] sm:$0xff]
        %v3107 = vld [vmem:[%s23 + $0x18] sm:$0xff]
        %v3108 = vld [vmem:[%s24] sm:$0x1]
        %v3110 = vlaneseq
        %v3111 = vshrl.u32 %v3110, 7
        %v3112 = vsub.s32 0, %v3111
        %v3113 = vrot.slane %v3108, %v3112
        %v3116 = vsel %vm1153, %v3103, 0
        %3118 = vmatprep.subr.mxu0 0.0
        %3119 = vmatpush1.msra.mxu0 %v3104
        %3120 = vmatprep.subr.mxu0 0.0
        %3121 = vmatpush1.msra.mxu0 %v3105
        %3122 = vmatprep.subr.mxu0 0.0
        %3123 = vmatpush1.msra.mxu0 %v3106
        %3124 = vmatprep.subr.mxu0 0.0
        %3125 = vmatpush1.msra.mxu0 %v3107
        %3126 = vmatprep.subr.mxu0 0.0
        %3127 = vmatpush1.msra.mxu0 0.0
        %3128 = vmatprep.subr.mxu0 0.0
        %3129 = vmatpush1.msra.mxu0 0.0
        %3130 = vmatprep.subr.mxu0 0.0
        %3131 = vmatpush1.msra.mxu0 0.0
        %3132 = vmatprep.subr.mxu0 0.0
        %3133 = vmatpush1.msra.mxu0 0.0
        %3134 = vmatprep.subr.mxu0 0.0
        %3135 = vmatpush1.msra.mxu0 0.0
        %3136 = vmatprep.subr.mxu0 0.0
        %3137 = vmatpush1.msra.mxu0 0.0
        %3138 = vmatprep.subr.mxu0 0.0
        %3139 = vmatpush1.msra.mxu0 0.0
        %3140 = vmatprep.subr.mxu0 0.0
        %3141 = vmatpush1.msra.mxu0 0.0
        %3142 = vmatprep.subr.mxu0 0.0
        %3143 = vmatpush1.msra.mxu0 0.0
        %3144 = vmatprep.subr.mxu0 0.0
        %3145 = vmatpush1.msra.mxu0 0.0
        %3146 = vmatprep.subr.mxu0 0.0
        %3147 = vmatpush1.msra.mxu0 0.0
        %3148 = vmatprep.subr.mxu0 0.0
        %3149 = vmatpush1.msra.mxu0 0.0
        %3150 = vmatprep.subr.mxu0 0.0
        %3151 = vmatpush1.msra.mxu0 0.0
        %3152 = vmatprep.subr.mxu0 0.0
        %3153 = vmatpush1.msra.mxu0 0.0
        %3154 = vmatprep.subr.mxu0 0.0
        %3155 = vmatpush1.msra.mxu0 0.0
        %3156 = vmatprep.subr.mxu0 0.0
        %3157 = vmatpush1.msra.mxu0 0.0
        %3158 = vmatprep.subr.mxu0 0.0
        %3159 = vmatpush1.msra.mxu0 0.0
        %3160 = vmatprep.subr.mxu0 0.0
        %3161 = vmatpush1.msra.mxu0 0.0
        %3162 = vmatprep.subr.mxu0 0.0
        %3163 = vmatpush1.msra.mxu0 0.0
        %3164 = vmatprep.subr.mxu0 0.0
        %3165 = vmatpush1.msra.mxu0 0.0
        %3166 = vmatprep.subr.mxu0 0.0
        %3167 = vmatpush1.msra.mxu0 0.0
        %3168 = vmatprep.subr.mxu0 0.0
        %3169 = vmatpush1.msra.mxu0 0.0
        %3170 = vmatprep.subr.mxu0 0.0
        %3171 = vmatpush1.msra.mxu0 0.0
        %3172 = vmatprep.subr.mxu0 0.0
        %3173 = vmatpush1.msra.mxu0 0.0
        %3174 = vmatprep.subr.mxu0 0.0
        %3175 = vmatpush1.msra.mxu0 0.0
        %3176 = vmatprep.subr.mxu0 0.0
        %3177 = vmatpush1.msra.mxu0 0.0
        %3178 = vmatprep.subr.mxu0 0.0
        %3179 = vmatpush1.msra.mxu0 0.0
        %3180 = vmatprep.subr.mxu0 0.0
        %3181 = vmatpush1.msra.mxu0 0.0
        %3182 = vmatprep.mubr.f32.mxu0 0.0
        %3183 = vmatmul.mubr.f32.gmra.mrb[0].mxu0 %v3116
        %v3184 = vpop.f32.mrb[0].mxu0
        %v3185 = vadd.f32 %v3113, %v3184
        %v3186 = vpop.f32.mrb[0].mxu0
        %3187 = vdwg.mxu0
        %v3188 = vmax.f32 %v3185, 0.0
        %v3189 = vld [vmem:[%s25] sm:$0xff]
        %v3190 = vld [vmem:[%s25 + $0x8] sm:$0xff]
        %v3191 = vld [vmem:[%s25 + $0x10] sm:$0xff]
        %v3192 = vld [vmem:[%s25 + $0x18] sm:$0xff]
        %v3193 = vld [vmem:[%s25 + $0x20] sm:$0xff]
        %v3194 = vld [vmem:[%s25 + $0x28] sm:$0xff]
        %v3195 = vld [vmem:[%s25 + $0x30] sm:$0xff]
        %v3196 = vld [vmem:[%s25 + $0x38] sm:$0xff]
        %v3197 = vld [vmem:[%s26] sm:$0x1]
        %v3199 = vlaneseq
        %v3200 = vshrl.u32 %v3199, 7
        %v3201 = vsub.s32 0, %v3200
        %v3202 = vrot.slane %v3197, %v3201
        %vm3204 = vcmask 523264
        %v3206 = vsel %vm3204, %v3188, 0
        %3208 = vmatprep.subr.mxu0 0.0
        %3209 = vmatpush1.msra.mxu0 %v3189
        %3210 = vmatprep.subr.mxu0 0.0
        %3211 = vmatpush1.msra.mxu0 %v3190
        %3212 = vmatprep.subr.mxu0 0.0
        %3213 = vmatpush1.msra.mxu0 %v3191
        %3214 = vmatprep.subr.mxu0 0.0
        %3215 = vmatpush1.msra.mxu0 %v3192
        %3216 = vmatprep.subr.mxu0 0.0
        %3217 = vmatpush1.msra.mxu0 %v3193
        %3218 = vmatprep.subr.mxu0 0.0
        %3219 = vmatpush1.msra.mxu0 %v3194
        %3220 = vmatprep.subr.mxu0 0.0
        %3221 = vmatpush1.msra.mxu0 %v3195
        %3222 = vmatprep.subr.mxu0 0.0
        %3223 = vmatpush1.msra.mxu0 %v3196
        %3224 = vmatprep.subr.mxu0 0.0
        %3225 = vmatpush1.msra.mxu0 0.0
        %3226 = vmatprep.subr.mxu0 0.0
        %3227 = vmatpush1.msra.mxu0 0.0
        %3228 = vmatprep.subr.mxu0 0.0
        %3229 = vmatpush1.msra.mxu0 0.0
        %3230 = vmatprep.subr.mxu0 0.0
        %3231 = vmatpush1.msra.mxu0 0.0
        %3232 = vmatprep.subr.mxu0 0.0
        %3233 = vmatpush1.msra.mxu0 0.0
        %3234 = vmatprep.subr.mxu0 0.0
        %3235 = vmatpush1.msra.mxu0 0.0
        %3236 = vmatprep.subr.mxu0 0.0
        %3237 = vmatpush1.msra.mxu0 0.0
        %3238 = vmatprep.subr.mxu0 0.0
        %3239 = vmatpush1.msra.mxu0 0.0
        %3240 = vmatprep.subr.mxu0 0.0
        %3241 = vmatpush1.msra.mxu0 0.0
        %3242 = vmatprep.subr.mxu0 0.0
        %3243 = vmatpush1.msra.mxu0 0.0
        %3244 = vmatprep.subr.mxu0 0.0
        %3245 = vmatpush1.msra.mxu0 0.0
        %3246 = vmatprep.subr.mxu0 0.0
        %3247 = vmatpush1.msra.mxu0 0.0
        %3248 = vmatprep.subr.mxu0 0.0
        %3249 = vmatpush1.msra.mxu0 0.0
        %3250 = vmatprep.subr.mxu0 0.0
        %3251 = vmatpush1.msra.mxu0 0.0
        %3252 = vmatprep.subr.mxu0 0.0
        %3253 = vmatpush1.msra.mxu0 0.0
        %3254 = vmatprep.subr.mxu0 0.0
        %3255 = vmatpush1.msra.mxu0 0.0
        %3256 = vmatprep.subr.mxu0 0.0
        %3257 = vmatpush1.msra.mxu0 0.0
        %3258 = vmatprep.subr.mxu0 0.0
        %3259 = vmatpush1.msra.mxu0 0.0
        %3260 = vmatprep.subr.mxu0 0.0
        %3261 = vmatpush1.msra.mxu0 0.0
        %3262 = vmatprep.subr.mxu0 0.0
        %3263 = vmatpush1.msra.mxu0 0.0
        %3264 = vmatprep.subr.mxu0 0.0
        %3265 = vmatpush1.msra.mxu0 0.0
        %3266 = vmatprep.subr.mxu0 0.0
        %3267 = vmatpush1.msra.mxu0 0.0
        %3268 = vmatprep.subr.mxu0 0.0
        %3269 = vmatpush1.msra.mxu0 0.0
        %3270 = vmatprep.subr.mxu0 0.0
        %3271 = vmatpush1.msra.mxu0 0.0
        %3272 = vmatprep.mubr.f32.mxu0 0.0
        %3273 = vmatmul.mubr.f32.gmra.mrb[0].mxu0 %v3206
        %v3274 = vpop.f32.mrb[0].mxu0
        %v3275 = vadd.f32 %v3202, %v3274
        %v3276 = vpop.f32.mrb[0].mxu0
        %3277 = vdwg.mxu0
        %v3278 = vadd.f32 %v3275, %v3103
        %v3279 = vld [vmem:[%s21] sm:$0x1]
        %v3280 = vld [vmem:[%s22] sm:$0x1]
        %v3281 = vsel %vm1153, %v3278, 0.0
        %3282 = vadd.xlane.f32.xlu0 %v3281
        %v3283 = vpop.xlane.xlu0 %3282
        %v3284 = vmul.f32 %v3283, %v2110
        %v3285 = vsub.f32 %v3278, %v3284
        %v3286 = vmul.f32 %v3285, %v3285
        %v3287 = vsel %vm1153, %v3286, 0.0
        %3288 = vadd.xlane.f32.xlu0 %v3287
        %v3289 = vpop.xlane.xlu0 %3288
        %v3290 = vmul.f32 %v3289, %v2110
        %v3291 = vadd.f32 %v3290, 1e-05
        %v3292 = vrsqrt.pop %v3291
        %v3293 = vmul.f32 %v3285, %v3292
        %v3295 = vlaneseq
        %v3296 = vshrl.u32 %v3295, 7
        %v3297 = vsub.s32 0, %v3296
        %v3298 = vrot.slane %v3279, %v3297
        %v3300 = vmul.f32 %v3293, %v3298
        %v3302 = vlaneseq
        %v3303 = vshrl.u32 %v3302, 7
        %v3304 = vsub.s32 0, %v3303
        %v3305 = vrot.slane %v3280, %v3304
        %v3307 = vadd.f32 %v3300, %v3305
        %3308 = vst.msk [vmem:[%s1102] sm:$0xff] %vm1153, %v3307
        %s3309 = sand.u32 %s671, 1
        %s3310 = scalar_lea.sflag [#allocation4], %s3309
        %s3311 = sand.u32 %s671, 1
        %s3312 = smul.addr %s3311, 8
        %s3313 = scalar_lea.vmem [#allocation25], %s3312
        // Predicated region
        $region185: #{tpu_custom_call.1} parent=127 // pred_check
          %p3314 = pneg %p681
        $region186: #{tpu_custom_call.1} parent=127 // pred_check_branch
          %3316 = sbr.rel (%p3314) target = $region188
        $region187: #{tpu_custom_call.1} parent=127 // pred_region
          %s3318 = ssub.s32 128, 128
          %3319 = vsyncadd %s3310, %s3318
          %s3320 = smul.addr %s57, 2
          %s3321 = sadd.s32 %s58, %s3320
          %s3322 = smul.addr %s3321, 128
          %s3323 = scalar_lea.hbm %s27, %s3322
          %s3325 = sshll.u32 %s3313, 4
          %s3326 = int_to_ptr.vmem [resolvable:$true] %s3325
          %3328 = dma.vmem_to_hbm [thread:$0]  %s3326, 128, %s3323, %s3310
        $region188: #{tpu_custom_call.1} parent=127 // pred_fallthru
          _
      $region128: #{tpu_custom_call.1} parent=5 // pred_fallthru
        _
      %p3329 = scmp.le.s32.totalorder 2, %s48
      // Predicated region
      $region189: #{tpu_custom_call.1} parent=5 // pred_check
        %p3330 = pneg %p3329
      $region190: #{tpu_custom_call.1} parent=5 // pred_check_branch
        %3332 = sbr.rel (%p3330) target = $region192
      $region191: #{tpu_custom_call.1} parent=5 // pred_region
        %s3333 = ssub.s32 %s48, 2
        // Predicated region
        $region193: #{tpu_custom_call.1} parent=191 // pred_check
          %p3334 = pneg %p687
        $region194: #{tpu_custom_call.1} parent=191 // pred_check_branch
          %3336 = sbr.rel (%p3334) target = $region196
        $region195: #{tpu_custom_call.1} parent=191 // pred_region
          %s3337 = sand.u32 %s672, 1
          %s3338 = scalar_lea.sflag [#allocation4], %s3337
          %s3339 = sand.u32 %s672, 1
          %s3340 = smul.addr %s3339, 8
          %s3341 = scalar_lea.vmem [#allocation25], %s3340
          %3342 = dma.done %s3338, 128
        $region196: #{tpu_custom_call.1} parent=191 // pred_fallthru
          _
      $region192: #{tpu_custom_call.1} parent=5 // pred_fallthru
        _
    $region6: #{tpu_custom_call.1} parent=1 // loop_footer
      %s52 = sadd.s32 1, %s48
    $region7: #{tpu_custom_call.1} parent=1 // loop_footer_branch
      %47 = sbr.rel target = $region3
    $region8: #{tpu_custom_call.1} parent=1 // loop_exit
      _
    %3343 = vsyncpa [#allocation3], 1
    %s3344 = scalar_lea.sflag [#allocation3], 1
    %3345 = vsyncpa %s3344, 1
    %3346 = vsyncpa [#allocation6], 1
    %s3347 = scalar_lea.sflag [#allocation6], 1
    %3348 = vsyncpa %s3347, 1
    %3349 = vsyncpa [#allocation9], 1
    %3350 = vsyncpa [#allocation12], 1
    %3351 = vsyncpa [#allocation15], 1
    %3352 = vsyncpa [#allocation18], 1
    %3353 = vsyncpa [#allocation21], 1
    %3354 = vsyncpa [#allocation24], 1
    %3355 = vsyncpa [#allocation4], 1
    %s3356 = scalar_lea.sflag [#allocation4], 1
    %3357 = vsyncpa %s3356, 1

</llo_original>
